<compile_context>
chip_gen: v7x
topology: tpu7x:2x2x1
jax: 0.10.0
libtpu: 0.0.40
codegen_flags: <defaults>
</compile_context>

<pallas_src>
import numpy as np

import jax
import jax.numpy as jnp
from jax.experimental import pallas as pl
from jax.experimental.pallas import tpu as pltpu

# ----------------------------- configuration -------------------------------
SEQ_LEN   = 16
PRED_LEN  = 8
PATCH_LEN = 4
PATCH_NUM = SEQ_LEN // PATCH_LEN            # 4
BASIS_NUM = min(PATCH_NUM, 6)               # 4
D_MODEL   = 32
N_HEADS   = 4
HEAD_DIM  = D_MODEL // N_HEADS              # 8
D_FF      = 64
E_LAYERS  = 2
ENC_IN    = 4                               # C
BATCH     = 2                               # B
EPS_REVIN = 1e-5                            # sqrt(var + 1e-5) in forward()
EPS_LN    = 1e-5                            # nn.LayerNorm default eps
# activation in EncoderLayer: "relu"; dropout = 0 at inference.

# ----------------- packed-slab layout (static row offsets) ------------------
# Weight slab: every matmul weight padded to 128 lanes, stacked along rows at
# 8-aligned offsets.  Vector slab: one 128-lane row per bias / gamma / beta.
SLAB_LANES   = 128
WF_OFF       = 0                                    # fused embed (16, 128)
LAYER_W_OFF  = SEQ_LEN                              # per-layer weight base (16)
QKV_W, WO_W, W1_W, W2_W = 0, D_MODEL, 2 * D_MODEL, 3 * D_MODEL
LAYER_W_ROWS = 3 * D_MODEL + D_FF                   # 160
WP_OFF       = LAYER_W_OFF + E_LAYERS * LAYER_W_ROWS     # 336, (128, 8)
WSLAB_ROWS   = WP_OFF + BASIS_NUM * D_MODEL         # 464 (multiple of 8)

BF_ROW       = 0
LAYER_V_ROW  = 1
BQKV_V, BO_V, G1_V, B1N_V, B1_V, B2_V, G2_V, B2N_V = range(8)
LAYER_V_ROWS = 8
GN_ROW       = LAYER_V_ROW + E_LAYERS * LAYER_V_ROWS     # 17
BN_ROW       = GN_ROW + 1                                # 18
BP_ROW       = BN_ROW + 1                                # 19
VSLAB_ROWS   = BP_ROW + 1                                # 20


# ------------------------------ fused Pallas kernel -------------------------
def fused_forward_kernel(x_ref, w_ref, v_ref, o_ref, tok_ref, flat_ref):
    BC = x_ref.shape[0]
    L, D, H, E, F = BASIS_NUM, D_MODEL, N_HEADS, HEAD_DIM, D_FF
    scale = 1.0 / float(E) ** 0.5

    def wmat(off, rows, width):                 # static slab slices (free)
        return w_ref[off:off + rows, 0:width]

    def vrow(row, width):
        return v_ref[row:row + 1, 0:width]

    # ---- RevIN stats + normalization (time on the lane dim) ----------------
    x = x_ref[...]                                          # (BC, T)
    mu = jnp.mean(x, axis=-1, keepdims=True)                # (BC, 1)
    var = jnp.mean((x - mu) ** 2, axis=-1, keepdims=True)   # unbiased=False
    std = jnp.sqrt(var + EPS_REVIN)
    xn = (x - mu) / std

    # ---- fused time_base + enc_embedding: one lane-dense matmul ------------
    enc = (jnp.dot(xn, wmat(WF_OFF, SEQ_LEN, L * D),
                   preferred_element_type=jnp.float32)
           + vrow(BF_ROW, L * D))                           # (BC, K*D)

    # (BC, K*D) lanes -> (K*BC, D) k-major token rows via contiguous
    # 8-sublane block stores (no strided / masked sublane writes).
    for k in range(L):
        tok_ref[k * BC:(k + 1) * BC, :] = enc[:, k * D:(k + 1) * D]
    x2 = tok_ref[...]                                       # (L*BC, D)

    def layernorm(a, g, b):
        m = jnp.mean(a, axis=-1, keepdims=True)
        s2 = jnp.mean((a - m) ** 2, axis=-1, keepdims=True)
        return (a - m) * jax.lax.rsqrt(s2 + EPS_LN) * g + b

    # ---- encoder layers (statically unrolled; everything stays in VMEM) ----
    for lyr in range(E_LAYERS):
        wb = LAYER_W_OFF + lyr * LAYER_W_ROWS
        vb = LAYER_V_ROW + lyr * LAYER_V_ROWS

        # fused Q|K|V projection: ONE (L*BC,32)@(32,96) lane-dense matmul.
        qkv = (jnp.dot(x2, wmat(wb + QKV_W, D, 3 * D),
                       preferred_element_type=jnp.float32)
               + vrow(vb + BQKV_V, 3 * D))                  # (L*BC, 96)

        # attention: score/context math on the VPU (no MXU micro-matmuls);
        # k-major rows make the (L*BC, E)->(L, BC, E) reshapes layout-free.
        ctx_heads = []
        for h in range(H):
            q3 = qkv[:, h * E:(h + 1) * E].reshape(L, BC, E) * scale
            k3 = qkv[:, D + h * E:D + (h + 1) * E].reshape(L, BC, E)
            v3 = qkv[:, 2 * D + h * E:2 * D + (h + 1) * E].reshape(L, BC, E)
            # scores[l, b, s] = sum_e q[l,b,e] * k[s,b,e]   (unrolled over s)
            s = jnp.concatenate(
                [jnp.sum(q3 * k3[s_:s_ + 1, :, :], axis=-1, keepdims=True)
                 for s_ in range(L)], axis=-1)              # (L, BC, L)
            s = s - jnp.max(s, axis=-1, keepdims=True)
            p = jnp.exp(s)
            p = p * pl.reciprocal(jnp.sum(p, axis=-1, keepdims=True),
                                  approx=True)
            # ctx[l, b, e] = sum_s p[l,b,s] * v[s,b,e]      (unrolled over s)
            ctx = p[:, :, 0:1] * v3[0:1, :, :]
            for s_ in range(1, L):
                ctx = ctx + p[:, :, s_:s_ + 1] * v3[s_:s_ + 1, :, :]
            ctx_heads.append(ctx.reshape(L * BC, E))
        ctx_all = jnp.concatenate(ctx_heads, axis=-1)       # (L*BC, D)

        attn = (jnp.dot(ctx_all, wmat(wb + WO_W, D, D),
                        preferred_element_type=jnp.float32)
                + vrow(vb + BO_V, D))
        x1 = x2 + attn                                      # residual
        y = layernorm(x1, vrow(vb + G1_V, D), vrow(vb + B1N_V, D))   # norm1
        ff = jnp.maximum(
            jnp.dot(y, wmat(wb + W1_W, D, F),
                    preferred_element_type=jnp.float32) + vrow(vb + B1_V, F),
            0.0)                                            # conv1 + relu
        ff2 = (jnp.dot(ff, wmat(wb + W2_W, F, D),
                       preferred_element_type=jnp.float32)
               + vrow(vb + B2_V, D))                        # conv2
        x2 = layernorm(y + ff2, vrow(vb + G2_V, D), vrow(vb + B2N_V, D))

    # ---- final LayerNorm + projection + de-normalization --------------------
    yf = layernorm(x2, vrow(GN_ROW, D), vrow(BN_ROW, D))    # (L*BC, D)
    # (K*BC, D) k-major token rows -> (BC, K*D) lanes (symmetric transition).
    for k in range(L):
        flat_ref[:, k * D:(k + 1) * D] = yf[k * BC:(k + 1) * BC, :]
    proj = (jnp.dot(flat_ref[...], wmat(WP_OFF, L * D, PRED_LEN),
                    preferred_element_type=jnp.float32)
            + vrow(BP_ROW, PRED_LEN))                       # (BC, pred_len)
    o_ref[...] = proj * std + mu                            # de-normalize


# --------------------------- one-time weight prep ----------------------------
def prepare_params(params):
    """One-time weight preprocessing: fuse time_base+enc_embedding, fuse
    Q|K|V, transpose all linears, and pack everything into two lane-dense
    (rows, 128) slabs read with static offsets inside the kernel."""
    D = D_MODEL
    Wt, bt = params['Wt'], params['bt']
    We, be = params['We'], params['be']
    # enc[bc, k*D+d] = sum_t Wf[t, k*D+d] * xn[bc, t] + bf[k*D+d], t = n*PL + p
    Wf = jnp.einsum('kn,dp->npkd', Wt, We).reshape(SEQ_LEN, BASIS_NUM * D)
    bf = (bt[:, None] * jnp.sum(We, axis=1)[None, :]
          + be[None, :]).reshape(BASIS_NUM * D)

    wslab = jnp.zeros((WSLAB_ROWS, SLAB_LANES), jnp.float32)
    vslab = jnp.zeros((VSLAB_ROWS, SLAB_LANES), jnp.float32)

    def put_w(slab, off, mat):
        r, c = mat.shape
        return slab.at[off:off + r, 0:c].set(mat.astype(jnp.float32))

    def put_v(slab, row, vec):
        return slab.at[row, 0:vec.shape[0]].set(vec.astype(jnp.float32))

    wslab = put_w(wslab, WF_OFF, Wf)
    vslab = put_v(vslab, BF_ROW, bf)
    for lyr, lp in enumerate(params['layers']):
        wb = LAYER_W_OFF + lyr * LAYER_W_ROWS
        vb = LAYER_V_ROW + lyr * LAYER_V_ROWS
        wqkv = jnp.concatenate([lp['Wq'].T, lp['Wk'].T, lp['Wv'].T], axis=1)
        bqkv = jnp.concatenate([lp['bq'], lp['bk'], lp['bv']])
        wslab = put_w(wslab, wb + QKV_W, wqkv)          # (32, 96)
        wslab = put_w(wslab, wb + WO_W, lp['Wo'].T)     # (32, 32)
        wslab = put_w(wslab, wb + W1_W, lp['W1'].T)     # (32, 64)
        wslab = put_w(wslab, wb + W2_W, lp['W2'].T)     # (64, 32)
        vslab = put_v(vslab, vb + BQKV_V, bqkv)
        vslab = put_v(vslab, vb + BO_V, lp['bo'])
        vslab = put_v(vslab, vb + G1_V, lp['g1'])
        vslab = put_v(vslab, vb + B1N_V, lp['b1n'])
        vslab = put_v(vslab, vb + B1_V, lp['b1'])
        vslab = put_v(vslab, vb + B2_V, lp['b2'])
        vslab = put_v(vslab, vb + G2_V, lp['g2'])
        vslab = put_v(vslab, vb + B2N_V, lp['b2n'])
    wslab = put_w(wslab, WP_OFF, params['Wp'].T)        # (128, 8)
    vslab = put_v(vslab, GN_ROW, params['g'])
    vslab = put_v(vslab, BN_ROW, params['b'])
    vslab = put_v(vslab, BP_ROW, params['bp'])
    return dict(wslab=wslab, vslab=vslab)


# ------------------------------ pallas wrapper --------------------------------
def pallas_forward(x, prep):
    B, T, C = x.shape
    BC = B * C
    x2d = x.transpose(0, 2, 1).reshape(BC, T)        # time on the lane dim

    def vmem():
        return pl.BlockSpec(memory_space=pltpu.MemorySpace.VMEM)

    dec = pl.pallas_call(
        fused_forward_kernel,
        out_shape=jax.ShapeDtypeStruct((BC, PRED_LEN), jnp.float32),
        in_specs=[vmem(), vmem(), vmem()],
        out_specs=vmem(),
        scratch_shapes=[pltpu.VMEM((BASIS_NUM * BC, D_MODEL), jnp.float32),
                        pltpu.VMEM((BC, BASIS_NUM * D_MODEL), jnp.float32)],
    )(x2d, prep['wslab'], prep['vslab'])

    # (B*C, pred_len) -> (B, C, pred_len) -> (B, pred_len, C)
    return dec.reshape(B, C, PRED_LEN).transpose(0, 2, 1)


# ------------------------------ pure-JAX reference ---------------------------
def _ref_layernorm(a, g, b):
    mu = jnp.mean(a, axis=-1, keepdims=True)
    var = jnp.mean((a - mu) ** 2, axis=-1, keepdims=True)
    return (a - mu) / jnp.sqrt(var + EPS_LN) * g + b


def _ref_encoder_layer(x, p):
    BC, L, D = x.shape
    H, E = N_HEADS, D // N_HEADS
    q = (x @ p['Wq'].T + p['bq']).reshape(BC, L, H, E)
    k = (x @ p['Wk'].T + p['bk']).reshape(BC, L, H, E)
    v = (x @ p['Wv'].T + p['bv']).reshape(BC, L, H, E)
    scores = jnp.einsum('blhe,bshe->bhls', q, k) / jnp.sqrt(E)
    A = jax.nn.softmax(scores, axis=-1)
    o = jnp.einsum('bhls,bshe->blhe', A, v).reshape(BC, L, D)
    x1 = x + (o @ p['Wo'].T + p['bo'])
    y = _ref_layernorm(x1, p['g1'], p['b1n'])
    ff = jax.nn.relu(y @ p['W1'].T + p['b1'])
    ff2 = ff @ p['W2'].T + p['b2']
    return _ref_layernorm(y + ff2, p['g2'], p['b2n'])


def reference_forward(x, params):
    means = jnp.mean(x, axis=1, keepdims=True)
    stdev = jnp.sqrt(jnp.var(x, axis=1, keepdims=True) + EPS_REVIN)
    xn = (x - means) / stdev
    B, T, C = x.shape
    xe = xn.reshape(B, PATCH_NUM, PATCH_LEN, C).transpose(0, 3, 2, 1)   # (B,C,P,N)
    y = xe @ params['Wt'].T + params['bt']                              # (B,C,P,K)
    y = y.transpose(0, 1, 3, 2)                                         # (B,C,K,P)
    enc = y @ params['We'].T + params['be']                             # (B,C,K,D)
    enc = enc.reshape(B * C, BASIS_NUM, D_MODEL)
    for lp in params['layers']:
        enc = _ref_encoder_layer(enc, lp)
    enc = _ref_layernorm(enc, params['g'], params['b'])
    enc = enc.reshape(B * C, BASIS_NUM * D_MODEL)
    dec = enc @ params['Wp'].T + params['bp']
    dec = dec.reshape(B, C, PRED_LEN).transpose(0, 2, 1)
    return dec * stdev + means


# ------------------------------ parameter init --------------------------------
def init_params(key):
    cnt = [0]

    def nk():
        cnt[0] += 1
        return jax.random.fold_in(key, cnt[0])

    def w(shape, scale=0.1):
        return (scale * jax.random.normal(nk(), shape)).astype(jnp.float32)

    params = dict(
        Wt=w((BASIS_NUM, PATCH_NUM)), bt=w((BASIS_NUM,)),
        We=w((D_MODEL, PATCH_LEN)), be=w((D_MODEL,)),
        g=(1.0 + 0.05 * jax.random.normal(nk(), (D_MODEL,))).astype(jnp.float32),
        b=w((D_MODEL,), 0.05),
        Wp=w((PRED_LEN, BASIS_NUM * D_MODEL)), bp=w((PRED_LEN,)),
        layers=[],
    )
    for _ in range(E_LAYERS):
        lp = dict(
            Wq=w((D_MODEL, D_MODEL)), bq=w((D_MODEL,)),
            Wk=w((D_MODEL, D_MODEL)), bk=w((D_MODEL,)),
            Wv=w((D_MODEL, D_MODEL)), bv=w((D_MODEL,)),
            Wo=w((D_MODEL, D_MODEL)), bo=w((D_MODEL,)),
            g1=(1.0 + 0.05 * jax.random.normal(nk(), (D_MODEL,))).astype(jnp.float32),
            b1n=w((D_MODEL,), 0.05),
            W1=w((D_FF, D_MODEL)), b1=w((D_FF,)),
            W2=w((D_MODEL, D_FF)), b2=w((D_MODEL,)),
            g2=(1.0 + 0.05 * jax.random.normal(nk(), (D_MODEL,))).astype(jnp.float32),
            b2n=w((D_MODEL,), 0.05),
        )
        params['layers'].append(lp)
    return params


# ----------------------------------- main ------------------------------------
if __name__ == "__main__":
    key = jax.random.PRNGKey(0)
    kx, kp = jax.random.split(key)
    x = jax.random.normal(kx, (BATCH, SEQ_LEN, ENC_IN), dtype=jnp.float32)
    params = init_params(kp)
    prep = prepare_params(params)          # hoisted, one-time weight packing

    out = jax.jit(pallas_forward)(x, prep)
    out = jax.block_until_ready(out)

    with jax.default_matmul_precision("highest"):
        ref = jax.block_until_ready(reference_forward(x, params))

    assert out.shape == (BATCH, PRED_LEN, ENC_IN), out.shape
    # 5e-3 tolerance accommodates the EUP approximate reciprocal used for the
    # softmax denominator (pl.reciprocal(..., approx=True)).
    np.testing.assert_allclose(np.asarray(out), np.asarray(ref),
                               rtol=5e-3, atol=5e-3)
    print("KERNEL_OK")
</pallas_src>

<mosaic_0001>
module attributes {stable_mosaic.version = 11 : i64} {
  func.func @fused_forward_kernel(%arg0: memref<8x16xf32, #tpu.memory_space<vmem>>, %arg1: memref<464x128xf32, #tpu.memory_space<vmem>>, %arg2: memref<20x128xf32, #tpu.memory_space<vmem>>, %arg3: memref<8x8xf32, #tpu.memory_space<vmem>>, %arg4: memref<32x32xf32, #tpu.memory_space<vmem>>, %arg5: memref<8x128xf32, #tpu.memory_space<vmem>>) attributes {dimension_semantics = [], scalar_prefetch = 0 : i64, scratch_operands = 2 : i64, tpu.core_type = #tpu.core_type<tc>} {
    %c0 = arith.constant 0 : index
    %c0_0 = arith.constant 0 : index
    %0 = vector.load %arg0[%c0, %c0_0] : memref<8x16xf32, #tpu.memory_space<vmem>>, vector<8x16xf32>
    %cst = arith.constant dense<0.000000e+00> : vector<8xf32>
    %1 = vector.multi_reduction <add>, %0, %cst [1] : vector<8x16xf32> to vector<8xf32>
    %2 = vector.shape_cast %1 : vector<8xf32> to vector<8x1xf32>
    %cst_1 = arith.constant 1.600000e+01 : f32
    %3 = vector.broadcast %cst_1 : f32 to vector<8x1xf32>
    %4 = arith.divf %2, %3 : vector<8x1xf32>
    %5 = vector.broadcast %4 : vector<8x1xf32> to vector<8x16xf32>
    %6 = arith.subf %0, %5 : vector<8x16xf32>
    %7 = arith.mulf %6, %6 : vector<8x16xf32>
    %cst_2 = arith.constant dense<0.000000e+00> : vector<8xf32>
    %8 = vector.multi_reduction <add>, %7, %cst_2 [1] : vector<8x16xf32> to vector<8xf32>
    %9 = vector.shape_cast %8 : vector<8xf32> to vector<8x1xf32>
    %cst_3 = arith.constant 1.600000e+01 : f32
    %10 = vector.broadcast %cst_3 : f32 to vector<8x1xf32>
    %11 = arith.divf %9, %10 : vector<8x1xf32>
    %cst_4 = arith.constant 9.99999974E-6 : f32
    %12 = vector.broadcast %cst_4 : f32 to vector<8x1xf32>
    %13 = arith.addf %11, %12 : vector<8x1xf32>
    %14 = math.sqrt %13 : vector<8x1xf32>
    %15 = vector.broadcast %4 : vector<8x1xf32> to vector<8x16xf32>
    %16 = arith.subf %0, %15 : vector<8x16xf32>
    %17 = vector.broadcast %14 : vector<8x1xf32> to vector<8x16xf32>
    %18 = arith.divf %16, %17 : vector<8x16xf32>
    %c0_5 = arith.constant 0 : index
    %c0_6 = arith.constant 0 : index
    %19 = vector.load %arg1[%c0_5, %c0_6] : memref<464x128xf32, #tpu.memory_space<vmem>>, vector<16x128xf32>
    %cst_7 = arith.constant dense<0.000000e+00> : vector<8x128xf32>
    %20 = tpu.matmul %18, %19, %cst_7 {dimension_numbers = #tpu.dot_dimension_numbers<[1], [0], [0], [1], [0, 0, 1, 1], [], []>} : vector<8x16xf32>, vector<16x128xf32>, vector<8x128xf32> -> vector<8x128xf32>
    %c0_8 = arith.constant 0 : index
    %c0_9 = arith.constant 0 : index
    %21 = vector.load %arg2[%c0_8, %c0_9] : memref<20x128xf32, #tpu.memory_space<vmem>>, vector<1x128xf32>
    %22 = vector.broadcast %21 : vector<1x128xf32> to vector<8x128xf32>
    %23 = arith.addf %20, %22 : vector<8x128xf32>
    %24 = vector.extract_strided_slice %23 {offsets = [0, 0], sizes = [8, 32], strides = [1, 1]} : vector<8x128xf32> to vector<8x32xf32>
    %c0_10 = arith.constant 0 : index
    %c0_11 = arith.constant 0 : index
    %25 = vector.load %arg4[%c0_10, %c0_11] : memref<32x32xf32, #tpu.memory_space<vmem>>, vector<8x32xf32>
    tpu.vector_store %arg4[%c0_10, %c0_11], %24 {strides = array<i32>} : memref<32x32xf32, #tpu.memory_space<vmem>>, vector<8x32xf32>,
    %26 = vector.extract_strided_slice %23 {offsets = [0, 32], sizes = [8, 32], strides = [1, 1]} : vector<8x128xf32> to vector<8x32xf32>
    %c8 = arith.constant 8 : index
    %c0_12 = arith.constant 0 : index
    %27 = vector.load %arg4[%c8, %c0_12] : memref<32x32xf32, #tpu.memory_space<vmem>>, vector<8x32xf32>
    tpu.vector_store %arg4[%c8, %c0_12], %26 {strides = array<i32>} : memref<32x32xf32, #tpu.memory_space<vmem>>, vector<8x32xf32>,
    %28 = vector.extract_strided_slice %23 {offsets = [0, 64], sizes = [8, 32], strides = [1, 1]} : vector<8x128xf32> to vector<8x32xf32>
    %c16 = arith.constant 16 : index
    %c0_13 = arith.constant 0 : index
    %29 = vector.load %arg4[%c16, %c0_13] : memref<32x32xf32, #tpu.memory_space<vmem>>, vector<8x32xf32>
    tpu.vector_store %arg4[%c16, %c0_13], %28 {strides = array<i32>} : memref<32x32xf32, #tpu.memory_space<vmem>>, vector<8x32xf32>,
    %30 = vector.extract_strided_slice %23 {offsets = [0, 96], sizes = [8, 32], strides = [1, 1]} : vector<8x128xf32> to vector<8x32xf32>
    %c24 = arith.constant 24 : index
    %c0_14 = arith.constant 0 : index
    %31 = vector.load %arg4[%c24, %c0_14] : memref<32x32xf32, #tpu.memory_space<vmem>>, vector<8x32xf32>
    tpu.vector_store %arg4[%c24, %c0_14], %30 {strides = array<i32>} : memref<32x32xf32, #tpu.memory_space<vmem>>, vector<8x32xf32>,
    %c0_15 = arith.constant 0 : index
    %c0_16 = arith.constant 0 : index
    %32 = vector.load %arg4[%c0_15, %c0_16] : memref<32x32xf32, #tpu.memory_space<vmem>>, vector<32x32xf32>
    %c16_17 = arith.constant 16 : index
    %c0_18 = arith.constant 0 : index
    %33 = vector.load %arg1[%c16_17, %c0_18] : memref<464x128xf32, #tpu.memory_space<vmem>>, vector<32x96xf32>
    %cst_19 = arith.constant dense<0.000000e+00> : vector<32x96xf32>
    %34 = tpu.matmul %32, %33, %cst_19 {dimension_numbers = #tpu.dot_dimension_numbers<[1], [0], [0], [1], [0, 0, 1, 1], [], []>} : vector<32x32xf32>, vector<32x96xf32>, vector<32x96xf32> -> vector<32x96xf32>
    %c1 = arith.constant 1 : index
    %c0_20 = arith.constant 0 : index
    %35 = vector.load %arg2[%c1, %c0_20] : memref<20x128xf32, #tpu.memory_space<vmem>>, vector<1x96xf32>
    %36 = vector.broadcast %35 : vector<1x96xf32> to vector<32x96xf32>
    %37 = arith.addf %34, %36 : vector<32x96xf32>
    %38 = vector.extract_strided_slice %37 {offsets = [0, 0], sizes = [32, 8], strides = [1, 1]} : vector<32x96xf32> to vector<32x8xf32>
    %39 = vector.shape_cast %38 : vector<32x8xf32> to vector<4x8x8xf32>
    %cst_21 = arith.constant 0.353553385 : f32
    %40 = vector.broadcast %cst_21 : f32 to vector<4x8x8xf32>
    %41 = arith.mulf %39, %40 : vector<4x8x8xf32>
    %42 = vector.extract_strided_slice %37 {offsets = [0, 32], sizes = [32, 8], strides = [1, 1]} : vector<32x96xf32> to vector<32x8xf32>
    %43 = vector.shape_cast %42 : vector<32x8xf32> to vector<4x8x8xf32>
    %44 = vector.extract_strided_slice %37 {offsets = [0, 64], sizes = [32, 8], strides = [1, 1]} : vector<32x96xf32> to vector<32x8xf32>
    %45 = vector.shape_cast %44 : vector<32x8xf32> to vector<4x8x8xf32>
    %46 = vector.extract_strided_slice %43 {offsets = [0, 0, 0], sizes = [1, 8, 8], strides = [1, 1, 1]} : vector<4x8x8xf32> to vector<1x8x8xf32>
    %47 = vector.broadcast %46 : vector<1x8x8xf32> to vector<4x8x8xf32>
    %48 = arith.mulf %41, %47 : vector<4x8x8xf32>
    %cst_22 = arith.constant dense<0.000000e+00> : vector<4x8xf32>
    %49 = vector.multi_reduction <add>, %48, %cst_22 [2] : vector<4x8x8xf32> to vector<4x8xf32>
    %50 = vector.shape_cast %49 : vector<4x8xf32> to vector<4x8x1xf32>
    %51 = vector.extract_strided_slice %43 {offsets = [1, 0, 0], sizes = [1, 8, 8], strides = [1, 1, 1]} : vector<4x8x8xf32> to vector<1x8x8xf32>
    %52 = vector.broadcast %51 : vector<1x8x8xf32> to vector<4x8x8xf32>
    %53 = arith.mulf %41, %52 : vector<4x8x8xf32>
    %cst_23 = arith.constant dense<0.000000e+00> : vector<4x8xf32>
    %54 = vector.multi_reduction <add>, %53, %cst_23 [2] : vector<4x8x8xf32> to vector<4x8xf32>
    %55 = vector.shape_cast %54 : vector<4x8xf32> to vector<4x8x1xf32>
    %56 = vector.extract_strided_slice %43 {offsets = [2, 0, 0], sizes = [1, 8, 8], strides = [1, 1, 1]} : vector<4x8x8xf32> to vector<1x8x8xf32>
    %57 = vector.broadcast %56 : vector<1x8x8xf32> to vector<4x8x8xf32>
    %58 = arith.mulf %41, %57 : vector<4x8x8xf32>
    %cst_24 = arith.constant dense<0.000000e+00> : vector<4x8xf32>
    %59 = vector.multi_reduction <add>, %58, %cst_24 [2] : vector<4x8x8xf32> to vector<4x8xf32>
    %60 = vector.shape_cast %59 : vector<4x8xf32> to vector<4x8x1xf32>
    %61 = vector.extract_strided_slice %43 {offsets = [3, 0, 0], sizes = [1, 8, 8], strides = [1, 1, 1]} : vector<4x8x8xf32> to vector<1x8x8xf32>
    %62 = vector.broadcast %61 : vector<1x8x8xf32> to vector<4x8x8xf32>
    %63 = arith.mulf %41, %62 : vector<4x8x8xf32>
    %cst_25 = arith.constant dense<0.000000e+00> : vector<4x8xf32>
    %64 = vector.multi_reduction <add>, %63, %cst_25 [2] : vector<4x8x8xf32> to vector<4x8xf32>
    %65 = vector.shape_cast %64 : vector<4x8xf32> to vector<4x8x1xf32>
    %66 = tpu.concatenate %50, %55, %60, %65 in 2 : vector<4x8x1xf32>, vector<4x8x1xf32>, vector<4x8x1xf32>, vector<4x8x1xf32> -> vector<4x8x4xf32>
    %cst_26 = arith.constant dense<0xFF800000> : vector<4x8xf32>
    %67 = vector.multi_reduction <maximumf>, %66, %cst_26 [2] : vector<4x8x4xf32> to vector<4x8xf32>
    %68 = vector.shape_cast %67 : vector<4x8xf32> to vector<4x8x1xf32>
    %69 = vector.broadcast %68 : vector<4x8x1xf32> to vector<4x8x4xf32>
    %70 = arith.subf %66, %69 : vector<4x8x4xf32>
    %71 = math.exp %70 : vector<4x8x4xf32>
    %cst_27 = arith.constant dense<0.000000e+00> : vector<4x8xf32>
    %72 = vector.multi_reduction <add>, %71, %cst_27 [2] : vector<4x8x4xf32> to vector<4x8xf32>
    %73 = vector.shape_cast %72 : vector<4x8xf32> to vector<4x8x1xf32>
    %74 = tpu.reciprocal %73 {approx = true} : vector<4x8x1xf32> -> vector<4x8x1xf32>
    %75 = vector.broadcast %74 : vector<4x8x1xf32> to vector<4x8x4xf32>
    %76 = arith.mulf %71, %75 : vector<4x8x4xf32>
    %77 = vector.extract_strided_slice %76 {offsets = [0, 0, 0], sizes = [4, 8, 1], strides = [1, 1, 1]} : vector<4x8x4xf32> to vector<4x8x1xf32>
    %78 = vector.extract_strided_slice %45 {offsets = [0, 0, 0], sizes = [1, 8, 8], strides = [1, 1, 1]} : vector<4x8x8xf32> to vector<1x8x8xf32>
    %79 = vector.broadcast %77 : vector<4x8x1xf32> to vector<4x8x8xf32>
    %80 = vector.broadcast %78 : vector<1x8x8xf32> to vector<4x8x8xf32>
    %81 = arith.mulf %79, %80 : vector<4x8x8xf32>
    %82 = vector.extract_strided_slice %76 {offsets = [0, 0, 1], sizes = [4, 8, 1], strides = [1, 1, 1]} : vector<4x8x4xf32> to vector<4x8x1xf32>
    %83 = vector.extract_strided_slice %45 {offsets = [1, 0, 0], sizes = [1, 8, 8], strides = [1, 1, 1]} : vector<4x8x8xf32> to vector<1x8x8xf32>
    %84 = vector.broadcast %82 : vector<4x8x1xf32> to vector<4x8x8xf32>
    %85 = vector.broadcast %83 : vector<1x8x8xf32> to vector<4x8x8xf32>
    %86 = arith.mulf %84, %85 : vector<4x8x8xf32>
    %87 = arith.addf %81, %86 : vector<4x8x8xf32>
    %88 = vector.extract_strided_slice %76 {offsets = [0, 0, 2], sizes = [4, 8, 1], strides = [1, 1, 1]} : vector<4x8x4xf32> to vector<4x8x1xf32>
    %89 = vector.extract_strided_slice %45 {offsets = [2, 0, 0], sizes = [1, 8, 8], strides = [1, 1, 1]} : vector<4x8x8xf32> to vector<1x8x8xf32>
    %90 = vector.broadcast %88 : vector<4x8x1xf32> to vector<4x8x8xf32>
    %91 = vector.broadcast %89 : vector<1x8x8xf32> to vector<4x8x8xf32>
    %92 = arith.mulf %90, %91 : vector<4x8x8xf32>
    %93 = arith.addf %87, %92 : vector<4x8x8xf32>
    %94 = vector.extract_strided_slice %76 {offsets = [0, 0, 3], sizes = [4, 8, 1], strides = [1, 1, 1]} : vector<4x8x4xf32> to vector<4x8x1xf32>
    %95 = vector.extract_strided_slice %45 {offsets = [3, 0, 0], sizes = [1, 8, 8], strides = [1, 1, 1]} : vector<4x8x8xf32> to vector<1x8x8xf32>
    %96 = vector.broadcast %94 : vector<4x8x1xf32> to vector<4x8x8xf32>
    %97 = vector.broadcast %95 : vector<1x8x8xf32> to vector<4x8x8xf32>
    %98 = arith.mulf %96, %97 : vector<4x8x8xf32>
    %99 = arith.addf %93, %98 : vector<4x8x8xf32>
    %100 = vector.shape_cast %99 : vector<4x8x8xf32> to vector<32x8xf32>
    %101 = vector.extract_strided_slice %37 {offsets = [0, 8], sizes = [32, 8], strides = [1, 1]} : vector<32x96xf32> to vector<32x8xf32>
    %102 = vector.shape_cast %101 : vector<32x8xf32> to vector<4x8x8xf32>
    %cst_28 = arith.constant 0.353553385 : f32
    %103 = vector.broadcast %cst_28 : f32 to vector<4x8x8xf32>
    %104 = arith.mulf %102, %103 : vector<4x8x8xf32>
    %105 = vector.extract_strided_slice %37 {offsets = [0, 40], sizes = [32, 8], strides = [1, 1]} : vector<32x96xf32> to vector<32x8xf32>
    %106 = vector.shape_cast %105 : vector<32x8xf32> to vector<4x8x8xf32>
    %107 = vector.extract_strided_slice %37 {offsets = [0, 72], sizes = [32, 8], strides = [1, 1]} : vector<32x96xf32> to vector<32x8xf32>
    %108 = vector.shape_cast %107 : vector<32x8xf32> to vector<4x8x8xf32>
    %109 = vector.extract_strided_slice %106 {offsets = [0, 0, 0], sizes = [1, 8, 8], strides = [1, 1, 1]} : vector<4x8x8xf32> to vector<1x8x8xf32>
    %110 = vector.broadcast %109 : vector<1x8x8xf32> to vector<4x8x8xf32>
    %111 = arith.mulf %104, %110 : vector<4x8x8xf32>
    %cst_29 = arith.constant dense<0.000000e+00> : vector<4x8xf32>
    %112 = vector.multi_reduction <add>, %111, %cst_29 [2] : vector<4x8x8xf32> to vector<4x8xf32>
    %113 = vector.shape_cast %112 : vector<4x8xf32> to vector<4x8x1xf32>
    %114 = vector.extract_strided_slice %106 {offsets = [1, 0, 0], sizes = [1, 8, 8], strides = [1, 1, 1]} : vector<4x8x8xf32> to vector<1x8x8xf32>
    %115 = vector.broadcast %114 : vector<1x8x8xf32> to vector<4x8x8xf32>
    %116 = arith.mulf %104, %115 : vector<4x8x8xf32>
    %cst_30 = arith.constant dense<0.000000e+00> : vector<4x8xf32>
    %117 = vector.multi_reduction <add>, %116, %cst_30 [2] : vector<4x8x8xf32> to vector<4x8xf32>
    %118 = vector.shape_cast %117 : vector<4x8xf32> to vector<4x8x1xf32>
    %119 = vector.extract_strided_slice %106 {offsets = [2, 0, 0], sizes = [1, 8, 8], strides = [1, 1, 1]} : vector<4x8x8xf32> to vector<1x8x8xf32>
    %120 = vector.broadcast %119 : vector<1x8x8xf32> to vector<4x8x8xf32>
    %121 = arith.mulf %104, %120 : vector<4x8x8xf32>
    %cst_31 = arith.constant dense<0.000000e+00> : vector<4x8xf32>
    %122 = vector.multi_reduction <add>, %121, %cst_31 [2] : vector<4x8x8xf32> to vector<4x8xf32>
    %123 = vector.shape_cast %122 : vector<4x8xf32> to vector<4x8x1xf32>
    %124 = vector.extract_strided_slice %106 {offsets = [3, 0, 0], sizes = [1, 8, 8], strides = [1, 1, 1]} : vector<4x8x8xf32> to vector<1x8x8xf32>
    %125 = vector.broadcast %124 : vector<1x8x8xf32> to vector<4x8x8xf32>
    %126 = arith.mulf %104, %125 : vector<4x8x8xf32>
    %cst_32 = arith.constant dense<0.000000e+00> : vector<4x8xf32>
    %127 = vector.multi_reduction <add>, %126, %cst_32 [2] : vector<4x8x8xf32> to vector<4x8xf32>
    %128 = vector.shape_cast %127 : vector<4x8xf32> to vector<4x8x1xf32>
    %129 = tpu.concatenate %113, %118, %123, %128 in 2 : vector<4x8x1xf32>, vector<4x8x1xf32>, vector<4x8x1xf32>, vector<4x8x1xf32> -> vector<4x8x4xf32>
    %cst_33 = arith.constant dense<0xFF800000> : vector<4x8xf32>
    %130 = vector.multi_reduction <maximumf>, %129, %cst_33 [2] : vector<4x8x4xf32> to vector<4x8xf32>
    %131 = vector.shape_cast %130 : vector<4x8xf32> to vector<4x8x1xf32>
    %132 = vector.broadcast %131 : vector<4x8x1xf32> to vector<4x8x4xf32>
    %133 = arith.subf %129, %132 : vector<4x8x4xf32>
    %134 = math.exp %133 : vector<4x8x4xf32>
    %cst_34 = arith.constant dense<0.000000e+00> : vector<4x8xf32>
    %135 = vector.multi_reduction <add>, %134, %cst_34 [2] : vector<4x8x4xf32> to vector<4x8xf32>
    %136 = vector.shape_cast %135 : vector<4x8xf32> to vector<4x8x1xf32>
    %137 = tpu.reciprocal %136 {approx = true} : vector<4x8x1xf32> -> vector<4x8x1xf32>
    %138 = vector.broadcast %137 : vector<4x8x1xf32> to vector<4x8x4xf32>
    %139 = arith.mulf %134, %138 : vector<4x8x4xf32>
    %140 = vector.extract_strided_slice %139 {offsets = [0, 0, 0], sizes = [4, 8, 1], strides = [1, 1, 1]} : vector<4x8x4xf32> to vector<4x8x1xf32>
    %141 = vector.extract_strided_slice %108 {offsets = [0, 0, 0], sizes = [1, 8, 8], strides = [1, 1, 1]} : vector<4x8x8xf32> to vector<1x8x8xf32>
    %142 = vector.broadcast %140 : vector<4x8x1xf32> to vector<4x8x8xf32>
    %143 = vector.broadcast %141 : vector<1x8x8xf32> to vector<4x8x8xf32>
    %144 = arith.mulf %142, %143 : vector<4x8x8xf32>
    %145 = vector.extract_strided_slice %139 {offsets = [0, 0, 1], sizes = [4, 8, 1], strides = [1, 1, 1]} : vector<4x8x4xf32> to vector<4x8x1xf32>
    %146 = vector.extract_strided_slice %108 {offsets = [1, 0, 0], sizes = [1, 8, 8], strides = [1, 1, 1]} : vector<4x8x8xf32> to vector<1x8x8xf32>
    %147 = vector.broadcast %145 : vector<4x8x1xf32> to vector<4x8x8xf32>
    %148 = vector.broadcast %146 : vector<1x8x8xf32> to vector<4x8x8xf32>
    %149 = arith.mulf %147, %148 : vector<4x8x8xf32>
    %150 = arith.addf %144, %149 : vector<4x8x8xf32>
    %151 = vector.extract_strided_slice %139 {offsets = [0, 0, 2], sizes = [4, 8, 1], strides = [1, 1, 1]} : vector<4x8x4xf32> to vector<4x8x1xf32>
    %152 = vector.extract_strided_slice %108 {offsets = [2, 0, 0], sizes = [1, 8, 8], strides = [1, 1, 1]} : vector<4x8x8xf32> to vector<1x8x8xf32>
    %153 = vector.broadcast %151 : vector<4x8x1xf32> to vector<4x8x8xf32>
    %154 = vector.broadcast %152 : vector<1x8x8xf32> to vector<4x8x8xf32>
    %155 = arith.mulf %153, %154 : vector<4x8x8xf32>
    %156 = arith.addf %150, %155 : vector<4x8x8xf32>
    %157 = vector.extract_strided_slice %139 {offsets = [0, 0, 3], sizes = [4, 8, 1], strides = [1, 1, 1]} : vector<4x8x4xf32> to vector<4x8x1xf32>
    %158 = vector.extract_strided_slice %108 {offsets = [3, 0, 0], sizes = [1, 8, 8], strides = [1, 1, 1]} : vector<4x8x8xf32> to vector<1x8x8xf32>
    %159 = vector.broadcast %157 : vector<4x8x1xf32> to vector<4x8x8xf32>
    %160 = vector.broadcast %158 : vector<1x8x8xf32> to vector<4x8x8xf32>
    %161 = arith.mulf %159, %160 : vector<4x8x8xf32>
    %162 = arith.addf %156, %161 : vector<4x8x8xf32>
    %163 = vector.shape_cast %162 : vector<4x8x8xf32> to vector<32x8xf32>
    %164 = vector.extract_strided_slice %37 {offsets = [0, 16], sizes = [32, 8], strides = [1, 1]} : vector<32x96xf32> to vector<32x8xf32>
    %165 = vector.shape_cast %164 : vector<32x8xf32> to vector<4x8x8xf32>
    %cst_35 = arith.constant 0.353553385 : f32
    %166 = vector.broadcast %cst_35 : f32 to vector<4x8x8xf32>
    %167 = arith.mulf %165, %166 : vector<4x8x8xf32>
    %168 = vector.extract_strided_slice %37 {offsets = [0, 48], sizes = [32, 8], strides = [1, 1]} : vector<32x96xf32> to vector<32x8xf32>
    %169 = vector.shape_cast %168 : vector<32x8xf32> to vector<4x8x8xf32>
    %170 = vector.extract_strided_slice %37 {offsets = [0, 80], sizes = [32, 8], strides = [1, 1]} : vector<32x96xf32> to vector<32x8xf32>
    %171 = vector.shape_cast %170 : vector<32x8xf32> to vector<4x8x8xf32>
    %172 = vector.extract_strided_slice %169 {offsets = [0, 0, 0], sizes = [1, 8, 8], strides = [1, 1, 1]} : vector<4x8x8xf32> to vector<1x8x8xf32>
    %173 = vector.broadcast %172 : vector<1x8x8xf32> to vector<4x8x8xf32>
    %174 = arith.mulf %167, %173 : vector<4x8x8xf32>
    %cst_36 = arith.constant dense<0.000000e+00> : vector<4x8xf32>
    %175 = vector.multi_reduction <add>, %174, %cst_36 [2] : vector<4x8x8xf32> to vector<4x8xf32>
    %176 = vector.shape_cast %175 : vector<4x8xf32> to vector<4x8x1xf32>
    %177 = vector.extract_strided_slice %169 {offsets = [1, 0, 0], sizes = [1, 8, 8], strides = [1, 1, 1]} : vector<4x8x8xf32> to vector<1x8x8xf32>
    %178 = vector.broadcast %177 : vector<1x8x8xf32> to vector<4x8x8xf32>
    %179 = arith.mulf %167, %178 : vector<4x8x8xf32>
    %cst_37 = arith.constant dense<0.000000e+00> : vector<4x8xf32>
    %180 = vector.multi_reduction <add>, %179, %cst_37 [2] : vector<4x8x8xf32> to vector<4x8xf32>
    %181 = vector.shape_cast %180 : vector<4x8xf32> to vector<4x8x1xf32>
    %182 = vector.extract_strided_slice %169 {offsets = [2, 0, 0], sizes = [1, 8, 8], strides = [1, 1, 1]} : vector<4x8x8xf32> to vector<1x8x8xf32>
    %183 = vector.broadcast %182 : vector<1x8x8xf32> to vector<4x8x8xf32>
    %184 = arith.mulf %167, %183 : vector<4x8x8xf32>
    %cst_38 = arith.constant dense<0.000000e+00> : vector<4x8xf32>
    %185 = vector.multi_reduction <add>, %184, %cst_38 [2] : vector<4x8x8xf32> to vector<4x8xf32>
    %186 = vector.shape_cast %185 : vector<4x8xf32> to vector<4x8x1xf32>
    %187 = vector.extract_strided_slice %169 {offsets = [3, 0, 0], sizes = [1, 8, 8], strides = [1, 1, 1]} : vector<4x8x8xf32> to vector<1x8x8xf32>
    %188 = vector.broadcast %187 : vector<1x8x8xf32> to vector<4x8x8xf32>
    %189 = arith.mulf %167, %188 : vector<4x8x8xf32>
    %cst_39 = arith.constant dense<0.000000e+00> : vector<4x8xf32>
    %190 = vector.multi_reduction <add>, %189, %cst_39 [2] : vector<4x8x8xf32> to vector<4x8xf32>
    %191 = vector.shape_cast %190 : vector<4x8xf32> to vector<4x8x1xf32>
    %192 = tpu.concatenate %176, %181, %186, %191 in 2 : vector<4x8x1xf32>, vector<4x8x1xf32>, vector<4x8x1xf32>, vector<4x8x1xf32> -> vector<4x8x4xf32>
    %cst_40 = arith.constant dense<0xFF800000> : vector<4x8xf32>
    %193 = vector.multi_reduction <maximumf>, %192, %cst_40 [2] : vector<4x8x4xf32> to vector<4x8xf32>
    %194 = vector.shape_cast %193 : vector<4x8xf32> to vector<4x8x1xf32>
    %195 = vector.broadcast %194 : vector<4x8x1xf32> to vector<4x8x4xf32>
    %196 = arith.subf %192, %195 : vector<4x8x4xf32>
    %197 = math.exp %196 : vector<4x8x4xf32>
    %cst_41 = arith.constant dense<0.000000e+00> : vector<4x8xf32>
    %198 = vector.multi_reduction <add>, %197, %cst_41 [2] : vector<4x8x4xf32> to vector<4x8xf32>
    %199 = vector.shape_cast %198 : vector<4x8xf32> to vector<4x8x1xf32>
    %200 = tpu.reciprocal %199 {approx = true} : vector<4x8x1xf32> -> vector<4x8x1xf32>
    %201 = vector.broadcast %200 : vector<4x8x1xf32> to vector<4x8x4xf32>
    %202 = arith.mulf %197, %201 : vector<4x8x4xf32>
    %203 = vector.extract_strided_slice %202 {offsets = [0, 0, 0], sizes = [4, 8, 1], strides = [1, 1, 1]} : vector<4x8x4xf32> to vector<4x8x1xf32>
    %204 = vector.extract_strided_slice %171 {offsets = [0, 0, 0], sizes = [1, 8, 8], strides = [1, 1, 1]} : vector<4x8x8xf32> to vector<1x8x8xf32>
    %205 = vector.broadcast %203 : vector<4x8x1xf32> to vector<4x8x8xf32>
    %206 = vector.broadcast %204 : vector<1x8x8xf32> to vector<4x8x8xf32>
    %207 = arith.mulf %205, %206 : vector<4x8x8xf32>
    %208 = vector.extract_strided_slice %202 {offsets = [0, 0, 1], sizes = [4, 8, 1], strides = [1, 1, 1]} : vector<4x8x4xf32> to vector<4x8x1xf32>
    %209 = vector.extract_strided_slice %171 {offsets = [1, 0, 0], sizes = [1, 8, 8], strides = [1, 1, 1]} : vector<4x8x8xf32> to vector<1x8x8xf32>
    %210 = vector.broadcast %208 : vector<4x8x1xf32> to vector<4x8x8xf32>
    %211 = vector.broadcast %209 : vector<1x8x8xf32> to vector<4x8x8xf32>
    %212 = arith.mulf %210, %211 : vector<4x8x8xf32>
    %213 = arith.addf %207, %212 : vector<4x8x8xf32>
    %214 = vector.extract_strided_slice %202 {offsets = [0, 0, 2], sizes = [4, 8, 1], strides = [1, 1, 1]} : vector<4x8x4xf32> to vector<4x8x1xf32>
    %215 = vector.extract_strided_slice %171 {offsets = [2, 0, 0], sizes = [1, 8, 8], strides = [1, 1, 1]} : vector<4x8x8xf32> to vector<1x8x8xf32>
    %216 = vector.broadcast %214 : vector<4x8x1xf32> to vector<4x8x8xf32>
    %217 = vector.broadcast %215 : vector<1x8x8xf32> to vector<4x8x8xf32>
    %218 = arith.mulf %216, %217 : vector<4x8x8xf32>
    %219 = arith.addf %213, %218 : vector<4x8x8xf32>
    %220 = vector.extract_strided_slice %202 {offsets = [0, 0, 3], sizes = [4, 8, 1], strides = [1, 1, 1]} : vector<4x8x4xf32> to vector<4x8x1xf32>
    %221 = vector.extract_strided_slice %171 {offsets = [3, 0, 0], sizes = [1, 8, 8], strides = [1, 1, 1]} : vector<4x8x8xf32> to vector<1x8x8xf32>
    %222 = vector.broadcast %220 : vector<4x8x1xf32> to vector<4x8x8xf32>
    %223 = vector.broadcast %221 : vector<1x8x8xf32> to vector<4x8x8xf32>
    %224 = arith.mulf %222, %223 : vector<4x8x8xf32>
    %225 = arith.addf %219, %224 : vector<4x8x8xf32>
    %226 = vector.shape_cast %225 : vector<4x8x8xf32> to vector<32x8xf32>
    %227 = vector.extract_strided_slice %37 {offsets = [0, 24], sizes = [32, 8], strides = [1, 1]} : vector<32x96xf32> to vector<32x8xf32>
    %228 = vector.shape_cast %227 : vector<32x8xf32> to vector<4x8x8xf32>
    %cst_42 = arith.constant 0.353553385 : f32
    %229 = vector.broadcast %cst_42 : f32 to vector<4x8x8xf32>
    %230 = arith.mulf %228, %229 : vector<4x8x8xf32>
    %231 = vector.extract_strided_slice %37 {offsets = [0, 56], sizes = [32, 8], strides = [1, 1]} : vector<32x96xf32> to vector<32x8xf32>
    %232 = vector.shape_cast %231 : vector<32x8xf32> to vector<4x8x8xf32>
    %233 = vector.extract_strided_slice %37 {offsets = [0, 88], sizes = [32, 8], strides = [1, 1]} : vector<32x96xf32> to vector<32x8xf32>
    %234 = vector.shape_cast %233 : vector<32x8xf32> to vector<4x8x8xf32>
    %235 = vector.extract_strided_slice %232 {offsets = [0, 0, 0], sizes = [1, 8, 8], strides = [1, 1, 1]} : vector<4x8x8xf32> to vector<1x8x8xf32>
    %236 = vector.broadcast %235 : vector<1x8x8xf32> to vector<4x8x8xf32>
    %237 = arith.mulf %230, %236 : vector<4x8x8xf32>
    %cst_43 = arith.constant dense<0.000000e+00> : vector<4x8xf32>
    %238 = vector.multi_reduction <add>, %237, %cst_43 [2] : vector<4x8x8xf32> to vector<4x8xf32>
    %239 = vector.shape_cast %238 : vector<4x8xf32> to vector<4x8x1xf32>
    %240 = vector.extract_strided_slice %232 {offsets = [1, 0, 0], sizes = [1, 8, 8], strides = [1, 1, 1]} : vector<4x8x8xf32> to vector<1x8x8xf32>
    %241 = vector.broadcast %240 : vector<1x8x8xf32> to vector<4x8x8xf32>
    %242 = arith.mulf %230, %241 : vector<4x8x8xf32>
    %cst_44 = arith.constant dense<0.000000e+00> : vector<4x8xf32>
    %243 = vector.multi_reduction <add>, %242, %cst_44 [2] : vector<4x8x8xf32> to vector<4x8xf32>
    %244 = vector.shape_cast %243 : vector<4x8xf32> to vector<4x8x1xf32>
    %245 = vector.extract_strided_slice %232 {offsets = [2, 0, 0], sizes = [1, 8, 8], strides = [1, 1, 1]} : vector<4x8x8xf32> to vector<1x8x8xf32>
    %246 = vector.broadcast %245 : vector<1x8x8xf32> to vector<4x8x8xf32>
    %247 = arith.mulf %230, %246 : vector<4x8x8xf32>
    %cst_45 = arith.constant dense<0.000000e+00> : vector<4x8xf32>
    %248 = vector.multi_reduction <add>, %247, %cst_45 [2] : vector<4x8x8xf32> to vector<4x8xf32>
    %249 = vector.shape_cast %248 : vector<4x8xf32> to vector<4x8x1xf32>
    %250 = vector.extract_strided_slice %232 {offsets = [3, 0, 0], sizes = [1, 8, 8], strides = [1, 1, 1]} : vector<4x8x8xf32> to vector<1x8x8xf32>
    %251 = vector.broadcast %250 : vector<1x8x8xf32> to vector<4x8x8xf32>
    %252 = arith.mulf %230, %251 : vector<4x8x8xf32>
    %cst_46 = arith.constant dense<0.000000e+00> : vector<4x8xf32>
    %253 = vector.multi_reduction <add>, %252, %cst_46 [2] : vector<4x8x8xf32> to vector<4x8xf32>
    %254 = vector.shape_cast %253 : vector<4x8xf32> to vector<4x8x1xf32>
    %255 = tpu.concatenate %239, %244, %249, %254 in 2 : vector<4x8x1xf32>, vector<4x8x1xf32>, vector<4x8x1xf32>, vector<4x8x1xf32> -> vector<4x8x4xf32>
    %cst_47 = arith.constant dense<0xFF800000> : vector<4x8xf32>
    %256 = vector.multi_reduction <maximumf>, %255, %cst_47 [2] : vector<4x8x4xf32> to vector<4x8xf32>
    %257 = vector.shape_cast %256 : vector<4x8xf32> to vector<4x8x1xf32>
    %258 = vector.broadcast %257 : vector<4x8x1xf32> to vector<4x8x4xf32>
    %259 = arith.subf %255, %258 : vector<4x8x4xf32>
    %260 = math.exp %259 : vector<4x8x4xf32>
    %cst_48 = arith.constant dense<0.000000e+00> : vector<4x8xf32>
    %261 = vector.multi_reduction <add>, %260, %cst_48 [2] : vector<4x8x4xf32> to vector<4x8xf32>
    %262 = vector.shape_cast %261 : vector<4x8xf32> to vector<4x8x1xf32>
    %263 = tpu.reciprocal %262 {approx = true} : vector<4x8x1xf32> -> vector<4x8x1xf32>
    %264 = vector.broadcast %263 : vector<4x8x1xf32> to vector<4x8x4xf32>
    %265 = arith.mulf %260, %264 : vector<4x8x4xf32>
    %266 = vector.extract_strided_slice %265 {offsets = [0, 0, 0], sizes = [4, 8, 1], strides = [1, 1, 1]} : vector<4x8x4xf32> to vector<4x8x1xf32>
    %267 = vector.extract_strided_slice %234 {offsets = [0, 0, 0], sizes = [1, 8, 8], strides = [1, 1, 1]} : vector<4x8x8xf32> to vector<1x8x8xf32>
    %268 = vector.broadcast %266 : vector<4x8x1xf32> to vector<4x8x8xf32>
    %269 = vector.broadcast %267 : vector<1x8x8xf32> to vector<4x8x8xf32>
    %270 = arith.mulf %268, %269 : vector<4x8x8xf32>
    %271 = vector.extract_strided_slice %265 {offsets = [0, 0, 1], sizes = [4, 8, 1], strides = [1, 1, 1]} : vector<4x8x4xf32> to vector<4x8x1xf32>
    %272 = vector.extract_strided_slice %234 {offsets = [1, 0, 0], sizes = [1, 8, 8], strides = [1, 1, 1]} : vector<4x8x8xf32> to vector<1x8x8xf32>
    %273 = vector.broadcast %271 : vector<4x8x1xf32> to vector<4x8x8xf32>
    %274 = vector.broadcast %272 : vector<1x8x8xf32> to vector<4x8x8xf32>
    %275 = arith.mulf %273, %274 : vector<4x8x8xf32>
    %276 = arith.addf %270, %275 : vector<4x8x8xf32>
    %277 = vector.extract_strided_slice %265 {offsets = [0, 0, 2], sizes = [4, 8, 1], strides = [1, 1, 1]} : vector<4x8x4xf32> to vector<4x8x1xf32>
    %278 = vector.extract_strided_slice %234 {offsets = [2, 0, 0], sizes = [1, 8, 8], strides = [1, 1, 1]} : vector<4x8x8xf32> to vector<1x8x8xf32>
    %279 = vector.broadcast %277 : vector<4x8x1xf32> to vector<4x8x8xf32>
    %280 = vector.broadcast %278 : vector<1x8x8xf32> to vector<4x8x8xf32>
    %281 = arith.mulf %279, %280 : vector<4x8x8xf32>
    %282 = arith.addf %276, %281 : vector<4x8x8xf32>
    %283 = vector.extract_strided_slice %265 {offsets = [0, 0, 3], sizes = [4, 8, 1], strides = [1, 1, 1]} : vector<4x8x4xf32> to vector<4x8x1xf32>
    %284 = vector.extract_strided_slice %234 {offsets = [3, 0, 0], sizes = [1, 8, 8], strides = [1, 1, 1]} : vector<4x8x8xf32> to vector<1x8x8xf32>
    %285 = vector.broadcast %283 : vector<4x8x1xf32> to vector<4x8x8xf32>
    %286 = vector.broadcast %284 : vector<1x8x8xf32> to vector<4x8x8xf32>
    %287 = arith.mulf %285, %286 : vector<4x8x8xf32>
    %288 = arith.addf %282, %287 : vector<4x8x8xf32>
    %289 = vector.shape_cast %288 : vector<4x8x8xf32> to vector<32x8xf32>
    %290 = tpu.concatenate %100, %163, %226, %289 in 1 : vector<32x8xf32>, vector<32x8xf32>, vector<32x8xf32>, vector<32x8xf32> -> vector<32x32xf32>
    %c48 = arith.constant 48 : index
    %c0_49 = arith.constant 0 : index
    %291 = vector.load %arg1[%c48, %c0_49] : memref<464x128xf32, #tpu.memory_space<vmem>>, vector<32x32xf32>
    %cst_50 = arith.constant dense<0.000000e+00> : vector<32x32xf32>
    %292 = tpu.matmul %290, %291, %cst_50 {dimension_numbers = #tpu.dot_dimension_numbers<[1], [0], [0], [1], [0, 0, 1, 1], [], []>} : vector<32x32xf32>, vector<32x32xf32>, vector<32x32xf32> -> vector<32x32xf32>
    %c2 = arith.constant 2 : index
    %c0_51 = arith.constant 0 : index
    %293 = vector.load %arg2[%c2, %c0_51] : memref<20x128xf32, #tpu.memory_space<vmem>>, vector<1x32xf32>
    %294 = vector.broadcast %293 : vector<1x32xf32> to vector<32x32xf32>
    %295 = arith.addf %292, %294 : vector<32x32xf32>
    %296 = arith.addf %32, %295 : vector<32x32xf32>
    %c3 = arith.constant 3 : index
    %c0_52 = arith.constant 0 : index
    %297 = vector.load %arg2[%c3, %c0_52] : memref<20x128xf32, #tpu.memory_space<vmem>>, vector<1x32xf32>
    %c4 = arith.constant 4 : index
    %c0_53 = arith.constant 0 : index
    %298 = vector.load %arg2[%c4, %c0_53] : memref<20x128xf32, #tpu.memory_space<vmem>>, vector<1x32xf32>
    %cst_54 = arith.constant dense<0.000000e+00> : vector<32xf32>
    %299 = vector.multi_reduction <add>, %296, %cst_54 [1] : vector<32x32xf32> to vector<32xf32>
    %300 = vector.shape_cast %299 : vector<32xf32> to vector<32x1xf32>
    %cst_55 = arith.constant 3.200000e+01 : f32
    %301 = vector.broadcast %cst_55 : f32 to vector<32x1xf32>
    %302 = arith.divf %300, %301 : vector<32x1xf32>
    %303 = vector.broadcast %302 : vector<32x1xf32> to vector<32x32xf32>
    %304 = arith.subf %296, %303 : vector<32x32xf32>
    %305 = arith.mulf %304, %304 : vector<32x32xf32>
    %cst_56 = arith.constant dense<0.000000e+00> : vector<32xf32>
    %306 = vector.multi_reduction <add>, %305, %cst_56 [1] : vector<32x32xf32> to vector<32xf32>
    %307 = vector.shape_cast %306 : vector<32xf32> to vector<32x1xf32>
    %cst_57 = arith.constant 3.200000e+01 : f32
    %308 = vector.broadcast %cst_57 : f32 to vector<32x1xf32>
    %309 = arith.divf %307, %308 : vector<32x1xf32>
    %310 = vector.broadcast %302 : vector<32x1xf32> to vector<32x32xf32>
    %311 = arith.subf %296, %310 : vector<32x32xf32>
    %cst_58 = arith.constant 9.99999974E-6 : f32
    %312 = vector.broadcast %cst_58 : f32 to vector<32x1xf32>
    %313 = arith.addf %309, %312 : vector<32x1xf32>
    %314 = math.rsqrt %313 : vector<32x1xf32>
    %315 = vector.broadcast %314 : vector<32x1xf32> to vector<32x32xf32>
    %316 = arith.mulf %311, %315 : vector<32x32xf32>
    %317 = vector.broadcast %297 : vector<1x32xf32> to vector<32x32xf32>
    %318 = arith.mulf %316, %317 : vector<32x32xf32>
    %319 = vector.broadcast %298 : vector<1x32xf32> to vector<32x32xf32>
    %320 = arith.addf %318, %319 : vector<32x32xf32>
    %c80 = arith.constant 80 : index
    %c0_59 = arith.constant 0 : index
    %321 = vector.load %arg1[%c80, %c0_59] : memref<464x128xf32, #tpu.memory_space<vmem>>, vector<32x64xf32>
    %cst_60 = arith.constant dense<0.000000e+00> : vector<32x64xf32>
    %322 = tpu.matmul %320, %321, %cst_60 {dimension_numbers = #tpu.dot_dimension_numbers<[1], [0], [0], [1], [0, 0, 1, 1], [], []>} : vector<32x32xf32>, vector<32x64xf32>, vector<32x64xf32> -> vector<32x64xf32>
    %c5 = arith.constant 5 : index
    %c0_61 = arith.constant 0 : index
    %323 = vector.load %arg2[%c5, %c0_61] : memref<20x128xf32, #tpu.memory_space<vmem>>, vector<1x64xf32>
    %324 = vector.broadcast %323 : vector<1x64xf32> to vector<32x64xf32>
    %325 = arith.addf %322, %324 : vector<32x64xf32>
    %cst_62 = arith.constant 0.000000e+00 : f32
    %326 = vector.broadcast %cst_62 : f32 to vector<32x64xf32>
    %327 = arith.maximumf %325, %326 : vector<32x64xf32>
    %c112 = arith.constant 112 : index
    %c0_63 = arith.constant 0 : index
    %328 = vector.load %arg1[%c112, %c0_63] : memref<464x128xf32, #tpu.memory_space<vmem>>, vector<64x32xf32>
    %cst_64 = arith.constant dense<0.000000e+00> : vector<32x32xf32>
    %329 = tpu.matmul %327, %328, %cst_64 {dimension_numbers = #tpu.dot_dimension_numbers<[1], [0], [0], [1], [0, 0, 1, 1], [], []>} : vector<32x64xf32>, vector<64x32xf32>, vector<32x32xf32> -> vector<32x32xf32>
    %c6 = arith.constant 6 : index
    %c0_65 = arith.constant 0 : index
    %330 = vector.load %arg2[%c6, %c0_65] : memref<20x128xf32, #tpu.memory_space<vmem>>, vector<1x32xf32>
    %331 = vector.broadcast %330 : vector<1x32xf32> to vector<32x32xf32>
    %332 = arith.addf %329, %331 : vector<32x32xf32>
    %333 = arith.addf %320, %332 : vector<32x32xf32>
    %c7 = arith.constant 7 : index
    %c0_66 = arith.constant 0 : index
    %334 = vector.load %arg2[%c7, %c0_66] : memref<20x128xf32, #tpu.memory_space<vmem>>, vector<1x32xf32>
    %c8_67 = arith.constant 8 : index
    %c0_68 = arith.constant 0 : index
    %335 = vector.load %arg2[%c8_67, %c0_68] : memref<20x128xf32, #tpu.memory_space<vmem>>, vector<1x32xf32>
    %cst_69 = arith.constant dense<0.000000e+00> : vector<32xf32>
    %336 = vector.multi_reduction <add>, %333, %cst_69 [1] : vector<32x32xf32> to vector<32xf32>
    %337 = vector.shape_cast %336 : vector<32xf32> to vector<32x1xf32>
    %cst_70 = arith.constant 3.200000e+01 : f32
    %338 = vector.broadcast %cst_70 : f32 to vector<32x1xf32>
    %339 = arith.divf %337, %338 : vector<32x1xf32>
    %340 = vector.broadcast %339 : vector<32x1xf32> to vector<32x32xf32>
    %341 = arith.subf %333, %340 : vector<32x32xf32>
    %342 = arith.mulf %341, %341 : vector<32x32xf32>
    %cst_71 = arith.constant dense<0.000000e+00> : vector<32xf32>
    %343 = vector.multi_reduction <add>, %342, %cst_71 [1] : vector<32x32xf32> to vector<32xf32>
    %344 = vector.shape_cast %343 : vector<32xf32> to vector<32x1xf32>
    %cst_72 = arith.constant 3.200000e+01 : f32
    %345 = vector.broadcast %cst_72 : f32 to vector<32x1xf32>
    %346 = arith.divf %344, %345 : vector<32x1xf32>
    %347 = vector.broadcast %339 : vector<32x1xf32> to vector<32x32xf32>
    %348 = arith.subf %333, %347 : vector<32x32xf32>
    %cst_73 = arith.constant 9.99999974E-6 : f32
    %349 = vector.broadcast %cst_73 : f32 to vector<32x1xf32>
    %350 = arith.addf %346, %349 : vector<32x1xf32>
    %351 = math.rsqrt %350 : vector<32x1xf32>
    %352 = vector.broadcast %351 : vector<32x1xf32> to vector<32x32xf32>
    %353 = arith.mulf %348, %352 : vector<32x32xf32>
    %354 = vector.broadcast %334 : vector<1x32xf32> to vector<32x32xf32>
    %355 = arith.mulf %353, %354 : vector<32x32xf32>
    %356 = vector.broadcast %335 : vector<1x32xf32> to vector<32x32xf32>
    %357 = arith.addf %355, %356 : vector<32x32xf32>
    %c176 = arith.constant 176 : index
    %c0_74 = arith.constant 0 : index
    %358 = vector.load %arg1[%c176, %c0_74] : memref<464x128xf32, #tpu.memory_space<vmem>>, vector<32x96xf32>
    %cst_75 = arith.constant dense<0.000000e+00> : vector<32x96xf32>
    %359 = tpu.matmul %357, %358, %cst_75 {dimension_numbers = #tpu.dot_dimension_numbers<[1], [0], [0], [1], [0, 0, 1, 1], [], []>} : vector<32x32xf32>, vector<32x96xf32>, vector<32x96xf32> -> vector<32x96xf32>
    %c9 = arith.constant 9 : index
    %c0_76 = arith.constant 0 : index
    %360 = vector.load %arg2[%c9, %c0_76] : memref<20x128xf32, #tpu.memory_space<vmem>>, vector<1x96xf32>
    %361 = vector.broadcast %360 : vector<1x96xf32> to vector<32x96xf32>
    %362 = arith.addf %359, %361 : vector<32x96xf32>
    %363 = vector.extract_strided_slice %362 {offsets = [0, 0], sizes = [32, 8], strides = [1, 1]} : vector<32x96xf32> to vector<32x8xf32>
    %364 = vector.shape_cast %363 : vector<32x8xf32> to vector<4x8x8xf32>
    %cst_77 = arith.constant 0.353553385 : f32
    %365 = vector.broadcast %cst_77 : f32 to vector<4x8x8xf32>
    %366 = arith.mulf %364, %365 : vector<4x8x8xf32>
    %367 = vector.extract_strided_slice %362 {offsets = [0, 32], sizes = [32, 8], strides = [1, 1]} : vector<32x96xf32> to vector<32x8xf32>
    %368 = vector.shape_cast %367 : vector<32x8xf32> to vector<4x8x8xf32>
    %369 = vector.extract_strided_slice %362 {offsets = [0, 64], sizes = [32, 8], strides = [1, 1]} : vector<32x96xf32> to vector<32x8xf32>
    %370 = vector.shape_cast %369 : vector<32x8xf32> to vector<4x8x8xf32>
    %371 = vector.extract_strided_slice %368 {offsets = [0, 0, 0], sizes = [1, 8, 8], strides = [1, 1, 1]} : vector<4x8x8xf32> to vector<1x8x8xf32>
    %372 = vector.broadcast %371 : vector<1x8x8xf32> to vector<4x8x8xf32>
    %373 = arith.mulf %366, %372 : vector<4x8x8xf32>
    %cst_78 = arith.constant dense<0.000000e+00> : vector<4x8xf32>
    %374 = vector.multi_reduction <add>, %373, %cst_78 [2] : vector<4x8x8xf32> to vector<4x8xf32>
    %375 = vector.shape_cast %374 : vector<4x8xf32> to vector<4x8x1xf32>
    %376 = vector.extract_strided_slice %368 {offsets = [1, 0, 0], sizes = [1, 8, 8], strides = [1, 1, 1]} : vector<4x8x8xf32> to vector<1x8x8xf32>
    %377 = vector.broadcast %376 : vector<1x8x8xf32> to vector<4x8x8xf32>
    %378 = arith.mulf %366, %377 : vector<4x8x8xf32>
    %cst_79 = arith.constant dense<0.000000e+00> : vector<4x8xf32>
    %379 = vector.multi_reduction <add>, %378, %cst_79 [2] : vector<4x8x8xf32> to vector<4x8xf32>
    %380 = vector.shape_cast %379 : vector<4x8xf32> to vector<4x8x1xf32>
    %381 = vector.extract_strided_slice %368 {offsets = [2, 0, 0], sizes = [1, 8, 8], strides = [1, 1, 1]} : vector<4x8x8xf32> to vector<1x8x8xf32>
    %382 = vector.broadcast %381 : vector<1x8x8xf32> to vector<4x8x8xf32>
    %383 = arith.mulf %366, %382 : vector<4x8x8xf32>
    %cst_80 = arith.constant dense<0.000000e+00> : vector<4x8xf32>
    %384 = vector.multi_reduction <add>, %383, %cst_80 [2] : vector<4x8x8xf32> to vector<4x8xf32>
    %385 = vector.shape_cast %384 : vector<4x8xf32> to vector<4x8x1xf32>
    %386 = vector.extract_strided_slice %368 {offsets = [3, 0, 0], sizes = [1, 8, 8], strides = [1, 1, 1]} : vector<4x8x8xf32> to vector<1x8x8xf32>
    %387 = vector.broadcast %386 : vector<1x8x8xf32> to vector<4x8x8xf32>
    %388 = arith.mulf %366, %387 : vector<4x8x8xf32>
    %cst_81 = arith.constant dense<0.000000e+00> : vector<4x8xf32>
    %389 = vector.multi_reduction <add>, %388, %cst_81 [2] : vector<4x8x8xf32> to vector<4x8xf32>
    %390 = vector.shape_cast %389 : vector<4x8xf32> to vector<4x8x1xf32>
    %391 = tpu.concatenate %375, %380, %385, %390 in 2 : vector<4x8x1xf32>, vector<4x8x1xf32>, vector<4x8x1xf32>, vector<4x8x1xf32> -> vector<4x8x4xf32>
    %cst_82 = arith.constant dense<0xFF800000> : vector<4x8xf32>
    %392 = vector.multi_reduction <maximumf>, %391, %cst_82 [2] : vector<4x8x4xf32> to vector<4x8xf32>
    %393 = vector.shape_cast %392 : vector<4x8xf32> to vector<4x8x1xf32>
    %394 = vector.broadcast %393 : vector<4x8x1xf32> to vector<4x8x4xf32>
    %395 = arith.subf %391, %394 : vector<4x8x4xf32>
    %396 = math.exp %395 : vector<4x8x4xf32>
    %cst_83 = arith.constant dense<0.000000e+00> : vector<4x8xf32>
    %397 = vector.multi_reduction <add>, %396, %cst_83 [2] : vector<4x8x4xf32> to vector<4x8xf32>
    %398 = vector.shape_cast %397 : vector<4x8xf32> to vector<4x8x1xf32>
    %399 = tpu.reciprocal %398 {approx = true} : vector<4x8x1xf32> -> vector<4x8x1xf32>
    %400 = vector.broadcast %399 : vector<4x8x1xf32> to vector<4x8x4xf32>
    %401 = arith.mulf %396, %400 : vector<4x8x4xf32>
    %402 = vector.extract_strided_slice %401 {offsets = [0, 0, 0], sizes = [4, 8, 1], strides = [1, 1, 1]} : vector<4x8x4xf32> to vector<4x8x1xf32>
    %403 = vector.extract_strided_slice %370 {offsets = [0, 0, 0], sizes = [1, 8, 8], strides = [1, 1, 1]} : vector<4x8x8xf32> to vector<1x8x8xf32>
    %404 = vector.broadcast %402 : vector<4x8x1xf32> to vector<4x8x8xf32>
    %405 = vector.broadcast %403 : vector<1x8x8xf32> to vector<4x8x8xf32>
    %406 = arith.mulf %404, %405 : vector<4x8x8xf32>
    %407 = vector.extract_strided_slice %401 {offsets = [0, 0, 1], sizes = [4, 8, 1], strides = [1, 1, 1]} : vector<4x8x4xf32> to vector<4x8x1xf32>
    %408 = vector.extract_strided_slice %370 {offsets = [1, 0, 0], sizes = [1, 8, 8], strides = [1, 1, 1]} : vector<4x8x8xf32> to vector<1x8x8xf32>
    %409 = vector.broadcast %407 : vector<4x8x1xf32> to vector<4x8x8xf32>
    %410 = vector.broadcast %408 : vector<1x8x8xf32> to vector<4x8x8xf32>
    %411 = arith.mulf %409, %410 : vector<4x8x8xf32>
    %412 = arith.addf %406, %411 : vector<4x8x8xf32>
    %413 = vector.extract_strided_slice %401 {offsets = [0, 0, 2], sizes = [4, 8, 1], strides = [1, 1, 1]} : vector<4x8x4xf32> to vector<4x8x1xf32>
    %414 = vector.extract_strided_slice %370 {offsets = [2, 0, 0], sizes = [1, 8, 8], strides = [1, 1, 1]} : vector<4x8x8xf32> to vector<1x8x8xf32>
    %415 = vector.broadcast %413 : vector<4x8x1xf32> to vector<4x8x8xf32>
    %416 = vector.broadcast %414 : vector<1x8x8xf32> to vector<4x8x8xf32>
    %417 = arith.mulf %415, %416 : vector<4x8x8xf32>
    %418 = arith.addf %412, %417 : vector<4x8x8xf32>
    %419 = vector.extract_strided_slice %401 {offsets = [0, 0, 3], sizes = [4, 8, 1], strides = [1, 1, 1]} : vector<4x8x4xf32> to vector<4x8x1xf32>
    %420 = vector.extract_strided_slice %370 {offsets = [3, 0, 0], sizes = [1, 8, 8], strides = [1, 1, 1]} : vector<4x8x8xf32> to vector<1x8x8xf32>
    %421 = vector.broadcast %419 : vector<4x8x1xf32> to vector<4x8x8xf32>
    %422 = vector.broadcast %420 : vector<1x8x8xf32> to vector<4x8x8xf32>
    %423 = arith.mulf %421, %422 : vector<4x8x8xf32>
    %424 = arith.addf %418, %423 : vector<4x8x8xf32>
    %425 = vector.shape_cast %424 : vector<4x8x8xf32> to vector<32x8xf32>
    %426 = vector.extract_strided_slice %362 {offsets = [0, 8], sizes = [32, 8], strides = [1, 1]} : vector<32x96xf32> to vector<32x8xf32>
    %427 = vector.shape_cast %426 : vector<32x8xf32> to vector<4x8x8xf32>
    %cst_84 = arith.constant 0.353553385 : f32
    %428 = vector.broadcast %cst_84 : f32 to vector<4x8x8xf32>
    %429 = arith.mulf %427, %428 : vector<4x8x8xf32>
    %430 = vector.extract_strided_slice %362 {offsets = [0, 40], sizes = [32, 8], strides = [1, 1]} : vector<32x96xf32> to vector<32x8xf32>
    %431 = vector.shape_cast %430 : vector<32x8xf32> to vector<4x8x8xf32>
    %432 = vector.extract_strided_slice %362 {offsets = [0, 72], sizes = [32, 8], strides = [1, 1]} : vector<32x96xf32> to vector<32x8xf32>
    %433 = vector.shape_cast %432 : vector<32x8xf32> to vector<4x8x8xf32>
    %434 = vector.extract_strided_slice %431 {offsets = [0, 0, 0], sizes = [1, 8, 8], strides = [1, 1, 1]} : vector<4x8x8xf32> to vector<1x8x8xf32>
    %435 = vector.broadcast %434 : vector<1x8x8xf32> to vector<4x8x8xf32>
    %436 = arith.mulf %429, %435 : vector<4x8x8xf32>
    %cst_85 = arith.constant dense<0.000000e+00> : vector<4x8xf32>
    %437 = vector.multi_reduction <add>, %436, %cst_85 [2] : vector<4x8x8xf32> to vector<4x8xf32>
    %438 = vector.shape_cast %437 : vector<4x8xf32> to vector<4x8x1xf32>
    %439 = vector.extract_strided_slice %431 {offsets = [1, 0, 0], sizes = [1, 8, 8], strides = [1, 1, 1]} : vector<4x8x8xf32> to vector<1x8x8xf32>
    %440 = vector.broadcast %439 : vector<1x8x8xf32> to vector<4x8x8xf32>
    %441 = arith.mulf %429, %440 : vector<4x8x8xf32>
    %cst_86 = arith.constant dense<0.000000e+00> : vector<4x8xf32>
    %442 = vector.multi_reduction <add>, %441, %cst_86 [2] : vector<4x8x8xf32> to vector<4x8xf32>
    %443 = vector.shape_cast %442 : vector<4x8xf32> to vector<4x8x1xf32>
    %444 = vector.extract_strided_slice %431 {offsets = [2, 0, 0], sizes = [1, 8, 8], strides = [1, 1, 1]} : vector<4x8x8xf32> to vector<1x8x8xf32>
    %445 = vector.broadcast %444 : vector<1x8x8xf32> to vector<4x8x8xf32>
    %446 = arith.mulf %429, %445 : vector<4x8x8xf32>
    %cst_87 = arith.constant dense<0.000000e+00> : vector<4x8xf32>
    %447 = vector.multi_reduction <add>, %446, %cst_87 [2] : vector<4x8x8xf32> to vector<4x8xf32>
    %448 = vector.shape_cast %447 : vector<4x8xf32> to vector<4x8x1xf32>
    %449 = vector.extract_strided_slice %431 {offsets = [3, 0, 0], sizes = [1, 8, 8], strides = [1, 1, 1]} : vector<4x8x8xf32> to vector<1x8x8xf32>
    %450 = vector.broadcast %449 : vector<1x8x8xf32> to vector<4x8x8xf32>
    %451 = arith.mulf %429, %450 : vector<4x8x8xf32>
    %cst_88 = arith.constant dense<0.000000e+00> : vector<4x8xf32>
    %452 = vector.multi_reduction <add>, %451, %cst_88 [2] : vector<4x8x8xf32> to vector<4x8xf32>
    %453 = vector.shape_cast %452 : vector<4x8xf32> to vector<4x8x1xf32>
    %454 = tpu.concatenate %438, %443, %448, %453 in 2 : vector<4x8x1xf32>, vector<4x8x1xf32>, vector<4x8x1xf32>, vector<4x8x1xf32> -> vector<4x8x4xf32>
    %cst_89 = arith.constant dense<0xFF800000> : vector<4x8xf32>
    %455 = vector.multi_reduction <maximumf>, %454, %cst_89 [2] : vector<4x8x4xf32> to vector<4x8xf32>
    %456 = vector.shape_cast %455 : vector<4x8xf32> to vector<4x8x1xf32>
    %457 = vector.broadcast %456 : vector<4x8x1xf32> to vector<4x8x4xf32>
    %458 = arith.subf %454, %457 : vector<4x8x4xf32>
    %459 = math.exp %458 : vector<4x8x4xf32>
    %cst_90 = arith.constant dense<0.000000e+00> : vector<4x8xf32>
    %460 = vector.multi_reduction <add>, %459, %cst_90 [2] : vector<4x8x4xf32> to vector<4x8xf32>
    %461 = vector.shape_cast %460 : vector<4x8xf32> to vector<4x8x1xf32>
    %462 = tpu.reciprocal %461 {approx = true} : vector<4x8x1xf32> -> vector<4x8x1xf32>
    %463 = vector.broadcast %462 : vector<4x8x1xf32> to vector<4x8x4xf32>
    %464 = arith.mulf %459, %463 : vector<4x8x4xf32>
    %465 = vector.extract_strided_slice %464 {offsets = [0, 0, 0], sizes = [4, 8, 1], strides = [1, 1, 1]} : vector<4x8x4xf32> to vector<4x8x1xf32>
    %466 = vector.extract_strided_slice %433 {offsets = [0, 0, 0], sizes = [1, 8, 8], strides = [1, 1, 1]} : vector<4x8x8xf32> to vector<1x8x8xf32>
    %467 = vector.broadcast %465 : vector<4x8x1xf32> to vector<4x8x8xf32>
    %468 = vector.broadcast %466 : vector<1x8x8xf32> to vector<4x8x8xf32>
    %469 = arith.mulf %467, %468 : vector<4x8x8xf32>
    %470 = vector.extract_strided_slice %464 {offsets = [0, 0, 1], sizes = [4, 8, 1], strides = [1, 1, 1]} : vector<4x8x4xf32> to vector<4x8x1xf32>
    %471 = vector.extract_strided_slice %433 {offsets = [1, 0, 0], sizes = [1, 8, 8], strides = [1, 1, 1]} : vector<4x8x8xf32> to vector<1x8x8xf32>
    %472 = vector.broadcast %470 : vector<4x8x1xf32> to vector<4x8x8xf32>
    %473 = vector.broadcast %471 : vector<1x8x8xf32> to vector<4x8x8xf32>
    %474 = arith.mulf %472, %473 : vector<4x8x8xf32>
    %475 = arith.addf %469, %474 : vector<4x8x8xf32>
    %476 = vector.extract_strided_slice %464 {offsets = [0, 0, 2], sizes = [4, 8, 1], strides = [1, 1, 1]} : vector<4x8x4xf32> to vector<4x8x1xf32>
    %477 = vector.extract_strided_slice %433 {offsets = [2, 0, 0], sizes = [1, 8, 8], strides = [1, 1, 1]} : vector<4x8x8xf32> to vector<1x8x8xf32>
    %478 = vector.broadcast %476 : vector<4x8x1xf32> to vector<4x8x8xf32>
    %479 = vector.broadcast %477 : vector<1x8x8xf32> to vector<4x8x8xf32>
    %480 = arith.mulf %478, %479 : vector<4x8x8xf32>
    %481 = arith.addf %475, %480 : vector<4x8x8xf32>
    %482 = vector.extract_strided_slice %464 {offsets = [0, 0, 3], sizes = [4, 8, 1], strides = [1, 1, 1]} : vector<4x8x4xf32> to vector<4x8x1xf32>
    %483 = vector.extract_strided_slice %433 {offsets = [3, 0, 0], sizes = [1, 8, 8], strides = [1, 1, 1]} : vector<4x8x8xf32> to vector<1x8x8xf32>
    %484 = vector.broadcast %482 : vector<4x8x1xf32> to vector<4x8x8xf32>
    %485 = vector.broadcast %483 : vector<1x8x8xf32> to vector<4x8x8xf32>
    %486 = arith.mulf %484, %485 : vector<4x8x8xf32>
    %487 = arith.addf %481, %486 : vector<4x8x8xf32>
    %488 = vector.shape_cast %487 : vector<4x8x8xf32> to vector<32x8xf32>
    %489 = vector.extract_strided_slice %362 {offsets = [0, 16], sizes = [32, 8], strides = [1, 1]} : vector<32x96xf32> to vector<32x8xf32>
    %490 = vector.shape_cast %489 : vector<32x8xf32> to vector<4x8x8xf32>
    %cst_91 = arith.constant 0.353553385 : f32
    %491 = vector.broadcast %cst_91 : f32 to vector<4x8x8xf32>
    %492 = arith.mulf %490, %491 : vector<4x8x8xf32>
    %493 = vector.extract_strided_slice %362 {offsets = [0, 48], sizes = [32, 8], strides = [1, 1]} : vector<32x96xf32> to vector<32x8xf32>
    %494 = vector.shape_cast %493 : vector<32x8xf32> to vector<4x8x8xf32>
    %495 = vector.extract_strided_slice %362 {offsets = [0, 80], sizes = [32, 8], strides = [1, 1]} : vector<32x96xf32> to vector<32x8xf32>
    %496 = vector.shape_cast %495 : vector<32x8xf32> to vector<4x8x8xf32>
    %497 = vector.extract_strided_slice %494 {offsets = [0, 0, 0], sizes = [1, 8, 8], strides = [1, 1, 1]} : vector<4x8x8xf32> to vector<1x8x8xf32>
    %498 = vector.broadcast %497 : vector<1x8x8xf32> to vector<4x8x8xf32>
    %499 = arith.mulf %492, %498 : vector<4x8x8xf32>
    %cst_92 = arith.constant dense<0.000000e+00> : vector<4x8xf32>
    %500 = vector.multi_reduction <add>, %499, %cst_92 [2] : vector<4x8x8xf32> to vector<4x8xf32>
    %501 = vector.shape_cast %500 : vector<4x8xf32> to vector<4x8x1xf32>
    %502 = vector.extract_strided_slice %494 {offsets = [1, 0, 0], sizes = [1, 8, 8], strides = [1, 1, 1]} : vector<4x8x8xf32> to vector<1x8x8xf32>
    %503 = vector.broadcast %502 : vector<1x8x8xf32> to vector<4x8x8xf32>
    %504 = arith.mulf %492, %503 : vector<4x8x8xf32>
    %cst_93 = arith.constant dense<0.000000e+00> : vector<4x8xf32>
    %505 = vector.multi_reduction <add>, %504, %cst_93 [2] : vector<4x8x8xf32> to vector<4x8xf32>
    %506 = vector.shape_cast %505 : vector<4x8xf32> to vector<4x8x1xf32>
    %507 = vector.extract_strided_slice %494 {offsets = [2, 0, 0], sizes = [1, 8, 8], strides = [1, 1, 1]} : vector<4x8x8xf32> to vector<1x8x8xf32>
    %508 = vector.broadcast %507 : vector<1x8x8xf32> to vector<4x8x8xf32>
    %509 = arith.mulf %492, %508 : vector<4x8x8xf32>
    %cst_94 = arith.constant dense<0.000000e+00> : vector<4x8xf32>
    %510 = vector.multi_reduction <add>, %509, %cst_94 [2] : vector<4x8x8xf32> to vector<4x8xf32>
    %511 = vector.shape_cast %510 : vector<4x8xf32> to vector<4x8x1xf32>
    %512 = vector.extract_strided_slice %494 {offsets = [3, 0, 0], sizes = [1, 8, 8], strides = [1, 1, 1]} : vector<4x8x8xf32> to vector<1x8x8xf32>
    %513 = vector.broadcast %512 : vector<1x8x8xf32> to vector<4x8x8xf32>
    %514 = arith.mulf %492, %513 : vector<4x8x8xf32>
    %cst_95 = arith.constant dense<0.000000e+00> : vector<4x8xf32>
    %515 = vector.multi_reduction <add>, %514, %cst_95 [2] : vector<4x8x8xf32> to vector<4x8xf32>
    %516 = vector.shape_cast %515 : vector<4x8xf32> to vector<4x8x1xf32>
    %517 = tpu.concatenate %501, %506, %511, %516 in 2 : vector<4x8x1xf32>, vector<4x8x1xf32>, vector<4x8x1xf32>, vector<4x8x1xf32> -> vector<4x8x4xf32>
    %cst_96 = arith.constant dense<0xFF800000> : vector<4x8xf32>
    %518 = vector.multi_reduction <maximumf>, %517, %cst_96 [2] : vector<4x8x4xf32> to vector<4x8xf32>
    %519 = vector.shape_cast %518 : vector<4x8xf32> to vector<4x8x1xf32>
    %520 = vector.broadcast %519 : vector<4x8x1xf32> to vector<4x8x4xf32>
    %521 = arith.subf %517, %520 : vector<4x8x4xf32>
    %522 = math.exp %521 : vector<4x8x4xf32>
    %cst_97 = arith.constant dense<0.000000e+00> : vector<4x8xf32>
    %523 = vector.multi_reduction <add>, %522, %cst_97 [2] : vector<4x8x4xf32> to vector<4x8xf32>
    %524 = vector.shape_cast %523 : vector<4x8xf32> to vector<4x8x1xf32>
    %525 = tpu.reciprocal %524 {approx = true} : vector<4x8x1xf32> -> vector<4x8x1xf32>
    %526 = vector.broadcast %525 : vector<4x8x1xf32> to vector<4x8x4xf32>
    %527 = arith.mulf %522, %526 : vector<4x8x4xf32>
    %528 = vector.extract_strided_slice %527 {offsets = [0, 0, 0], sizes = [4, 8, 1], strides = [1, 1, 1]} : vector<4x8x4xf32> to vector<4x8x1xf32>
    %529 = vector.extract_strided_slice %496 {offsets = [0, 0, 0], sizes = [1, 8, 8], strides = [1, 1, 1]} : vector<4x8x8xf32> to vector<1x8x8xf32>
    %530 = vector.broadcast %528 : vector<4x8x1xf32> to vector<4x8x8xf32>
    %531 = vector.broadcast %529 : vector<1x8x8xf32> to vector<4x8x8xf32>
    %532 = arith.mulf %530, %531 : vector<4x8x8xf32>
    %533 = vector.extract_strided_slice %527 {offsets = [0, 0, 1], sizes = [4, 8, 1], strides = [1, 1, 1]} : vector<4x8x4xf32> to vector<4x8x1xf32>
    %534 = vector.extract_strided_slice %496 {offsets = [1, 0, 0], sizes = [1, 8, 8], strides = [1, 1, 1]} : vector<4x8x8xf32> to vector<1x8x8xf32>
    %535 = vector.broadcast %533 : vector<4x8x1xf32> to vector<4x8x8xf32>
    %536 = vector.broadcast %534 : vector<1x8x8xf32> to vector<4x8x8xf32>
    %537 = arith.mulf %535, %536 : vector<4x8x8xf32>
    %538 = arith.addf %532, %537 : vector<4x8x8xf32>
    %539 = vector.extract_strided_slice %527 {offsets = [0, 0, 2], sizes = [4, 8, 1], strides = [1, 1, 1]} : vector<4x8x4xf32> to vector<4x8x1xf32>
    %540 = vector.extract_strided_slice %496 {offsets = [2, 0, 0], sizes = [1, 8, 8], strides = [1, 1, 1]} : vector<4x8x8xf32> to vector<1x8x8xf32>
    %541 = vector.broadcast %539 : vector<4x8x1xf32> to vector<4x8x8xf32>
    %542 = vector.broadcast %540 : vector<1x8x8xf32> to vector<4x8x8xf32>
    %543 = arith.mulf %541, %542 : vector<4x8x8xf32>
    %544 = arith.addf %538, %543 : vector<4x8x8xf32>
    %545 = vector.extract_strided_slice %527 {offsets = [0, 0, 3], sizes = [4, 8, 1], strides = [1, 1, 1]} : vector<4x8x4xf32> to vector<4x8x1xf32>
    %546 = vector.extract_strided_slice %496 {offsets = [3, 0, 0], sizes = [1, 8, 8], strides = [1, 1, 1]} : vector<4x8x8xf32> to vector<1x8x8xf32>
    %547 = vector.broadcast %545 : vector<4x8x1xf32> to vector<4x8x8xf32>
    %548 = vector.broadcast %546 : vector<1x8x8xf32> to vector<4x8x8xf32>
    %549 = arith.mulf %547, %548 : vector<4x8x8xf32>
    %550 = arith.addf %544, %549 : vector<4x8x8xf32>
    %551 = vector.shape_cast %550 : vector<4x8x8xf32> to vector<32x8xf32>
    %552 = vector.extract_strided_slice %362 {offsets = [0, 24], sizes = [32, 8], strides = [1, 1]} : vector<32x96xf32> to vector<32x8xf32>
    %553 = vector.shape_cast %552 : vector<32x8xf32> to vector<4x8x8xf32>
    %cst_98 = arith.constant 0.353553385 : f32
    %554 = vector.broadcast %cst_98 : f32 to vector<4x8x8xf32>
    %555 = arith.mulf %553, %554 : vector<4x8x8xf32>
    %556 = vector.extract_strided_slice %362 {offsets = [0, 56], sizes = [32, 8], strides = [1, 1]} : vector<32x96xf32> to vector<32x8xf32>
    %557 = vector.shape_cast %556 : vector<32x8xf32> to vector<4x8x8xf32>
    %558 = vector.extract_strided_slice %362 {offsets = [0, 88], sizes = [32, 8], strides = [1, 1]} : vector<32x96xf32> to vector<32x8xf32>
    %559 = vector.shape_cast %558 : vector<32x8xf32> to vector<4x8x8xf32>
    %560 = vector.extract_strided_slice %557 {offsets = [0, 0, 0], sizes = [1, 8, 8], strides = [1, 1, 1]} : vector<4x8x8xf32> to vector<1x8x8xf32>
    %561 = vector.broadcast %560 : vector<1x8x8xf32> to vector<4x8x8xf32>
    %562 = arith.mulf %555, %561 : vector<4x8x8xf32>
    %cst_99 = arith.constant dense<0.000000e+00> : vector<4x8xf32>
    %563 = vector.multi_reduction <add>, %562, %cst_99 [2] : vector<4x8x8xf32> to vector<4x8xf32>
    %564 = vector.shape_cast %563 : vector<4x8xf32> to vector<4x8x1xf32>
    %565 = vector.extract_strided_slice %557 {offsets = [1, 0, 0], sizes = [1, 8, 8], strides = [1, 1, 1]} : vector<4x8x8xf32> to vector<1x8x8xf32>
    %566 = vector.broadcast %565 : vector<1x8x8xf32> to vector<4x8x8xf32>
    %567 = arith.mulf %555, %566 : vector<4x8x8xf32>
    %cst_100 = arith.constant dense<0.000000e+00> : vector<4x8xf32>
    %568 = vector.multi_reduction <add>, %567, %cst_100 [2] : vector<4x8x8xf32> to vector<4x8xf32>
    %569 = vector.shape_cast %568 : vector<4x8xf32> to vector<4x8x1xf32>
    %570 = vector.extract_strided_slice %557 {offsets = [2, 0, 0], sizes = [1, 8, 8], strides = [1, 1, 1]} : vector<4x8x8xf32> to vector<1x8x8xf32>
    %571 = vector.broadcast %570 : vector<1x8x8xf32> to vector<4x8x8xf32>
    %572 = arith.mulf %555, %571 : vector<4x8x8xf32>
    %cst_101 = arith.constant dense<0.000000e+00> : vector<4x8xf32>
    %573 = vector.multi_reduction <add>, %572, %cst_101 [2] : vector<4x8x8xf32> to vector<4x8xf32>
    %574 = vector.shape_cast %573 : vector<4x8xf32> to vector<4x8x1xf32>
    %575 = vector.extract_strided_slice %557 {offsets = [3, 0, 0], sizes = [1, 8, 8], strides = [1, 1, 1]} : vector<4x8x8xf32> to vector<1x8x8xf32>
    %576 = vector.broadcast %575 : vector<1x8x8xf32> to vector<4x8x8xf32>
    %577 = arith.mulf %555, %576 : vector<4x8x8xf32>
    %cst_102 = arith.constant dense<0.000000e+00> : vector<4x8xf32>
    %578 = vector.multi_reduction <add>, %577, %cst_102 [2] : vector<4x8x8xf32> to vector<4x8xf32>
    %579 = vector.shape_cast %578 : vector<4x8xf32> to vector<4x8x1xf32>
    %580 = tpu.concatenate %564, %569, %574, %579 in 2 : vector<4x8x1xf32>, vector<4x8x1xf32>, vector<4x8x1xf32>, vector<4x8x1xf32> -> vector<4x8x4xf32>
    %cst_103 = arith.constant dense<0xFF800000> : vector<4x8xf32>
    %581 = vector.multi_reduction <maximumf>, %580, %cst_103 [2] : vector<4x8x4xf32> to vector<4x8xf32>
    %582 = vector.shape_cast %581 : vector<4x8xf32> to vector<4x8x1xf32>
    %583 = vector.broadcast %582 : vector<4x8x1xf32> to vector<4x8x4xf32>
    %584 = arith.subf %580, %583 : vector<4x8x4xf32>
    %585 = math.exp %584 : vector<4x8x4xf32>
    %cst_104 = arith.constant dense<0.000000e+00> : vector<4x8xf32>
    %586 = vector.multi_reduction <add>, %585, %cst_104 [2] : vector<4x8x4xf32> to vector<4x8xf32>
    %587 = vector.shape_cast %586 : vector<4x8xf32> to vector<4x8x1xf32>
    %588 = tpu.reciprocal %587 {approx = true} : vector<4x8x1xf32> -> vector<4x8x1xf32>
    %589 = vector.broadcast %588 : vector<4x8x1xf32> to vector<4x8x4xf32>
    %590 = arith.mulf %585, %589 : vector<4x8x4xf32>
    %591 = vector.extract_strided_slice %590 {offsets = [0, 0, 0], sizes = [4, 8, 1], strides = [1, 1, 1]} : vector<4x8x4xf32> to vector<4x8x1xf32>
    %592 = vector.extract_strided_slice %559 {offsets = [0, 0, 0], sizes = [1, 8, 8], strides = [1, 1, 1]} : vector<4x8x8xf32> to vector<1x8x8xf32>
    %593 = vector.broadcast %591 : vector<4x8x1xf32> to vector<4x8x8xf32>
    %594 = vector.broadcast %592 : vector<1x8x8xf32> to vector<4x8x8xf32>
    %595 = arith.mulf %593, %594 : vector<4x8x8xf32>
    %596 = vector.extract_strided_slice %590 {offsets = [0, 0, 1], sizes = [4, 8, 1], strides = [1, 1, 1]} : vector<4x8x4xf32> to vector<4x8x1xf32>
    %597 = vector.extract_strided_slice %559 {offsets = [1, 0, 0], sizes = [1, 8, 8], strides = [1, 1, 1]} : vector<4x8x8xf32> to vector<1x8x8xf32>
    %598 = vector.broadcast %596 : vector<4x8x1xf32> to vector<4x8x8xf32>
    %599 = vector.broadcast %597 : vector<1x8x8xf32> to vector<4x8x8xf32>
    %600 = arith.mulf %598, %599 : vector<4x8x8xf32>
    %601 = arith.addf %595, %600 : vector<4x8x8xf32>
    %602 = vector.extract_strided_slice %590 {offsets = [0, 0, 2], sizes = [4, 8, 1], strides = [1, 1, 1]} : vector<4x8x4xf32> to vector<4x8x1xf32>
    %603 = vector.extract_strided_slice %559 {offsets = [2, 0, 0], sizes = [1, 8, 8], strides = [1, 1, 1]} : vector<4x8x8xf32> to vector<1x8x8xf32>
    %604 = vector.broadcast %602 : vector<4x8x1xf32> to vector<4x8x8xf32>
    %605 = vector.broadcast %603 : vector<1x8x8xf32> to vector<4x8x8xf32>
    %606 = arith.mulf %604, %605 : vector<4x8x8xf32>
    %607 = arith.addf %601, %606 : vector<4x8x8xf32>
    %608 = vector.extract_strided_slice %590 {offsets = [0, 0, 3], sizes = [4, 8, 1], strides = [1, 1, 1]} : vector<4x8x4xf32> to vector<4x8x1xf32>
    %609 = vector.extract_strided_slice %559 {offsets = [3, 0, 0], sizes = [1, 8, 8], strides = [1, 1, 1]} : vector<4x8x8xf32> to vector<1x8x8xf32>
    %610 = vector.broadcast %608 : vector<4x8x1xf32> to vector<4x8x8xf32>
    %611 = vector.broadcast %609 : vector<1x8x8xf32> to vector<4x8x8xf32>
    %612 = arith.mulf %610, %611 : vector<4x8x8xf32>
    %613 = arith.addf %607, %612 : vector<4x8x8xf32>
    %614 = vector.shape_cast %613 : vector<4x8x8xf32> to vector<32x8xf32>
    %615 = tpu.concatenate %425, %488, %551, %614 in 1 : vector<32x8xf32>, vector<32x8xf32>, vector<32x8xf32>, vector<32x8xf32> -> vector<32x32xf32>
    %c208 = arith.constant 208 : index
    %c0_105 = arith.constant 0 : index
    %616 = vector.load %arg1[%c208, %c0_105] : memref<464x128xf32, #tpu.memory_space<vmem>>, vector<32x32xf32>
    %cst_106 = arith.constant dense<0.000000e+00> : vector<32x32xf32>
    %617 = tpu.matmul %615, %616, %cst_106 {dimension_numbers = #tpu.dot_dimension_numbers<[1], [0], [0], [1], [0, 0, 1, 1], [], []>} : vector<32x32xf32>, vector<32x32xf32>, vector<32x32xf32> -> vector<32x32xf32>
    %c10 = arith.constant 10 : index
    %c0_107 = arith.constant 0 : index
    %618 = vector.load %arg2[%c10, %c0_107] : memref<20x128xf32, #tpu.memory_space<vmem>>, vector<1x32xf32>
    %619 = vector.broadcast %618 : vector<1x32xf32> to vector<32x32xf32>
    %620 = arith.addf %617, %619 : vector<32x32xf32>
    %621 = arith.addf %357, %620 : vector<32x32xf32>
    %c11 = arith.constant 11 : index
    %c0_108 = arith.constant 0 : index
    %622 = vector.load %arg2[%c11, %c0_108] : memref<20x128xf32, #tpu.memory_space<vmem>>, vector<1x32xf32>
    %c12 = arith.constant 12 : index
    %c0_109 = arith.constant 0 : index
    %623 = vector.load %arg2[%c12, %c0_109] : memref<20x128xf32, #tpu.memory_space<vmem>>, vector<1x32xf32>
    %cst_110 = arith.constant dense<0.000000e+00> : vector<32xf32>
    %624 = vector.multi_reduction <add>, %621, %cst_110 [1] : vector<32x32xf32> to vector<32xf32>
    %625 = vector.shape_cast %624 : vector<32xf32> to vector<32x1xf32>
    %cst_111 = arith.constant 3.200000e+01 : f32
    %626 = vector.broadcast %cst_111 : f32 to vector<32x1xf32>
    %627 = arith.divf %625, %626 : vector<32x1xf32>
    %628 = vector.broadcast %627 : vector<32x1xf32> to vector<32x32xf32>
    %629 = arith.subf %621, %628 : vector<32x32xf32>
    %630 = arith.mulf %629, %629 : vector<32x32xf32>
    %cst_112 = arith.constant dense<0.000000e+00> : vector<32xf32>
    %631 = vector.multi_reduction <add>, %630, %cst_112 [1] : vector<32x32xf32> to vector<32xf32>
    %632 = vector.shape_cast %631 : vector<32xf32> to vector<32x1xf32>
    %cst_113 = arith.constant 3.200000e+01 : f32
    %633 = vector.broadcast %cst_113 : f32 to vector<32x1xf32>
    %634 = arith.divf %632, %633 : vector<32x1xf32>
    %635 = vector.broadcast %627 : vector<32x1xf32> to vector<32x32xf32>
    %636 = arith.subf %621, %635 : vector<32x32xf32>
    %cst_114 = arith.constant 9.99999974E-6 : f32
    %637 = vector.broadcast %cst_114 : f32 to vector<32x1xf32>
    %638 = arith.addf %634, %637 : vector<32x1xf32>
    %639 = math.rsqrt %638 : vector<32x1xf32>
    %640 = vector.broadcast %639 : vector<32x1xf32> to vector<32x32xf32>
    %641 = arith.mulf %636, %640 : vector<32x32xf32>
    %642 = vector.broadcast %622 : vector<1x32xf32> to vector<32x32xf32>
    %643 = arith.mulf %641, %642 : vector<32x32xf32>
    %644 = vector.broadcast %623 : vector<1x32xf32> to vector<32x32xf32>
    %645 = arith.addf %643, %644 : vector<32x32xf32>
    %c240 = arith.constant 240 : index
    %c0_115 = arith.constant 0 : index
    %646 = vector.load %arg1[%c240, %c0_115] : memref<464x128xf32, #tpu.memory_space<vmem>>, vector<32x64xf32>
    %cst_116 = arith.constant dense<0.000000e+00> : vector<32x64xf32>
    %647 = tpu.matmul %645, %646, %cst_116 {dimension_numbers = #tpu.dot_dimension_numbers<[1], [0], [0], [1], [0, 0, 1, 1], [], []>} : vector<32x32xf32>, vector<32x64xf32>, vector<32x64xf32> -> vector<32x64xf32>
    %c13 = arith.constant 13 : index
    %c0_117 = arith.constant 0 : index
    %648 = vector.load %arg2[%c13, %c0_117] : memref<20x128xf32, #tpu.memory_space<vmem>>, vector<1x64xf32>
    %649 = vector.broadcast %648 : vector<1x64xf32> to vector<32x64xf32>
    %650 = arith.addf %647, %649 : vector<32x64xf32>
    %cst_118 = arith.constant 0.000000e+00 : f32
    %651 = vector.broadcast %cst_118 : f32 to vector<32x64xf32>
    %652 = arith.maximumf %650, %651 : vector<32x64xf32>
    %c272 = arith.constant 272 : index
    %c0_119 = arith.constant 0 : index
    %653 = vector.load %arg1[%c272, %c0_119] : memref<464x128xf32, #tpu.memory_space<vmem>>, vector<64x32xf32>
    %cst_120 = arith.constant dense<0.000000e+00> : vector<32x32xf32>
    %654 = tpu.matmul %652, %653, %cst_120 {dimension_numbers = #tpu.dot_dimension_numbers<[1], [0], [0], [1], [0, 0, 1, 1], [], []>} : vector<32x64xf32>, vector<64x32xf32>, vector<32x32xf32> -> vector<32x32xf32>
    %c14 = arith.constant 14 : index
    %c0_121 = arith.constant 0 : index
    %655 = vector.load %arg2[%c14, %c0_121] : memref<20x128xf32, #tpu.memory_space<vmem>>, vector<1x32xf32>
    %656 = vector.broadcast %655 : vector<1x32xf32> to vector<32x32xf32>
    %657 = arith.addf %654, %656 : vector<32x32xf32>
    %658 = arith.addf %645, %657 : vector<32x32xf32>
    %c15 = arith.constant 15 : index
    %c0_122 = arith.constant 0 : index
    %659 = vector.load %arg2[%c15, %c0_122] : memref<20x128xf32, #tpu.memory_space<vmem>>, vector<1x32xf32>
    %c16_123 = arith.constant 16 : index
    %c0_124 = arith.constant 0 : index
    %660 = vector.load %arg2[%c16_123, %c0_124] : memref<20x128xf32, #tpu.memory_space<vmem>>, vector<1x32xf32>
    %cst_125 = arith.constant dense<0.000000e+00> : vector<32xf32>
    %661 = vector.multi_reduction <add>, %658, %cst_125 [1] : vector<32x32xf32> to vector<32xf32>
    %662 = vector.shape_cast %661 : vector<32xf32> to vector<32x1xf32>
    %cst_126 = arith.constant 3.200000e+01 : f32
    %663 = vector.broadcast %cst_126 : f32 to vector<32x1xf32>
    %664 = arith.divf %662, %663 : vector<32x1xf32>
    %665 = vector.broadcast %664 : vector<32x1xf32> to vector<32x32xf32>
    %666 = arith.subf %658, %665 : vector<32x32xf32>
    %667 = arith.mulf %666, %666 : vector<32x32xf32>
    %cst_127 = arith.constant dense<0.000000e+00> : vector<32xf32>
    %668 = vector.multi_reduction <add>, %667, %cst_127 [1] : vector<32x32xf32> to vector<32xf32>
    %669 = vector.shape_cast %668 : vector<32xf32> to vector<32x1xf32>
    %cst_128 = arith.constant 3.200000e+01 : f32
    %670 = vector.broadcast %cst_128 : f32 to vector<32x1xf32>
    %671 = arith.divf %669, %670 : vector<32x1xf32>
    %672 = vector.broadcast %664 : vector<32x1xf32> to vector<32x32xf32>
    %673 = arith.subf %658, %672 : vector<32x32xf32>
    %cst_129 = arith.constant 9.99999974E-6 : f32
    %674 = vector.broadcast %cst_129 : f32 to vector<32x1xf32>
    %675 = arith.addf %671, %674 : vector<32x1xf32>
    %676 = math.rsqrt %675 : vector<32x1xf32>
    %677 = vector.broadcast %676 : vector<32x1xf32> to vector<32x32xf32>
    %678 = arith.mulf %673, %677 : vector<32x32xf32>
    %679 = vector.broadcast %659 : vector<1x32xf32> to vector<32x32xf32>
    %680 = arith.mulf %678, %679 : vector<32x32xf32>
    %681 = vector.broadcast %660 : vector<1x32xf32> to vector<32x32xf32>
    %682 = arith.addf %680, %681 : vector<32x32xf32>
    %c17 = arith.constant 17 : index
    %c0_130 = arith.constant 0 : index
    %683 = vector.load %arg2[%c17, %c0_130] : memref<20x128xf32, #tpu.memory_space<vmem>>, vector<1x32xf32>
    %c18 = arith.constant 18 : index
    %c0_131 = arith.constant 0 : index
    %684 = vector.load %arg2[%c18, %c0_131] : memref<20x128xf32, #tpu.memory_space<vmem>>, vector<1x32xf32>
    %cst_132 = arith.constant dense<0.000000e+00> : vector<32xf32>
    %685 = vector.multi_reduction <add>, %682, %cst_132 [1] : vector<32x32xf32> to vector<32xf32>
    %686 = vector.shape_cast %685 : vector<32xf32> to vector<32x1xf32>
    %cst_133 = arith.constant 3.200000e+01 : f32
    %687 = vector.broadcast %cst_133 : f32 to vector<32x1xf32>
    %688 = arith.divf %686, %687 : vector<32x1xf32>
    %689 = vector.broadcast %688 : vector<32x1xf32> to vector<32x32xf32>
    %690 = arith.subf %682, %689 : vector<32x32xf32>
    %691 = arith.mulf %690, %690 : vector<32x32xf32>
    %cst_134 = arith.constant dense<0.000000e+00> : vector<32xf32>
    %692 = vector.multi_reduction <add>, %691, %cst_134 [1] : vector<32x32xf32> to vector<32xf32>
    %693 = vector.shape_cast %692 : vector<32xf32> to vector<32x1xf32>
    %cst_135 = arith.constant 3.200000e+01 : f32
    %694 = vector.broadcast %cst_135 : f32 to vector<32x1xf32>
    %695 = arith.divf %693, %694 : vector<32x1xf32>
    %696 = vector.broadcast %688 : vector<32x1xf32> to vector<32x32xf32>
    %697 = arith.subf %682, %696 : vector<32x32xf32>
    %cst_136 = arith.constant 9.99999974E-6 : f32
    %698 = vector.broadcast %cst_136 : f32 to vector<32x1xf32>
    %699 = arith.addf %695, %698 : vector<32x1xf32>
    %700 = math.rsqrt %699 : vector<32x1xf32>
    %701 = vector.broadcast %700 : vector<32x1xf32> to vector<32x32xf32>
    %702 = arith.mulf %697, %701 : vector<32x32xf32>
    %703 = vector.broadcast %683 : vector<1x32xf32> to vector<32x32xf32>
    %704 = arith.mulf %702, %703 : vector<32x32xf32>
    %705 = vector.broadcast %684 : vector<1x32xf32> to vector<32x32xf32>
    %706 = arith.addf %704, %705 : vector<32x32xf32>
    %707 = vector.extract_strided_slice %706 {offsets = [0, 0], sizes = [8, 32], strides = [1, 1]} : vector<32x32xf32> to vector<8x32xf32>
    %c0_137 = arith.constant 0 : index
    %c0_138 = arith.constant 0 : index
    %708 = vector.load %arg5[%c0_137, %c0_138] : memref<8x128xf32, #tpu.memory_space<vmem>>, vector<8x32xf32>
    tpu.vector_store %arg5[%c0_137, %c0_138], %707 {strides = array<i32>} : memref<8x128xf32, #tpu.memory_space<vmem>>, vector<8x32xf32>,
    %709 = vector.extract_strided_slice %706 {offsets = [8, 0], sizes = [8, 32], strides = [1, 1]} : vector<32x32xf32> to vector<8x32xf32>
    %c0_139 = arith.constant 0 : index
    %c32 = arith.constant 32 : index
    %710 = vector.load %arg5[%c0_139, %c32] : memref<8x128xf32, #tpu.memory_space<vmem>>, vector<8x32xf32>
    tpu.vector_store %arg5[%c0_139, %c32], %709 {strides = array<i32>} : memref<8x128xf32, #tpu.memory_space<vmem>>, vector<8x32xf32>,
    %711 = vector.extract_strided_slice %706 {offsets = [16, 0], sizes = [8, 32], strides = [1, 1]} : vector<32x32xf32> to vector<8x32xf32>
    %c0_140 = arith.constant 0 : index
    %c64 = arith.constant 64 : index
    %712 = vector.load %arg5[%c0_140, %c64] : memref<8x128xf32, #tpu.memory_space<vmem>>, vector<8x32xf32>
    tpu.vector_store %arg5[%c0_140, %c64], %711 {strides = array<i32>} : memref<8x128xf32, #tpu.memory_space<vmem>>, vector<8x32xf32>,
    %713 = vector.extract_strided_slice %706 {offsets = [24, 0], sizes = [8, 32], strides = [1, 1]} : vector<32x32xf32> to vector<8x32xf32>
    %c0_141 = arith.constant 0 : index
    %c96 = arith.constant 96 : index
    %714 = vector.load %arg5[%c0_141, %c96] : memref<8x128xf32, #tpu.memory_space<vmem>>, vector<8x32xf32>
    tpu.vector_store %arg5[%c0_141, %c96], %713 {strides = array<i32>} : memref<8x128xf32, #tpu.memory_space<vmem>>, vector<8x32xf32>,
    %c0_142 = arith.constant 0 : index
    %c0_143 = arith.constant 0 : index
    %715 = vector.load %arg5[%c0_142, %c0_143] : memref<8x128xf32, #tpu.memory_space<vmem>>, vector<8x128xf32>
    %c336 = arith.constant 336 : index
    %c0_144 = arith.constant 0 : index
    %716 = vector.load %arg1[%c336, %c0_144] : memref<464x128xf32, #tpu.memory_space<vmem>>, vector<128x8xf32>
    %cst_145 = arith.constant dense<0.000000e+00> : vector<8x8xf32>
    %717 = tpu.matmul %715, %716, %cst_145 {dimension_numbers = #tpu.dot_dimension_numbers<[1], [0], [0], [1], [0, 0, 1, 1], [], []>} : vector<8x128xf32>, vector<128x8xf32>, vector<8x8xf32> -> vector<8x8xf32>
    %c19 = arith.constant 19 : index
    %c0_146 = arith.constant 0 : index
    %718 = vector.load %arg2[%c19, %c0_146] : memref<20x128xf32, #tpu.memory_space<vmem>>, vector<1x8xf32>
    %719 = vector.broadcast %718 : vector<1x8xf32> to vector<8x8xf32>
    %720 = arith.addf %717, %719 : vector<8x8xf32>
    %721 = vector.broadcast %14 : vector<8x1xf32> to vector<8x8xf32>
    %722 = arith.mulf %720, %721 : vector<8x8xf32>
    %723 = vector.broadcast %4 : vector<8x1xf32> to vector<8x8xf32>
    %724 = arith.addf %722, %723 : vector<8x8xf32>
    %c0_147 = arith.constant 0 : index
    %c0_148 = arith.constant 0 : index
    %725 = vector.load %arg3[%c0_147, %c0_148] : memref<8x8xf32, #tpu.memory_space<vmem>>, vector<8x8xf32>
    tpu.vector_store %arg3[%c0_147, %c0_148], %724 {strides = array<i32>} : memref<8x8xf32, #tpu.memory_space<vmem>>, vector<8x8xf32>,
    return
  }
}

</mosaic_0001>

<llo_original>
// kernel: pallas_forward.1
$region0: #{pallas_forward.1}
  #allocation0 [shape = 'u32[]', space=smem, size = 0x4, offset = 0x4, fixed_abs, tag = 'smem constant byte address 0x4 - core index']
  #allocation1 [shape = 'u32[144,128]{1,0:T(1,128)}', space=vmem, size = 0x12000, scoped, tag = 'internal scratch']
  #allocation2 [shape = 'f32[32,32]{1,0:T(8,128)}', space=vmem, size = 0x4000, scoped, tag = 'scratch operand']
  #allocation3 [shape = 'f32[8,128]{1,0:T(8,128)}', space=vmem, size = 0x1000, scoped, tag = 'scratch operand']
  %s0 = inlined_call_operand.hbm [shape: f32[8,16], index: 0, kind: input, shape index: {}]
  %s1 = inlined_call_operand.hbm [shape: f32[464,128], index: 1, kind: input, shape index: {}]
  %s2 = inlined_call_operand.hbm [shape: f32[20,128], index: 2, kind: input, shape index: {}]
  %s3 = inlined_call_operand.hbm [shape: f32[8,8], index: 3, kind: output, shape index: {}]
  %s4 = sld [smem:[#allocation0]]
  $region34: #{pallas_forward.1} parent=0
    _
  %s6 = ssub.s32 1, %s4
  %s7 = scalar_select 0, %s6, %s4
  $region1: #{pallas_forward.1} parent=0
    #allocation4 [shape = 'u8[4096]{0}', space=vmem, size = 0x1000, scoped, tag = 'input window, operand 0, single buffered']
    #allocation5 [shape = 's32[1]{0}', space=sflag, size = 0x4, scoped, tag = 'scoped memory for pallas_forward.1']
    #allocation6 [shape = 's32[1]{0}', space=sflag, size = 0x4, scoped, tag = 'scoped memory for pallas_forward.1']
    #allocation7 [shape = 'u8[237568]{0}', space=vmem, size = 0x3a000, scoped, tag = 'input window, operand 1, single buffered']
    #allocation8 [shape = 's32[1]{0}', space=sflag, size = 0x4, scoped, tag = 'scoped memory for pallas_forward.1']
    #allocation9 [shape = 'u8[12288]{0}', space=vmem, size = 0x3000, scoped, tag = 'input window, operand 2, single buffered']
    #allocation10 [shape = 'u8[4096]{0}', space=vmem, size = 0x1000, scoped, tag = 'output window, operand 0, single buffered']
    %8 = vsyncpa [#allocation5], 0
    %9 = vsyncpa [#allocation8], 0
    %10 = vsyncpa [#allocation6], 0
    // Predicated region
    $region2: #{pallas_forward.1} parent=1 // pred_check
      _
    $region3: #{pallas_forward.1} parent=1 // pred_check_branch
      %12 = sbr.rel (0) target = $region5
    $region4: #{pallas_forward.1} parent=1 // pred_region
      %s14 = ssub.s32 128, 128
      %15 = vsyncadd [#allocation5], %s14
      %s17 = sshll.u32 [#allocation4], 4
      %s18 = int_to_ptr.vmem [resolvable:$true] %s17
      %20 = dma.hbm_to_vmem [thread:$0]  %s0, 128, %s18, [#allocation5]
    $region5: #{pallas_forward.1} parent=1 // pred_fallthru
      _
    // Predicated region
    $region6: #{pallas_forward.1} parent=1 // pred_check
      _
    $region7: #{pallas_forward.1} parent=1 // pred_check_branch
      %22 = sbr.rel (0) target = $region9
    $region8: #{pallas_forward.1} parent=1 // pred_region
      %s24 = ssub.s32 7424, 7424
      %25 = vsyncadd [#allocation8], %s24
      %s26 = sshll.u32 [#allocation7], 4
      %s27 = int_to_ptr.vmem [resolvable:$true] %s26
      %32 = dma.hbm_to_vmem [thread:$0]  %s1, 7424, %s27, [#allocation8], 128, 128, 8
    $region9: #{pallas_forward.1} parent=1 // pred_fallthru
      _
    // Predicated region
    $region10: #{pallas_forward.1} parent=1 // pred_check
      _
    $region11: #{pallas_forward.1} parent=1 // pred_check_branch
      %34 = sbr.rel (0) target = $region13
    $region12: #{pallas_forward.1} parent=1 // pred_region
      %s36 = ssub.s32 384, 384
      %37 = vsyncadd [#allocation8], %s36
      %s38 = sshll.u32 [#allocation9], 4
      %s39 = int_to_ptr.vmem [resolvable:$true] %s38
      %44 = dma.hbm_to_vmem [thread:$0]  %s2, 384, %s39, [#allocation8], 128, 128, 8
    $region13: #{pallas_forward.1} parent=1 // pred_fallthru
      _
    // Predicated region
    $region14: #{pallas_forward.1} parent=1 // pred_check
      _
    $region15: #{pallas_forward.1} parent=1 // pred_check_branch
      %46 = sbr.rel (0) target = $region17
    $region16: #{pallas_forward.1} parent=1 // pred_region
      %47 = dma.done [#allocation5], 128
    $region17: #{pallas_forward.1} parent=1 // pred_fallthru
      _
    // Predicated region
    $region18: #{pallas_forward.1} parent=1 // pred_check
      _
    $region19: #{pallas_forward.1} parent=1 // pred_check_branch
      %49 = sbr.rel (0) target = $region21
    $region20: #{pallas_forward.1} parent=1 // pred_region
      %50 = dma.done [#allocation8], 7424
    $region21: #{pallas_forward.1} parent=1 // pred_fallthru
      _
    // Predicated region
    $region22: #{pallas_forward.1} parent=1 // pred_check
      _
    $region23: #{pallas_forward.1} parent=1 // pred_check_branch
      %52 = sbr.rel (0) target = $region25
    $region24: #{pallas_forward.1} parent=1 // pred_region
      %53 = dma.done [#allocation8], 384
    $region25: #{pallas_forward.1} parent=1 // pred_fallthru
      _
    %v54 = vld [vmem:[#allocation4] sm:$0xff]
    %vm55 = vcmask 130048
    %v56 = vsel %vm55, %v54, 0.0
    %57 = vadd.xlane.f32.xlu0 %v56
    %v58 = vpop.xlane.xlu0 %57
    %v59 = vrcp.pop 16.0
    %v60 = vmul.f32 %v58, %v59
    %v61 = vsub.f32 %v54, %v60
    %v62 = vmul.f32 %v61, %v61
    %v63 = vsel %vm55, %v62, 0.0
    %64 = vadd.xlane.f32.xlu0 %v63
    %v65 = vpop.xlane.xlu0 %64
    %v66 = vmul.f32 %v65, %v59
    %v67 = vadd.f32 %v66, 1e-05
    %v68 = vrsqrt.pop %v67
    %v69 = vmul.f32 %v67, %v68
    %vm70 = vcmp.eq.f32.partialorder %v67, inf
    %v71 = vsel %vm70, %v67, %v69
    %vm72 = vcmp.eq.f32.partialorder %v67, 0.0
    %v73 = vand.u32 %v67, 2147483648
    %v74 = vsel %vm72, %v73, %v71
    %v75 = vrcp.pop %v74
    %v76 = vmul.f32 %v61, %v75
    %v77 = vld [vmem:[#allocation7] sm:$0xff]
    %v78 = vld [vmem:[#allocation7 + $0x8] sm:$0xff]
    %v79 = vld [vmem:[#allocation9] sm:$0x1]
    %v80 = vlaneseq
    %v81 = vshrl.u32 %v80, 7
    %v82 = vsub.s32 0, %v81
    %v83 = vrot.slane %v79, %v82
    %v85 = vsel %vm55, %v76, 0
    %87 = vmatprep.subr.mxu0 0.0
    %88 = vmatpush1.msra.mxu0 %v77
    %89 = vmatprep.subr.mxu0 0.0
    %90 = vmatpush1.msra.mxu0 %v78
    %91 = vmatprep.subr.mxu0 0.0
    %92 = vmatpush1.msra.mxu0 0.0
    %93 = vmatprep.subr.mxu0 0.0
    %94 = vmatpush1.msra.mxu0 0.0
    %95 = vmatprep.subr.mxu0 0.0
    %96 = vmatpush1.msra.mxu0 0.0
    %97 = vmatprep.subr.mxu0 0.0
    %98 = vmatpush1.msra.mxu0 0.0
    %99 = vmatprep.subr.mxu0 0.0
    %100 = vmatpush1.msra.mxu0 0.0
    %101 = vmatprep.subr.mxu0 0.0
    %102 = vmatpush1.msra.mxu0 0.0
    %103 = vmatprep.subr.mxu0 0.0
    %104 = vmatpush1.msra.mxu0 0.0
    %105 = vmatprep.subr.mxu0 0.0
    %106 = vmatpush1.msra.mxu0 0.0
    %107 = vmatprep.subr.mxu0 0.0
    %108 = vmatpush1.msra.mxu0 0.0
    %109 = vmatprep.subr.mxu0 0.0
    %110 = vmatpush1.msra.mxu0 0.0
    %111 = vmatprep.subr.mxu0 0.0
    %112 = vmatpush1.msra.mxu0 0.0
    %113 = vmatprep.subr.mxu0 0.0
    %114 = vmatpush1.msra.mxu0 0.0
    %115 = vmatprep.subr.mxu0 0.0
    %116 = vmatpush1.msra.mxu0 0.0
    %117 = vmatprep.subr.mxu0 0.0
    %118 = vmatpush1.msra.mxu0 0.0
    %119 = vmatprep.subr.mxu0 0.0
    %120 = vmatpush1.msra.mxu0 0.0
    %121 = vmatprep.subr.mxu0 0.0
    %122 = vmatpush1.msra.mxu0 0.0
    %123 = vmatprep.subr.mxu0 0.0
    %124 = vmatpush1.msra.mxu0 0.0
    %125 = vmatprep.subr.mxu0 0.0
    %126 = vmatpush1.msra.mxu0 0.0
    %127 = vmatprep.subr.mxu0 0.0
    %128 = vmatpush1.msra.mxu0 0.0
    %129 = vmatprep.subr.mxu0 0.0
    %130 = vmatpush1.msra.mxu0 0.0
    %131 = vmatprep.subr.mxu0 0.0
    %132 = vmatpush1.msra.mxu0 0.0
    %133 = vmatprep.subr.mxu0 0.0
    %134 = vmatpush1.msra.mxu0 0.0
    %135 = vmatprep.subr.mxu0 0.0
    %136 = vmatpush1.msra.mxu0 0.0
    %137 = vmatprep.subr.mxu0 0.0
    %138 = vmatpush1.msra.mxu0 0.0
    %139 = vmatprep.subr.mxu0 0.0
    %140 = vmatpush1.msra.mxu0 0.0
    %141 = vmatprep.subr.mxu0 0.0
    %142 = vmatpush1.msra.mxu0 0.0
    %143 = vmatprep.subr.mxu0 0.0
    %144 = vmatpush1.msra.mxu0 0.0
    %145 = vmatprep.subr.mxu0 0.0
    %146 = vmatpush1.msra.mxu0 0.0
    %147 = vmatprep.subr.mxu0 0.0
    %148 = vmatpush1.msra.mxu0 0.0
    %149 = vmatprep.subr.mxu0 0.0
    %150 = vmatpush1.msra.mxu0 0.0
    %151 = vmatprep.mubr.f32.mxu0 0.0
    %152 = vmatmul.mubr.f32.gmra.mrb[0].mxu0 %v85
    %v153 = vpop.f32.mrb[0].mxu0
    %v154 = vadd.f32 %v83, %v153
    %v155 = vpop.f32.mrb[0].mxu0
    %156 = vdwg.mxu0
    %vm157 = vcmask 261120
    %158 = vst.msk [vmem:[#allocation2] sm:$0xff] %vm157, %v154
    %160 = vrot.lane.b32.xlu0 %v154, 96
    %v161 = vpop.permute.xlu0 %160
    %163 = vst.msk [vmem:[#allocation2 + $0x8] sm:$0xff] %vm157, %v161
    %164 = vrot.lane.b32.xlu0 %v154, 64
    %v165 = vpop.permute.xlu0 %164
    %167 = vst.msk [vmem:[#allocation2 + $0x10] sm:$0xff] %vm157, %v165
    %168 = vrot.lane.b32.xlu0 %v154, 32
    %v169 = vpop.permute.xlu0 %168
    %171 = vst.msk [vmem:[#allocation2 + $0x18] sm:$0xff] %vm157, %v169
    %v172 = vld [vmem:[#allocation2] sm:$0xff]
    %v173 = vld [vmem:[#allocation2 + $0x8] sm:$0xff]
    %v174 = vld [vmem:[#allocation2 + $0x10] sm:$0xff]
    %v175 = vld [vmem:[#allocation2 + $0x18] sm:$0xff]
    %v176 = vld [vmem:[#allocation7 + $0x10] sm:$0xff]
    %v177 = vld [vmem:[#allocation7 + $0x18] sm:$0xff]
    %v178 = vld [vmem:[#allocation7 + $0x20] sm:$0xff]
    %v179 = vld [vmem:[#allocation7 + $0x28] sm:$0xff]
    %v180 = vld [vmem:[#allocation9 + $0x1] sm:$0x1]
    %v181 = vlaneseq
    %v182 = vshrl.u32 %v181, 7
    %v183 = vsub.s32 0, %v182
    %v184 = vrot.slane %v180, %v183
    %v186 = vsel %vm157, %v172, 0
    %v189 = vsel %vm157, %v173, 0
    %v192 = vsel %vm157, %v174, 0
    %v195 = vsel %vm157, %v175, 0
    %197 = vmatprep.subr.mxu0 0.0
    %198 = vmatpush1.msra.mxu0 %v176
    %199 = vmatprep.subr.mxu0 0.0
    %200 = vmatpush1.msra.mxu0 %v177
    %201 = vmatprep.subr.mxu0 0.0
    %202 = vmatpush1.msra.mxu0 %v178
    %203 = vmatprep.subr.mxu0 0.0
    %204 = vmatpush1.msra.mxu0 %v179
    %205 = vmatprep.subr.mxu0 0.0
    %206 = vmatpush1.msra.mxu0 0.0
    %207 = vmatprep.subr.mxu0 0.0
    %208 = vmatpush1.msra.mxu0 0.0
    %209 = vmatprep.subr.mxu0 0.0
    %210 = vmatpush1.msra.mxu0 0.0
    %211 = vmatprep.subr.mxu0 0.0
    %212 = vmatpush1.msra.mxu0 0.0
    %213 = vmatprep.subr.mxu0 0.0
    %214 = vmatpush1.msra.mxu0 0.0
    %215 = vmatprep.subr.mxu0 0.0
    %216 = vmatpush1.msra.mxu0 0.0
    %217 = vmatprep.subr.mxu0 0.0
    %218 = vmatpush1.msra.mxu0 0.0
    %219 = vmatprep.subr.mxu0 0.0
    %220 = vmatpush1.msra.mxu0 0.0
    %221 = vmatprep.subr.mxu0 0.0
    %222 = vmatpush1.msra.mxu0 0.0
    %223 = vmatprep.subr.mxu0 0.0
    %224 = vmatpush1.msra.mxu0 0.0
    %225 = vmatprep.subr.mxu0 0.0
    %226 = vmatpush1.msra.mxu0 0.0
    %227 = vmatprep.subr.mxu0 0.0
    %228 = vmatpush1.msra.mxu0 0.0
    %229 = vmatprep.subr.mxu0 0.0
    %230 = vmatpush1.msra.mxu0 0.0
    %231 = vmatprep.subr.mxu0 0.0
    %232 = vmatpush1.msra.mxu0 0.0
    %233 = vmatprep.subr.mxu0 0.0
    %234 = vmatpush1.msra.mxu0 0.0
    %235 = vmatprep.subr.mxu0 0.0
    %236 = vmatpush1.msra.mxu0 0.0
    %237 = vmatprep.subr.mxu0 0.0
    %238 = vmatpush1.msra.mxu0 0.0
    %239 = vmatprep.subr.mxu0 0.0
    %240 = vmatpush1.msra.mxu0 0.0
    %241 = vmatprep.subr.mxu0 0.0
    %242 = vmatpush1.msra.mxu0 0.0
    %243 = vmatprep.subr.mxu0 0.0
    %244 = vmatpush1.msra.mxu0 0.0
    %245 = vmatprep.subr.mxu0 0.0
    %246 = vmatpush1.msra.mxu0 0.0
    %247 = vmatprep.subr.mxu0 0.0
    %248 = vmatpush1.msra.mxu0 0.0
    %249 = vmatprep.subr.mxu0 0.0
    %250 = vmatpush1.msra.mxu0 0.0
    %251 = vmatprep.subr.mxu0 0.0
    %252 = vmatpush1.msra.mxu0 0.0
    %253 = vmatprep.subr.mxu0 0.0
    %254 = vmatpush1.msra.mxu0 0.0
    %255 = vmatprep.subr.mxu0 0.0
    %256 = vmatpush1.msra.mxu0 0.0
    %257 = vmatprep.subr.mxu0 0.0
    %258 = vmatpush1.msra.mxu0 0.0
    %259 = vmatprep.subr.mxu0 0.0
    %260 = vmatpush1.msra.mxu0 0.0
    %261 = vmatprep.mubr.f32.mxu0 0.0
    %262 = vmatmul.mubr.f32.gmra.mrb[0].mxu0 %v186
    %v263 = vpop.f32.mrb[0].mxu0
    %v264 = vadd.f32 %v184, %v263
    %v265 = vpop.f32.mrb[0].mxu0
    %266 = vmatprep.mubr.f32.mxu0 0.0
    %267 = vmatmul.mubr.f32.gmra.mrb[0].mxu0 %v189
    %v268 = vpop.f32.mrb[0].mxu0
    %v269 = vadd.f32 %v184, %v268
    %v270 = vpop.f32.mrb[0].mxu0
    %271 = vmatprep.mubr.f32.mxu0 0.0
    %272 = vmatmul.mubr.f32.gmra.mrb[0].mxu0 %v192
    %v273 = vpop.f32.mrb[0].mxu0
    %v274 = vadd.f32 %v184, %v273
    %v275 = vpop.f32.mrb[0].mxu0
    %276 = vmatprep.mubr.f32.mxu0 0.0
    %277 = vmatmul.mubr.f32.gmra.mrb[0].mxu0 %v195
    %v278 = vpop.f32.mrb[0].mxu0
    %v279 = vadd.f32 %v184, %v278
    %v280 = vpop.f32.mrb[0].mxu0
    %281 = vdwg.mxu0
    %v282 = vmul.f32 %v264, 0.35355338
    %v283 = vmul.f32 %v269, 0.35355338
    %v284 = vmul.f32 %v274, 0.35355338
    %v285 = vmul.f32 %v279, 0.35355338
    %287 = vrot.lane.b32.xlu0 %v264, 96
    %v288 = vpop.permute.xlu0 %287
    %v290 = vmul.f32 %v282, %v288
    %v291 = vmul.f32 %v283, %v288
    %v292 = vmul.f32 %v284, %v288
    %v293 = vmul.f32 %v285, %v288
    %vm294 = vcmask 64512
    %v295 = vsel %vm294, %v290, 0.0
    %296 = vadd.xlane.f32.xlu0 %v295
    %v297 = vpop.xlane.xlu0 %296
    %v298 = vsel %vm294, %v291, 0.0
    %299 = vadd.xlane.f32.xlu0 %v298
    %v300 = vpop.xlane.xlu0 %299
    %v301 = vsel %vm294, %v292, 0.0
    %302 = vadd.xlane.f32.xlu0 %v301
    %v303 = vpop.xlane.xlu0 %302
    %v304 = vsel %vm294, %v293, 0.0
    %305 = vadd.xlane.f32.xlu0 %v304
    %v306 = vpop.xlane.xlu0 %305
    %308 = vrot.lane.b32.xlu0 %v269, 96
    %v309 = vpop.permute.xlu0 %308
    %v311 = vmul.f32 %v282, %v309
    %v312 = vmul.f32 %v283, %v309
    %v313 = vmul.f32 %v284, %v309
    %v314 = vmul.f32 %v285, %v309
    %v315 = vsel %vm294, %v311, 0.0
    %316 = vadd.xlane.f32.xlu0 %v315
    %v317 = vpop.xlane.xlu0 %316
    %v318 = vsel %vm294, %v312, 0.0
    %319 = vadd.xlane.f32.xlu0 %v318
    %v320 = vpop.xlane.xlu0 %319
    %v321 = vsel %vm294, %v313, 0.0
    %322 = vadd.xlane.f32.xlu0 %v321
    %v323 = vpop.xlane.xlu0 %322
    %v324 = vsel %vm294, %v314, 0.0
    %325 = vadd.xlane.f32.xlu0 %v324
    %v326 = vpop.xlane.xlu0 %325
    %328 = vrot.lane.b32.xlu0 %v274, 96
    %v329 = vpop.permute.xlu0 %328
    %v331 = vmul.f32 %v282, %v329
    %v332 = vmul.f32 %v283, %v329
    %v333 = vmul.f32 %v284, %v329
    %v334 = vmul.f32 %v285, %v329
    %v335 = vsel %vm294, %v331, 0.0
    %336 = vadd.xlane.f32.xlu0 %v335
    %v337 = vpop.xlane.xlu0 %336
    %v338 = vsel %vm294, %v332, 0.0
    %339 = vadd.xlane.f32.xlu0 %v338
    %v340 = vpop.xlane.xlu0 %339
    %v341 = vsel %vm294, %v333, 0.0
    %342 = vadd.xlane.f32.xlu0 %v341
    %v343 = vpop.xlane.xlu0 %342
    %v344 = vsel %vm294, %v334, 0.0
    %345 = vadd.xlane.f32.xlu0 %v344
    %v346 = vpop.xlane.xlu0 %345
    %348 = vrot.lane.b32.xlu0 %v279, 96
    %v349 = vpop.permute.xlu0 %348
    %v351 = vmul.f32 %v282, %v349
    %v352 = vmul.f32 %v283, %v349
    %v353 = vmul.f32 %v284, %v349
    %v354 = vmul.f32 %v285, %v349
    %v355 = vsel %vm294, %v351, 0.0
    %356 = vadd.xlane.f32.xlu0 %v355
    %v357 = vpop.xlane.xlu0 %356
    %v358 = vsel %vm294, %v352, 0.0
    %359 = vadd.xlane.f32.xlu0 %v358
    %v360 = vpop.xlane.xlu0 %359
    %v361 = vsel %vm294, %v353, 0.0
    %362 = vadd.xlane.f32.xlu0 %v361
    %v363 = vpop.xlane.xlu0 %362
    %v364 = vsel %vm294, %v354, 0.0
    %365 = vadd.xlane.f32.xlu0 %v364
    %v366 = vpop.xlane.xlu0 %365
    %vm367 = vcmask 7168
    %v368 = vsel %vm367, %v297, %v317
    %v369 = vsel %vm367, %v300, %v320
    %v370 = vsel %vm367, %v303, %v323
    %v371 = vsel %vm367, %v306, %v326
    %vm372 = vcmask 15360
    %v373 = vsel %vm372, %v368, %v337
    %v374 = vsel %vm372, %v369, %v340
    %v375 = vsel %vm372, %v370, %v343
    %v376 = vsel %vm372, %v371, %v346
    %vm377 = vcmask 23552
    %v378 = vsel %vm377, %v373, %v357
    %v379 = vsel %vm377, %v374, %v360
    %v380 = vsel %vm377, %v375, %v363
    %v381 = vsel %vm377, %v376, %v366
    %vm382 = vcmask 31744
    %v383 = vsel %vm382, %v378, -inf
    %384 = vmax.xlane.f32.xlu0 %v383
    %v385 = vpop.xlane.xlu0 %384
    %v386 = vsel %vm382, %v379, -inf
    %387 = vmax.xlane.f32.xlu0 %v386
    %v388 = vpop.xlane.xlu0 %387
    %v389 = vsel %vm382, %v380, -inf
    %390 = vmax.xlane.f32.xlu0 %v389
    %v391 = vpop.xlane.xlu0 %390
    %v392 = vsel %vm382, %v381, -inf
    %393 = vmax.xlane.f32.xlu0 %v392
    %v394 = vpop.xlane.xlu0 %393
    %v395 = vsub.f32 %v378, %v385
    %v396 = vsub.f32 %v379, %v388
    %v397 = vsub.f32 %v380, %v391
    %v398 = vsub.f32 %v381, %v394
    %v399 = vmul.f32 %v395, 1.442695
    %v400 = vpow.pop %v399
    %v401 = vmul.f32 %v396, 1.442695
    %v402 = vpow.pop %v401
    %v403 = vmul.f32 %v397, 1.442695
    %v404 = vpow.pop %v403
    %v405 = vmul.f32 %v398, 1.442695
    %v406 = vpow.pop %v405
    %v407 = vsel %vm382, %v400, 0.0
    %408 = vadd.xlane.f32.xlu0 %v407
    %v409 = vpop.xlane.xlu0 %408
    %v410 = vsel %vm382, %v402, 0.0
    %411 = vadd.xlane.f32.xlu0 %v410
    %v412 = vpop.xlane.xlu0 %411
    %v413 = vsel %vm382, %v404, 0.0
    %414 = vadd.xlane.f32.xlu0 %v413
    %v415 = vpop.xlane.xlu0 %414
    %v416 = vsel %vm382, %v406, 0.0
    %417 = vadd.xlane.f32.xlu0 %v416
    %v418 = vpop.xlane.xlu0 %417
    %v419 = vrcp.pop %v409
    %v420 = vrcp.pop %v412
    %v421 = vrcp.pop %v415
    %v422 = vrcp.pop %v418
    %v423 = vmul.f32 %v400, %v419
    %v424 = vmul.f32 %v402, %v420
    %v425 = vmul.f32 %v404, %v421
    %v426 = vmul.f32 %v406, %v422
    %428 = vset.pattern.permute.xlu0 0
    %429 = vperm.xlu0 %428, %v423
    %v430 = vpop.permute.xlu0 %429
    %433 = vset.pattern.permute.xlu0 0
    %434 = vperm.xlu0 %433, %v424
    %v435 = vpop.permute.xlu0 %434
    %438 = vset.pattern.permute.xlu0 0
    %439 = vperm.xlu0 %438, %v425
    %v440 = vpop.permute.xlu0 %439
    %443 = vset.pattern.permute.xlu0 0
    %444 = vperm.xlu0 %443, %v426
    %v445 = vpop.permute.xlu0 %444
    %v447 = vmul.f32 %v430, %v264
    %v448 = vmul.f32 %v435, %v264
    %v449 = vmul.f32 %v440, %v264
    %v450 = vmul.f32 %v445, %v264
    %451 = vset.pattern.permute.xlu0 1
    %452 = vperm.xlu0 %451, %v423
    %v453 = vpop.permute.xlu0 %452
    %455 = vset.pattern.permute.xlu0 1
    %456 = vperm.xlu0 %455, %v424
    %v457 = vpop.permute.xlu0 %456
    %459 = vset.pattern.permute.xlu0 1
    %460 = vperm.xlu0 %459, %v425
    %v461 = vpop.permute.xlu0 %460
    %463 = vset.pattern.permute.xlu0 1
    %464 = vperm.xlu0 %463, %v426
    %v465 = vpop.permute.xlu0 %464
    %v467 = vmul.f32 %v453, %v269
    %v468 = vmul.f32 %v457, %v269
    %v469 = vmul.f32 %v461, %v269
    %v470 = vmul.f32 %v465, %v269
    %v471 = vadd.f32 %v447, %v467
    %v472 = vadd.f32 %v448, %v468
    %v473 = vadd.f32 %v449, %v469
    %v474 = vadd.f32 %v450, %v470
    %475 = vset.pattern.permute.xlu0 2
    %476 = vperm.xlu0 %475, %v423
    %v477 = vpop.permute.xlu0 %476
    %479 = vset.pattern.permute.xlu0 2
    %480 = vperm.xlu0 %479, %v424
    %v481 = vpop.permute.xlu0 %480
    %483 = vset.pattern.permute.xlu0 2
    %484 = vperm.xlu0 %483, %v425
    %v485 = vpop.permute.xlu0 %484
    %487 = vset.pattern.permute.xlu0 2
    %488 = vperm.xlu0 %487, %v426
    %v489 = vpop.permute.xlu0 %488
    %v491 = vmul.f32 %v477, %v274
    %v492 = vmul.f32 %v481, %v274
    %v493 = vmul.f32 %v485, %v274
    %v494 = vmul.f32 %v489, %v274
    %v495 = vadd.f32 %v471, %v491
    %v496 = vadd.f32 %v472, %v492
    %v497 = vadd.f32 %v473, %v493
    %v498 = vadd.f32 %v474, %v494
    %499 = vset.pattern.permute.xlu0 3
    %500 = vperm.xlu0 %499, %v423
    %v501 = vpop.permute.xlu0 %500
    %503 = vset.pattern.permute.xlu0 3
    %504 = vperm.xlu0 %503, %v424
    %v505 = vpop.permute.xlu0 %504
    %507 = vset.pattern.permute.xlu0 3
    %508 = vperm.xlu0 %507, %v425
    %v509 = vpop.permute.xlu0 %508
    %511 = vset.pattern.permute.xlu0 3
    %512 = vperm.xlu0 %511, %v426
    %v513 = vpop.permute.xlu0 %512
    %v515 = vmul.f32 %v501, %v279
    %v516 = vmul.f32 %v505, %v279
    %v517 = vmul.f32 %v509, %v279
    %v518 = vmul.f32 %v513, %v279
    %v519 = vadd.f32 %v495, %v515
    %v520 = vadd.f32 %v496, %v516
    %v521 = vadd.f32 %v497, %v517
    %v522 = vadd.f32 %v498, %v518
    %527 = vrot.lane.b32.xlu0 %v290, 120
    %v528 = vpop.permute.xlu0 %527
    %529 = vrot.lane.b32.xlu0 %v291, 120
    %v530 = vpop.permute.xlu0 %529
    %531 = vrot.lane.b32.xlu0 %v292, 120
    %v532 = vpop.permute.xlu0 %531
    %533 = vrot.lane.b32.xlu0 %v293, 120
    %v534 = vpop.permute.xlu0 %533
    %v539 = vsel %vm294, %v528, 0.0
    %540 = vadd.xlane.f32.xlu0 %v539
    %v541 = vpop.xlane.xlu0 %540
    %v542 = vsel %vm294, %v530, 0.0
    %543 = vadd.xlane.f32.xlu0 %v542
    %v544 = vpop.xlane.xlu0 %543
    %v545 = vsel %vm294, %v532, 0.0
    %546 = vadd.xlane.f32.xlu0 %v545
    %v547 = vpop.xlane.xlu0 %546
    %v548 = vsel %vm294, %v534, 0.0
    %549 = vadd.xlane.f32.xlu0 %v548
    %v550 = vpop.xlane.xlu0 %549
    %555 = vrot.lane.b32.xlu0 %v311, 120
    %v556 = vpop.permute.xlu0 %555
    %557 = vrot.lane.b32.xlu0 %v312, 120
    %v558 = vpop.permute.xlu0 %557
    %559 = vrot.lane.b32.xlu0 %v313, 120
    %v560 = vpop.permute.xlu0 %559
    %561 = vrot.lane.b32.xlu0 %v314, 120
    %v562 = vpop.permute.xlu0 %561
    %v567 = vsel %vm294, %v556, 0.0
    %568 = vadd.xlane.f32.xlu0 %v567
    %v569 = vpop.xlane.xlu0 %568
    %v570 = vsel %vm294, %v558, 0.0
    %571 = vadd.xlane.f32.xlu0 %v570
    %v572 = vpop.xlane.xlu0 %571
    %v573 = vsel %vm294, %v560, 0.0
    %574 = vadd.xlane.f32.xlu0 %v573
    %v575 = vpop.xlane.xlu0 %574
    %v576 = vsel %vm294, %v562, 0.0
    %577 = vadd.xlane.f32.xlu0 %v576
    %v578 = vpop.xlane.xlu0 %577
    %583 = vrot.lane.b32.xlu0 %v331, 120
    %v584 = vpop.permute.xlu0 %583
    %585 = vrot.lane.b32.xlu0 %v332, 120
    %v586 = vpop.permute.xlu0 %585
    %587 = vrot.lane.b32.xlu0 %v333, 120
    %v588 = vpop.permute.xlu0 %587
    %589 = vrot.lane.b32.xlu0 %v334, 120
    %v590 = vpop.permute.xlu0 %589
    %v595 = vsel %vm294, %v584, 0.0
    %596 = vadd.xlane.f32.xlu0 %v595
    %v597 = vpop.xlane.xlu0 %596
    %v598 = vsel %vm294, %v586, 0.0
    %599 = vadd.xlane.f32.xlu0 %v598
    %v600 = vpop.xlane.xlu0 %599
    %v601 = vsel %vm294, %v588, 0.0
    %602 = vadd.xlane.f32.xlu0 %v601
    %v603 = vpop.xlane.xlu0 %602
    %v604 = vsel %vm294, %v590, 0.0
    %605 = vadd.xlane.f32.xlu0 %v604
    %v606 = vpop.xlane.xlu0 %605
    %611 = vrot.lane.b32.xlu0 %v351, 120
    %v612 = vpop.permute.xlu0 %611
    %613 = vrot.lane.b32.xlu0 %v352, 120
    %v614 = vpop.permute.xlu0 %613
    %615 = vrot.lane.b32.xlu0 %v353, 120
    %v616 = vpop.permute.xlu0 %615
    %617 = vrot.lane.b32.xlu0 %v354, 120
    %v618 = vpop.permute.xlu0 %617
    %v623 = vsel %vm294, %v612, 0.0
    %624 = vadd.xlane.f32.xlu0 %v623
    %v625 = vpop.xlane.xlu0 %624
    %v626 = vsel %vm294, %v614, 0.0
    %627 = vadd.xlane.f32.xlu0 %v626
    %v628 = vpop.xlane.xlu0 %627
    %v629 = vsel %vm294, %v616, 0.0
    %630 = vadd.xlane.f32.xlu0 %v629
    %v631 = vpop.xlane.xlu0 %630
    %v632 = vsel %vm294, %v618, 0.0
    %633 = vadd.xlane.f32.xlu0 %v632
    %v634 = vpop.xlane.xlu0 %633
    %v635 = vsel %vm367, %v541, %v569
    %v636 = vsel %vm367, %v544, %v572
    %v637 = vsel %vm367, %v547, %v575
    %v638 = vsel %vm367, %v550, %v578
    %v639 = vsel %vm372, %v635, %v597
    %v640 = vsel %vm372, %v636, %v600
    %v641 = vsel %vm372, %v637, %v603
    %v642 = vsel %vm372, %v638, %v606
    %v643 = vsel %vm377, %v639, %v625
    %v644 = vsel %vm377, %v640, %v628
    %v645 = vsel %vm377, %v641, %v631
    %v646 = vsel %vm377, %v642, %v634
    %v647 = vsel %vm382, %v643, -inf
    %648 = vmax.xlane.f32.xlu0 %v647
    %v649 = vpop.xlane.xlu0 %648
    %v650 = vsel %vm382, %v644, -inf
    %651 = vmax.xlane.f32.xlu0 %v650
    %v652 = vpop.xlane.xlu0 %651
    %v653 = vsel %vm382, %v645, -inf
    %654 = vmax.xlane.f32.xlu0 %v653
    %v655 = vpop.xlane.xlu0 %654
    %v656 = vsel %vm382, %v646, -inf
    %657 = vmax.xlane.f32.xlu0 %v656
    %v658 = vpop.xlane.xlu0 %657
    %v659 = vsub.f32 %v643, %v649
    %v660 = vsub.f32 %v644, %v652
    %v661 = vsub.f32 %v645, %v655
    %v662 = vsub.f32 %v646, %v658
    %v663 = vmul.f32 %v659, 1.442695
    %v664 = vpow.pop %v663
    %v665 = vmul.f32 %v660, 1.442695
    %v666 = vpow.pop %v665
    %v667 = vmul.f32 %v661, 1.442695
    %v668 = vpow.pop %v667
    %v669 = vmul.f32 %v662, 1.442695
    %v670 = vpow.pop %v669
    %v671 = vsel %vm382, %v664, 0.0
    %672 = vadd.xlane.f32.xlu0 %v671
    %v673 = vpop.xlane.xlu0 %672
    %v674 = vsel %vm382, %v666, 0.0
    %675 = vadd.xlane.f32.xlu0 %v674
    %v676 = vpop.xlane.xlu0 %675
    %v677 = vsel %vm382, %v668, 0.0
    %678 = vadd.xlane.f32.xlu0 %v677
    %v679 = vpop.xlane.xlu0 %678
    %v680 = vsel %vm382, %v670, 0.0
    %681 = vadd.xlane.f32.xlu0 %v680
    %v682 = vpop.xlane.xlu0 %681
    %v683 = vrcp.pop %v673
    %v684 = vrcp.pop %v676
    %v685 = vrcp.pop %v679
    %v686 = vrcp.pop %v682
    %v687 = vmul.f32 %v664, %v683
    %v688 = vmul.f32 %v666, %v684
    %v689 = vmul.f32 %v668, %v685
    %v690 = vmul.f32 %v670, %v686
    %692 = vset.pattern.permute.xlu0 0
    %693 = vperm.xlu0 %692, %v687
    %v694 = vpop.permute.xlu0 %693
    %697 = vset.pattern.permute.xlu0 0
    %698 = vperm.xlu0 %697, %v688
    %v699 = vpop.permute.xlu0 %698
    %702 = vset.pattern.permute.xlu0 0
    %703 = vperm.xlu0 %702, %v689
    %v704 = vpop.permute.xlu0 %703
    %707 = vset.pattern.permute.xlu0 0
    %708 = vperm.xlu0 %707, %v690
    %v709 = vpop.permute.xlu0 %708
    %v711 = vmul.f32 %v694, %v264
    %v712 = vmul.f32 %v699, %v264
    %v713 = vmul.f32 %v704, %v264
    %v714 = vmul.f32 %v709, %v264
    %715 = vset.pattern.permute.xlu0 1
    %716 = vperm.xlu0 %715, %v687
    %v717 = vpop.permute.xlu0 %716
    %719 = vset.pattern.permute.xlu0 1
    %720 = vperm.xlu0 %719, %v688
    %v721 = vpop.permute.xlu0 %720
    %723 = vset.pattern.permute.xlu0 1
    %724 = vperm.xlu0 %723, %v689
    %v725 = vpop.permute.xlu0 %724
    %727 = vset.pattern.permute.xlu0 1
    %728 = vperm.xlu0 %727, %v690
    %v729 = vpop.permute.xlu0 %728
    %v731 = vmul.f32 %v717, %v269
    %v732 = vmul.f32 %v721, %v269
    %v733 = vmul.f32 %v725, %v269
    %v734 = vmul.f32 %v729, %v269
    %v735 = vadd.f32 %v711, %v731
    %v736 = vadd.f32 %v712, %v732
    %v737 = vadd.f32 %v713, %v733
    %v738 = vadd.f32 %v714, %v734
    %739 = vset.pattern.permute.xlu0 2
    %740 = vperm.xlu0 %739, %v687
    %v741 = vpop.permute.xlu0 %740
    %743 = vset.pattern.permute.xlu0 2
    %744 = vperm.xlu0 %743, %v688
    %v745 = vpop.permute.xlu0 %744
    %747 = vset.pattern.permute.xlu0 2
    %748 = vperm.xlu0 %747, %v689
    %v749 = vpop.permute.xlu0 %748
    %751 = vset.pattern.permute.xlu0 2
    %752 = vperm.xlu0 %751, %v690
    %v753 = vpop.permute.xlu0 %752
    %v755 = vmul.f32 %v741, %v274
    %v756 = vmul.f32 %v745, %v274
    %v757 = vmul.f32 %v749, %v274
    %v758 = vmul.f32 %v753, %v274
    %v759 = vadd.f32 %v735, %v755
    %v760 = vadd.f32 %v736, %v756
    %v761 = vadd.f32 %v737, %v757
    %v762 = vadd.f32 %v738, %v758
    %763 = vset.pattern.permute.xlu0 3
    %764 = vperm.xlu0 %763, %v687
    %v765 = vpop.permute.xlu0 %764
    %767 = vset.pattern.permute.xlu0 3
    %768 = vperm.xlu0 %767, %v688
    %v769 = vpop.permute.xlu0 %768
    %771 = vset.pattern.permute.xlu0 3
    %772 = vperm.xlu0 %771, %v689
    %v773 = vpop.permute.xlu0 %772
    %775 = vset.pattern.permute.xlu0 3
    %776 = vperm.xlu0 %775, %v690
    %v777 = vpop.permute.xlu0 %776
    %v779 = vmul.f32 %v765, %v279
    %v780 = vmul.f32 %v769, %v279
    %v781 = vmul.f32 %v773, %v279
    %v782 = vmul.f32 %v777, %v279
    %v783 = vadd.f32 %v759, %v779
    %v784 = vadd.f32 %v760, %v780
    %v785 = vadd.f32 %v761, %v781
    %v786 = vadd.f32 %v762, %v782
    %787 = vrot.lane.b32.xlu0 %v290, 112
    %v788 = vpop.permute.xlu0 %787
    %789 = vrot.lane.b32.xlu0 %v291, 112
    %v790 = vpop.permute.xlu0 %789
    %791 = vrot.lane.b32.xlu0 %v292, 112
    %v792 = vpop.permute.xlu0 %791
    %793 = vrot.lane.b32.xlu0 %v293, 112
    %v794 = vpop.permute.xlu0 %793
    %v799 = vsel %vm294, %v788, 0.0
    %800 = vadd.xlane.f32.xlu0 %v799
    %v801 = vpop.xlane.xlu0 %800
    %v802 = vsel %vm294, %v790, 0.0
    %803 = vadd.xlane.f32.xlu0 %v802
    %v804 = vpop.xlane.xlu0 %803
    %v805 = vsel %vm294, %v792, 0.0
    %806 = vadd.xlane.f32.xlu0 %v805
    %v807 = vpop.xlane.xlu0 %806
    %v808 = vsel %vm294, %v794, 0.0
    %809 = vadd.xlane.f32.xlu0 %v808
    %v810 = vpop.xlane.xlu0 %809
    %811 = vrot.lane.b32.xlu0 %v311, 112
    %v812 = vpop.permute.xlu0 %811
    %813 = vrot.lane.b32.xlu0 %v312, 112
    %v814 = vpop.permute.xlu0 %813
    %815 = vrot.lane.b32.xlu0 %v313, 112
    %v816 = vpop.permute.xlu0 %815
    %817 = vrot.lane.b32.xlu0 %v314, 112
    %v818 = vpop.permute.xlu0 %817
    %v823 = vsel %vm294, %v812, 0.0
    %824 = vadd.xlane.f32.xlu0 %v823
    %v825 = vpop.xlane.xlu0 %824
    %v826 = vsel %vm294, %v814, 0.0
    %827 = vadd.xlane.f32.xlu0 %v826
    %v828 = vpop.xlane.xlu0 %827
    %v829 = vsel %vm294, %v816, 0.0
    %830 = vadd.xlane.f32.xlu0 %v829
    %v831 = vpop.xlane.xlu0 %830
    %v832 = vsel %vm294, %v818, 0.0
    %833 = vadd.xlane.f32.xlu0 %v832
    %v834 = vpop.xlane.xlu0 %833
    %835 = vrot.lane.b32.xlu0 %v331, 112
    %v836 = vpop.permute.xlu0 %835
    %837 = vrot.lane.b32.xlu0 %v332, 112
    %v838 = vpop.permute.xlu0 %837
    %839 = vrot.lane.b32.xlu0 %v333, 112
    %v840 = vpop.permute.xlu0 %839
    %841 = vrot.lane.b32.xlu0 %v334, 112
    %v842 = vpop.permute.xlu0 %841
    %v847 = vsel %vm294, %v836, 0.0
    %848 = vadd.xlane.f32.xlu0 %v847
    %v849 = vpop.xlane.xlu0 %848
    %v850 = vsel %vm294, %v838, 0.0
    %851 = vadd.xlane.f32.xlu0 %v850
    %v852 = vpop.xlane.xlu0 %851
    %v853 = vsel %vm294, %v840, 0.0
    %854 = vadd.xlane.f32.xlu0 %v853
    %v855 = vpop.xlane.xlu0 %854
    %v856 = vsel %vm294, %v842, 0.0
    %857 = vadd.xlane.f32.xlu0 %v856
    %v858 = vpop.xlane.xlu0 %857
    %859 = vrot.lane.b32.xlu0 %v351, 112
    %v860 = vpop.permute.xlu0 %859
    %861 = vrot.lane.b32.xlu0 %v352, 112
    %v862 = vpop.permute.xlu0 %861
    %863 = vrot.lane.b32.xlu0 %v353, 112
    %v864 = vpop.permute.xlu0 %863
    %865 = vrot.lane.b32.xlu0 %v354, 112
    %v866 = vpop.permute.xlu0 %865
    %v871 = vsel %vm294, %v860, 0.0
    %872 = vadd.xlane.f32.xlu0 %v871
    %v873 = vpop.xlane.xlu0 %872
    %v874 = vsel %vm294, %v862, 0.0
    %875 = vadd.xlane.f32.xlu0 %v874
    %v876 = vpop.xlane.xlu0 %875
    %v877 = vsel %vm294, %v864, 0.0
    %878 = vadd.xlane.f32.xlu0 %v877
    %v879 = vpop.xlane.xlu0 %878
    %v880 = vsel %vm294, %v866, 0.0
    %881 = vadd.xlane.f32.xlu0 %v880
    %v882 = vpop.xlane.xlu0 %881
    %v883 = vsel %vm367, %v801, %v825
    %v884 = vsel %vm367, %v804, %v828
    %v885 = vsel %vm367, %v807, %v831
    %v886 = vsel %vm367, %v810, %v834
    %v887 = vsel %vm372, %v883, %v849
    %v888 = vsel %vm372, %v884, %v852
    %v889 = vsel %vm372, %v885, %v855
    %v890 = vsel %vm372, %v886, %v858
    %v891 = vsel %vm377, %v887, %v873
    %v892 = vsel %vm377, %v888, %v876
    %v893 = vsel %vm377, %v889, %v879
    %v894 = vsel %vm377, %v890, %v882
    %v895 = vsel %vm382, %v891, -inf
    %896 = vmax.xlane.f32.xlu0 %v895
    %v897 = vpop.xlane.xlu0 %896
    %v898 = vsel %vm382, %v892, -inf
    %899 = vmax.xlane.f32.xlu0 %v898
    %v900 = vpop.xlane.xlu0 %899
    %v901 = vsel %vm382, %v893, -inf
    %902 = vmax.xlane.f32.xlu0 %v901
    %v903 = vpop.xlane.xlu0 %902
    %v904 = vsel %vm382, %v894, -inf
    %905 = vmax.xlane.f32.xlu0 %v904
    %v906 = vpop.xlane.xlu0 %905
    %v907 = vsub.f32 %v891, %v897
    %v908 = vsub.f32 %v892, %v900
    %v909 = vsub.f32 %v893, %v903
    %v910 = vsub.f32 %v894, %v906
    %v911 = vmul.f32 %v907, 1.442695
    %v912 = vpow.pop %v911
    %v913 = vmul.f32 %v908, 1.442695
    %v914 = vpow.pop %v913
    %v915 = vmul.f32 %v909, 1.442695
    %v916 = vpow.pop %v915
    %v917 = vmul.f32 %v910, 1.442695
    %v918 = vpow.pop %v917
    %v919 = vsel %vm382, %v912, 0.0
    %920 = vadd.xlane.f32.xlu0 %v919
    %v921 = vpop.xlane.xlu0 %920
    %v922 = vsel %vm382, %v914, 0.0
    %923 = vadd.xlane.f32.xlu0 %v922
    %v924 = vpop.xlane.xlu0 %923
    %v925 = vsel %vm382, %v916, 0.0
    %926 = vadd.xlane.f32.xlu0 %v925
    %v927 = vpop.xlane.xlu0 %926
    %v928 = vsel %vm382, %v918, 0.0
    %929 = vadd.xlane.f32.xlu0 %v928
    %v930 = vpop.xlane.xlu0 %929
    %v931 = vrcp.pop %v921
    %v932 = vrcp.pop %v924
    %v933 = vrcp.pop %v927
    %v934 = vrcp.pop %v930
    %v935 = vmul.f32 %v912, %v931
    %v936 = vmul.f32 %v914, %v932
    %v937 = vmul.f32 %v916, %v933
    %v938 = vmul.f32 %v918, %v934
    %940 = vset.pattern.permute.xlu0 0
    %941 = vperm.xlu0 %940, %v935
    %v942 = vpop.permute.xlu0 %941
    %945 = vset.pattern.permute.xlu0 0
    %946 = vperm.xlu0 %945, %v936
    %v947 = vpop.permute.xlu0 %946
    %950 = vset.pattern.permute.xlu0 0
    %951 = vperm.xlu0 %950, %v937
    %v952 = vpop.permute.xlu0 %951
    %955 = vset.pattern.permute.xlu0 0
    %956 = vperm.xlu0 %955, %v938
    %v957 = vpop.permute.xlu0 %956
    %v959 = vmul.f32 %v942, %v264
    %v960 = vmul.f32 %v947, %v264
    %v961 = vmul.f32 %v952, %v264
    %v962 = vmul.f32 %v957, %v264
    %963 = vset.pattern.permute.xlu0 1
    %964 = vperm.xlu0 %963, %v935
    %v965 = vpop.permute.xlu0 %964
    %967 = vset.pattern.permute.xlu0 1
    %968 = vperm.xlu0 %967, %v936
    %v969 = vpop.permute.xlu0 %968
    %971 = vset.pattern.permute.xlu0 1
    %972 = vperm.xlu0 %971, %v937
    %v973 = vpop.permute.xlu0 %972
    %975 = vset.pattern.permute.xlu0 1
    %976 = vperm.xlu0 %975, %v938
    %v977 = vpop.permute.xlu0 %976
    %v979 = vmul.f32 %v965, %v269
    %v980 = vmul.f32 %v969, %v269
    %v981 = vmul.f32 %v973, %v269
    %v982 = vmul.f32 %v977, %v269
    %v983 = vadd.f32 %v959, %v979
    %v984 = vadd.f32 %v960, %v980
    %v985 = vadd.f32 %v961, %v981
    %v986 = vadd.f32 %v962, %v982
    %987 = vset.pattern.permute.xlu0 2
    %988 = vperm.xlu0 %987, %v935
    %v989 = vpop.permute.xlu0 %988
    %991 = vset.pattern.permute.xlu0 2
    %992 = vperm.xlu0 %991, %v936
    %v993 = vpop.permute.xlu0 %992
    %995 = vset.pattern.permute.xlu0 2
    %996 = vperm.xlu0 %995, %v937
    %v997 = vpop.permute.xlu0 %996
    %999 = vset.pattern.permute.xlu0 2
    %1000 = vperm.xlu0 %999, %v938
    %v1001 = vpop.permute.xlu0 %1000
    %v1003 = vmul.f32 %v989, %v274
    %v1004 = vmul.f32 %v993, %v274
    %v1005 = vmul.f32 %v997, %v274
    %v1006 = vmul.f32 %v1001, %v274
    %v1007 = vadd.f32 %v983, %v1003
    %v1008 = vadd.f32 %v984, %v1004
    %v1009 = vadd.f32 %v985, %v1005
    %v1010 = vadd.f32 %v986, %v1006
    %1011 = vset.pattern.permute.xlu0 3
    %1012 = vperm.xlu0 %1011, %v935
    %v1013 = vpop.permute.xlu0 %1012
    %1015 = vset.pattern.permute.xlu0 3
    %1016 = vperm.xlu0 %1015, %v936
    %v1017 = vpop.permute.xlu0 %1016
    %1019 = vset.pattern.permute.xlu0 3
    %1020 = vperm.xlu0 %1019, %v937
    %v1021 = vpop.permute.xlu0 %1020
    %1023 = vset.pattern.permute.xlu0 3
    %1024 = vperm.xlu0 %1023, %v938
    %v1025 = vpop.permute.xlu0 %1024
    %v1027 = vmul.f32 %v1013, %v279
    %v1028 = vmul.f32 %v1017, %v279
    %v1029 = vmul.f32 %v1021, %v279
    %v1030 = vmul.f32 %v1025, %v279
    %v1031 = vadd.f32 %v1007, %v1027
    %v1032 = vadd.f32 %v1008, %v1028
    %v1033 = vadd.f32 %v1009, %v1029
    %v1034 = vadd.f32 %v1010, %v1030
    %1035 = vrot.lane.b32.xlu0 %v290, 104
    %v1036 = vpop.permute.xlu0 %1035
    %1037 = vrot.lane.b32.xlu0 %v291, 104
    %v1038 = vpop.permute.xlu0 %1037
    %1039 = vrot.lane.b32.xlu0 %v292, 104
    %v1040 = vpop.permute.xlu0 %1039
    %1041 = vrot.lane.b32.xlu0 %v293, 104
    %v1042 = vpop.permute.xlu0 %1041
    %v1047 = vsel %vm294, %v1036, 0.0
    %1048 = vadd.xlane.f32.xlu0 %v1047
    %v1049 = vpop.xlane.xlu0 %1048
    %v1050 = vsel %vm294, %v1038, 0.0
    %1051 = vadd.xlane.f32.xlu0 %v1050
    %v1052 = vpop.xlane.xlu0 %1051
    %v1053 = vsel %vm294, %v1040, 0.0
    %1054 = vadd.xlane.f32.xlu0 %v1053
    %v1055 = vpop.xlane.xlu0 %1054
    %v1056 = vsel %vm294, %v1042, 0.0
    %1057 = vadd.xlane.f32.xlu0 %v1056
    %v1058 = vpop.xlane.xlu0 %1057
    %1059 = vrot.lane.b32.xlu0 %v311, 104
    %v1060 = vpop.permute.xlu0 %1059
    %1061 = vrot.lane.b32.xlu0 %v312, 104
    %v1062 = vpop.permute.xlu0 %1061
    %1063 = vrot.lane.b32.xlu0 %v313, 104
    %v1064 = vpop.permute.xlu0 %1063
    %1065 = vrot.lane.b32.xlu0 %v314, 104
    %v1066 = vpop.permute.xlu0 %1065
    %v1071 = vsel %vm294, %v1060, 0.0
    %1072 = vadd.xlane.f32.xlu0 %v1071
    %v1073 = vpop.xlane.xlu0 %1072
    %v1074 = vsel %vm294, %v1062, 0.0
    %1075 = vadd.xlane.f32.xlu0 %v1074
    %v1076 = vpop.xlane.xlu0 %1075
    %v1077 = vsel %vm294, %v1064, 0.0
    %1078 = vadd.xlane.f32.xlu0 %v1077
    %v1079 = vpop.xlane.xlu0 %1078
    %v1080 = vsel %vm294, %v1066, 0.0
    %1081 = vadd.xlane.f32.xlu0 %v1080
    %v1082 = vpop.xlane.xlu0 %1081
    %1083 = vrot.lane.b32.xlu0 %v331, 104
    %v1084 = vpop.permute.xlu0 %1083
    %1085 = vrot.lane.b32.xlu0 %v332, 104
    %v1086 = vpop.permute.xlu0 %1085
    %1087 = vrot.lane.b32.xlu0 %v333, 104
    %v1088 = vpop.permute.xlu0 %1087
    %1089 = vrot.lane.b32.xlu0 %v334, 104
    %v1090 = vpop.permute.xlu0 %1089
    %v1095 = vsel %vm294, %v1084, 0.0
    %1096 = vadd.xlane.f32.xlu0 %v1095
    %v1097 = vpop.xlane.xlu0 %1096
    %v1098 = vsel %vm294, %v1086, 0.0
    %1099 = vadd.xlane.f32.xlu0 %v1098
    %v1100 = vpop.xlane.xlu0 %1099
    %v1101 = vsel %vm294, %v1088, 0.0
    %1102 = vadd.xlane.f32.xlu0 %v1101
    %v1103 = vpop.xlane.xlu0 %1102
    %v1104 = vsel %vm294, %v1090, 0.0
    %1105 = vadd.xlane.f32.xlu0 %v1104
    %v1106 = vpop.xlane.xlu0 %1105
    %1107 = vrot.lane.b32.xlu0 %v351, 104
    %v1108 = vpop.permute.xlu0 %1107
    %1109 = vrot.lane.b32.xlu0 %v352, 104
    %v1110 = vpop.permute.xlu0 %1109
    %1111 = vrot.lane.b32.xlu0 %v353, 104
    %v1112 = vpop.permute.xlu0 %1111
    %1113 = vrot.lane.b32.xlu0 %v354, 104
    %v1114 = vpop.permute.xlu0 %1113
    %v1119 = vsel %vm294, %v1108, 0.0
    %1120 = vadd.xlane.f32.xlu0 %v1119
    %v1121 = vpop.xlane.xlu0 %1120
    %v1122 = vsel %vm294, %v1110, 0.0
    %1123 = vadd.xlane.f32.xlu0 %v1122
    %v1124 = vpop.xlane.xlu0 %1123
    %v1125 = vsel %vm294, %v1112, 0.0
    %1126 = vadd.xlane.f32.xlu0 %v1125
    %v1127 = vpop.xlane.xlu0 %1126
    %v1128 = vsel %vm294, %v1114, 0.0
    %1129 = vadd.xlane.f32.xlu0 %v1128
    %v1130 = vpop.xlane.xlu0 %1129
    %v1131 = vsel %vm367, %v1049, %v1073
    %v1132 = vsel %vm367, %v1052, %v1076
    %v1133 = vsel %vm367, %v1055, %v1079
    %v1134 = vsel %vm367, %v1058, %v1082
    %v1135 = vsel %vm372, %v1131, %v1097
    %v1136 = vsel %vm372, %v1132, %v1100
    %v1137 = vsel %vm372, %v1133, %v1103
    %v1138 = vsel %vm372, %v1134, %v1106
    %v1139 = vsel %vm377, %v1135, %v1121
    %v1140 = vsel %vm377, %v1136, %v1124
    %v1141 = vsel %vm377, %v1137, %v1127
    %v1142 = vsel %vm377, %v1138, %v1130
    %v1143 = vsel %vm382, %v1139, -inf
    %1144 = vmax.xlane.f32.xlu0 %v1143
    %v1145 = vpop.xlane.xlu0 %1144
    %v1146 = vsel %vm382, %v1140, -inf
    %1147 = vmax.xlane.f32.xlu0 %v1146
    %v1148 = vpop.xlane.xlu0 %1147
    %v1149 = vsel %vm382, %v1141, -inf
    %1150 = vmax.xlane.f32.xlu0 %v1149
    %v1151 = vpop.xlane.xlu0 %1150
    %v1152 = vsel %vm382, %v1142, -inf
    %1153 = vmax.xlane.f32.xlu0 %v1152
    %v1154 = vpop.xlane.xlu0 %1153
    %v1155 = vsub.f32 %v1139, %v1145
    %v1156 = vsub.f32 %v1140, %v1148
    %v1157 = vsub.f32 %v1141, %v1151
    %v1158 = vsub.f32 %v1142, %v1154
    %v1159 = vmul.f32 %v1155, 1.442695
    %v1160 = vpow.pop %v1159
    %v1161 = vmul.f32 %v1156, 1.442695
    %v1162 = vpow.pop %v1161
    %v1163 = vmul.f32 %v1157, 1.442695
    %v1164 = vpow.pop %v1163
    %v1165 = vmul.f32 %v1158, 1.442695
    %v1166 = vpow.pop %v1165
    %v1167 = vsel %vm382, %v1160, 0.0
    %1168 = vadd.xlane.f32.xlu0 %v1167
    %v1169 = vpop.xlane.xlu0 %1168
    %v1170 = vsel %vm382, %v1162, 0.0
    %1171 = vadd.xlane.f32.xlu0 %v1170
    %v1172 = vpop.xlane.xlu0 %1171
    %v1173 = vsel %vm382, %v1164, 0.0
    %1174 = vadd.xlane.f32.xlu0 %v1173
    %v1175 = vpop.xlane.xlu0 %1174
    %v1176 = vsel %vm382, %v1166, 0.0
    %1177 = vadd.xlane.f32.xlu0 %v1176
    %v1178 = vpop.xlane.xlu0 %1177
    %v1179 = vrcp.pop %v1169
    %v1180 = vrcp.pop %v1172
    %v1181 = vrcp.pop %v1175
    %v1182 = vrcp.pop %v1178
    %v1183 = vmul.f32 %v1160, %v1179
    %v1184 = vmul.f32 %v1162, %v1180
    %v1185 = vmul.f32 %v1164, %v1181
    %v1186 = vmul.f32 %v1166, %v1182
    %1188 = vset.pattern.permute.xlu0 0
    %1189 = vperm.xlu0 %1188, %v1183
    %v1190 = vpop.permute.xlu0 %1189
    %1193 = vset.pattern.permute.xlu0 0
    %1194 = vperm.xlu0 %1193, %v1184
    %v1195 = vpop.permute.xlu0 %1194
    %1198 = vset.pattern.permute.xlu0 0
    %1199 = vperm.xlu0 %1198, %v1185
    %v1200 = vpop.permute.xlu0 %1199
    %1203 = vset.pattern.permute.xlu0 0
    %1204 = vperm.xlu0 %1203, %v1186
    %v1205 = vpop.permute.xlu0 %1204
    %v1207 = vmul.f32 %v1190, %v264
    %v1208 = vmul.f32 %v1195, %v264
    %v1209 = vmul.f32 %v1200, %v264
    %v1210 = vmul.f32 %v1205, %v264
    %1211 = vset.pattern.permute.xlu0 1
    %1212 = vperm.xlu0 %1211, %v1183
    %v1213 = vpop.permute.xlu0 %1212
    %1215 = vset.pattern.permute.xlu0 1
    %1216 = vperm.xlu0 %1215, %v1184
    %v1217 = vpop.permute.xlu0 %1216
    %1219 = vset.pattern.permute.xlu0 1
    %1220 = vperm.xlu0 %1219, %v1185
    %v1221 = vpop.permute.xlu0 %1220
    %1223 = vset.pattern.permute.xlu0 1
    %1224 = vperm.xlu0 %1223, %v1186
    %v1225 = vpop.permute.xlu0 %1224
    %v1227 = vmul.f32 %v1213, %v269
    %v1228 = vmul.f32 %v1217, %v269
    %v1229 = vmul.f32 %v1221, %v269
    %v1230 = vmul.f32 %v1225, %v269
    %v1231 = vadd.f32 %v1207, %v1227
    %v1232 = vadd.f32 %v1208, %v1228
    %v1233 = vadd.f32 %v1209, %v1229
    %v1234 = vadd.f32 %v1210, %v1230
    %1235 = vset.pattern.permute.xlu0 2
    %1236 = vperm.xlu0 %1235, %v1183
    %v1237 = vpop.permute.xlu0 %1236
    %1239 = vset.pattern.permute.xlu0 2
    %1240 = vperm.xlu0 %1239, %v1184
    %v1241 = vpop.permute.xlu0 %1240
    %1243 = vset.pattern.permute.xlu0 2
    %1244 = vperm.xlu0 %1243, %v1185
    %v1245 = vpop.permute.xlu0 %1244
    %1247 = vset.pattern.permute.xlu0 2
    %1248 = vperm.xlu0 %1247, %v1186
    %v1249 = vpop.permute.xlu0 %1248
    %v1251 = vmul.f32 %v1237, %v274
    %v1252 = vmul.f32 %v1241, %v274
    %v1253 = vmul.f32 %v1245, %v274
    %v1254 = vmul.f32 %v1249, %v274
    %v1255 = vadd.f32 %v1231, %v1251
    %v1256 = vadd.f32 %v1232, %v1252
    %v1257 = vadd.f32 %v1233, %v1253
    %v1258 = vadd.f32 %v1234, %v1254
    %1259 = vset.pattern.permute.xlu0 3
    %1260 = vperm.xlu0 %1259, %v1183
    %v1261 = vpop.permute.xlu0 %1260
    %1263 = vset.pattern.permute.xlu0 3
    %1264 = vperm.xlu0 %1263, %v1184
    %v1265 = vpop.permute.xlu0 %1264
    %1267 = vset.pattern.permute.xlu0 3
    %1268 = vperm.xlu0 %1267, %v1185
    %v1269 = vpop.permute.xlu0 %1268
    %1271 = vset.pattern.permute.xlu0 3
    %1272 = vperm.xlu0 %1271, %v1186
    %v1273 = vpop.permute.xlu0 %1272
    %v1275 = vmul.f32 %v1261, %v279
    %v1276 = vmul.f32 %v1265, %v279
    %v1277 = vmul.f32 %v1269, %v279
    %v1278 = vmul.f32 %v1273, %v279
    %v1279 = vadd.f32 %v1255, %v1275
    %v1280 = vadd.f32 %v1256, %v1276
    %v1281 = vadd.f32 %v1257, %v1277
    %v1282 = vadd.f32 %v1258, %v1278
    %1287 = vrot.lane.b32.xlu0 %v519, 64
    %v1288 = vpop.permute.xlu0 %1287
    %1289 = vrot.lane.b32.xlu0 %v520, 64
    %v1290 = vpop.permute.xlu0 %1289
    %1291 = vrot.lane.b32.xlu0 %v521, 64
    %v1292 = vpop.permute.xlu0 %1291
    %1293 = vrot.lane.b32.xlu0 %v522, 64
    %v1294 = vpop.permute.xlu0 %1293
    %1303 = vrot.lane.b32.xlu0 %v783, 64
    %v1304 = vpop.permute.xlu0 %1303
    %1305 = vrot.lane.b32.xlu0 %v784, 64
    %v1306 = vpop.permute.xlu0 %1305
    %1307 = vrot.lane.b32.xlu0 %v785, 64
    %v1308 = vpop.permute.xlu0 %1307
    %1309 = vrot.lane.b32.xlu0 %v786, 64
    %v1310 = vpop.permute.xlu0 %1309
    %1319 = vrot.lane.b32.xlu0 %v1031, 64
    %v1320 = vpop.permute.xlu0 %1319
    %1321 = vrot.lane.b32.xlu0 %v1032, 64
    %v1322 = vpop.permute.xlu0 %1321
    %1323 = vrot.lane.b32.xlu0 %v1033, 64
    %v1324 = vpop.permute.xlu0 %1323
    %1325 = vrot.lane.b32.xlu0 %v1034, 64
    %v1326 = vpop.permute.xlu0 %1325
    %1335 = vrot.lane.b32.xlu0 %v1279, 64
    %v1336 = vpop.permute.xlu0 %1335
    %1337 = vrot.lane.b32.xlu0 %v1280, 64
    %v1338 = vpop.permute.xlu0 %1337
    %1339 = vrot.lane.b32.xlu0 %v1281, 64
    %v1340 = vpop.permute.xlu0 %1339
    %1341 = vrot.lane.b32.xlu0 %v1282, 64
    %v1342 = vpop.permute.xlu0 %1341
    %v1347 = vsel %vm294, %v1288, %v1304
    %v1348 = vsel %vm294, %v1290, %v1306
    %v1349 = vsel %vm294, %v1292, %v1308
    %v1350 = vsel %vm294, %v1294, %v1310
    %v1351 = vsel %vm55, %v1347, %v1320
    %v1352 = vsel %vm55, %v1348, %v1322
    %v1353 = vsel %vm55, %v1349, %v1324
    %v1354 = vsel %vm55, %v1350, %v1326
    %vm1355 = vcmask 195584
    %v1356 = vsel %vm1355, %v1351, %v1336
    %v1357 = vsel %vm1355, %v1352, %v1338
    %v1358 = vsel %vm1355, %v1353, %v1340
    %v1359 = vsel %vm1355, %v1354, %v1342
    %v1360 = vld [vmem:[#allocation7 + $0x30] sm:$0xff]
    %v1361 = vld [vmem:[#allocation7 + $0x38] sm:$0xff]
    %v1362 = vld [vmem:[#allocation7 + $0x40] sm:$0xff]
    %v1363 = vld [vmem:[#allocation7 + $0x48] sm:$0xff]
    %v1364 = vld [vmem:[#allocation9 + $0x2] sm:$0x1]
    %v1365 = vlaneseq
    %v1366 = vshrl.u32 %v1365, 7
    %v1367 = vsub.s32 0, %v1366
    %v1368 = vrot.slane %v1364, %v1367
    %v1370 = vsel %vm157, %v1356, 0
    %v1373 = vsel %vm157, %v1357, 0
    %v1376 = vsel %vm157, %v1358, 0
    %v1379 = vsel %vm157, %v1359, 0
    %1381 = vmatprep.subr.mxu0 0.0
    %1382 = vmatpush1.msra.mxu0 %v1360
    %1383 = vmatprep.subr.mxu0 0.0
    %1384 = vmatpush1.msra.mxu0 %v1361
    %1385 = vmatprep.subr.mxu0 0.0
    %1386 = vmatpush1.msra.mxu0 %v1362
    %1387 = vmatprep.subr.mxu0 0.0
    %1388 = vmatpush1.msra.mxu0 %v1363
    %1389 = vmatprep.subr.mxu0 0.0
    %1390 = vmatpush1.msra.mxu0 0.0
    %1391 = vmatprep.subr.mxu0 0.0
    %1392 = vmatpush1.msra.mxu0 0.0
    %1393 = vmatprep.subr.mxu0 0.0
    %1394 = vmatpush1.msra.mxu0 0.0
    %1395 = vmatprep.subr.mxu0 0.0
    %1396 = vmatpush1.msra.mxu0 0.0
    %1397 = vmatprep.subr.mxu0 0.0
    %1398 = vmatpush1.msra.mxu0 0.0
    %1399 = vmatprep.subr.mxu0 0.0
    %1400 = vmatpush1.msra.mxu0 0.0
    %1401 = vmatprep.subr.mxu0 0.0
    %1402 = vmatpush1.msra.mxu0 0.0
    %1403 = vmatprep.subr.mxu0 0.0
    %1404 = vmatpush1.msra.mxu0 0.0
    %1405 = vmatprep.subr.mxu0 0.0
    %1406 = vmatpush1.msra.mxu0 0.0
    %1407 = vmatprep.subr.mxu0 0.0
    %1408 = vmatpush1.msra.mxu0 0.0
    %1409 = vmatprep.subr.mxu0 0.0
    %1410 = vmatpush1.msra.mxu0 0.0
    %1411 = vmatprep.subr.mxu0 0.0
    %1412 = vmatpush1.msra.mxu0 0.0
    %1413 = vmatprep.subr.mxu0 0.0
    %1414 = vmatpush1.msra.mxu0 0.0
    %1415 = vmatprep.subr.mxu0 0.0
    %1416 = vmatpush1.msra.mxu0 0.0
    %1417 = vmatprep.subr.mxu0 0.0
    %1418 = vmatpush1.msra.mxu0 0.0
    %1419 = vmatprep.subr.mxu0 0.0
    %1420 = vmatpush1.msra.mxu0 0.0
    %1421 = vmatprep.subr.mxu0 0.0
    %1422 = vmatpush1.msra.mxu0 0.0
    %1423 = vmatprep.subr.mxu0 0.0
    %1424 = vmatpush1.msra.mxu0 0.0
    %1425 = vmatprep.subr.mxu0 0.0
    %1426 = vmatpush1.msra.mxu0 0.0
    %1427 = vmatprep.subr.mxu0 0.0
    %1428 = vmatpush1.msra.mxu0 0.0
    %1429 = vmatprep.subr.mxu0 0.0
    %1430 = vmatpush1.msra.mxu0 0.0
    %1431 = vmatprep.subr.mxu0 0.0
    %1432 = vmatpush1.msra.mxu0 0.0
    %1433 = vmatprep.subr.mxu0 0.0
    %1434 = vmatpush1.msra.mxu0 0.0
    %1435 = vmatprep.subr.mxu0 0.0
    %1436 = vmatpush1.msra.mxu0 0.0
    %1437 = vmatprep.subr.mxu0 0.0
    %1438 = vmatpush1.msra.mxu0 0.0
    %1439 = vmatprep.subr.mxu0 0.0
    %1440 = vmatpush1.msra.mxu0 0.0
    %1441 = vmatprep.subr.mxu0 0.0
    %1442 = vmatpush1.msra.mxu0 0.0
    %1443 = vmatprep.subr.mxu0 0.0
    %1444 = vmatpush1.msra.mxu0 0.0
    %1445 = vmatprep.mubr.f32.mxu0 0.0
    %1446 = vmatmul.mubr.f32.gmra.mrb[0].mxu0 %v1370
    %v1447 = vpop.f32.mrb[0].mxu0
    %v1448 = vadd.f32 %v1368, %v1447
    %v1449 = vpop.f32.mrb[0].mxu0
    %1450 = vmatprep.mubr.f32.mxu0 0.0
    %1451 = vmatmul.mubr.f32.gmra.mrb[0].mxu0 %v1373
    %v1452 = vpop.f32.mrb[0].mxu0
    %v1453 = vadd.f32 %v1368, %v1452
    %v1454 = vpop.f32.mrb[0].mxu0
    %1455 = vmatprep.mubr.f32.mxu0 0.0
    %1456 = vmatmul.mubr.f32.gmra.mrb[0].mxu0 %v1376
    %v1457 = vpop.f32.mrb[0].mxu0
    %v1458 = vadd.f32 %v1368, %v1457
    %v1459 = vpop.f32.mrb[0].mxu0
    %1460 = vmatprep.mubr.f32.mxu0 0.0
    %1461 = vmatmul.mubr.f32.gmra.mrb[0].mxu0 %v1379
    %v1462 = vpop.f32.mrb[0].mxu0
    %v1463 = vadd.f32 %v1368, %v1462
    %v1464 = vpop.f32.mrb[0].mxu0
    %1465 = vdwg.mxu0
    %v1466 = vadd.f32 %v172, %v1448
    %v1467 = vadd.f32 %v173, %v1453
    %v1468 = vadd.f32 %v174, %v1458
    %v1469 = vadd.f32 %v175, %v1463
    %v1470 = vld [vmem:[#allocation9 + $0x3] sm:$0x1]
    %v1471 = vld [vmem:[#allocation9 + $0x4] sm:$0x1]
    %v1472 = vsel %vm157, %v1466, 0.0
    %1473 = vadd.xlane.f32.xlu0 %v1472
    %v1474 = vpop.xlane.xlu0 %1473
    %v1475 = vsel %vm157, %v1467, 0.0
    %1476 = vadd.xlane.f32.xlu0 %v1475
    %v1477 = vpop.xlane.xlu0 %1476
    %v1478 = vsel %vm157, %v1468, 0.0
    %1479 = vadd.xlane.f32.xlu0 %v1478
    %v1480 = vpop.xlane.xlu0 %1479
    %v1481 = vsel %vm157, %v1469, 0.0
    %1482 = vadd.xlane.f32.xlu0 %v1481
    %v1483 = vpop.xlane.xlu0 %1482
    %v1484 = vrcp.pop 32.0
    %v1485 = vmul.f32 %v1474, %v1484
    %v1486 = vmul.f32 %v1477, %v1484
    %v1487 = vmul.f32 %v1480, %v1484
    %v1488 = vmul.f32 %v1483, %v1484
    %v1489 = vsub.f32 %v1466, %v1485
    %v1490 = vsub.f32 %v1467, %v1486
    %v1491 = vsub.f32 %v1468, %v1487
    %v1492 = vsub.f32 %v1469, %v1488
    %v1493 = vmul.f32 %v1489, %v1489
    %v1494 = vmul.f32 %v1490, %v1490
    %v1495 = vmul.f32 %v1491, %v1491
    %v1496 = vmul.f32 %v1492, %v1492
    %v1497 = vsel %vm157, %v1493, 0.0
    %1498 = vadd.xlane.f32.xlu0 %v1497
    %v1499 = vpop.xlane.xlu0 %1498
    %v1500 = vsel %vm157, %v1494, 0.0
    %1501 = vadd.xlane.f32.xlu0 %v1500
    %v1502 = vpop.xlane.xlu0 %1501
    %v1503 = vsel %vm157, %v1495, 0.0
    %1504 = vadd.xlane.f32.xlu0 %v1503
    %v1505 = vpop.xlane.xlu0 %1504
    %v1506 = vsel %vm157, %v1496, 0.0
    %1507 = vadd.xlane.f32.xlu0 %v1506
    %v1508 = vpop.xlane.xlu0 %1507
    %v1509 = vmul.f32 %v1499, %v1484
    %v1510 = vmul.f32 %v1502, %v1484
    %v1511 = vmul.f32 %v1505, %v1484
    %v1512 = vmul.f32 %v1508, %v1484
    %v1513 = vadd.f32 %v1509, 1e-05
    %v1514 = vadd.f32 %v1510, 1e-05
    %v1515 = vadd.f32 %v1511, 1e-05
    %v1516 = vadd.f32 %v1512, 1e-05
    %v1517 = vrsqrt.pop %v1513
    %v1518 = vrsqrt.pop %v1514
    %v1519 = vrsqrt.pop %v1515
    %v1520 = vrsqrt.pop %v1516
    %v1521 = vmul.f32 %v1489, %v1517
    %v1522 = vmul.f32 %v1490, %v1518
    %v1523 = vmul.f32 %v1491, %v1519
    %v1524 = vmul.f32 %v1492, %v1520
    %v1525 = vlaneseq
    %v1526 = vshrl.u32 %v1525, 7
    %v1527 = vsub.s32 0, %v1526
    %v1528 = vrot.slane %v1470, %v1527
    %v1529 = vmul.f32 %v1521, %v1528
    %v1530 = vmul.f32 %v1522, %v1528
    %v1531 = vmul.f32 %v1523, %v1528
    %v1532 = vmul.f32 %v1524, %v1528
    %v1533 = vlaneseq
    %v1534 = vshrl.u32 %v1533, 7
    %v1535 = vsub.s32 0, %v1534
    %v1536 = vrot.slane %v1471, %v1535
    %v1537 = vadd.f32 %v1529, %v1536
    %v1538 = vadd.f32 %v1530, %v1536
    %v1539 = vadd.f32 %v1531, %v1536
    %v1540 = vadd.f32 %v1532, %v1536
    %v1541 = vld [vmem:[#allocation7 + $0x50] sm:$0xff]
    %v1542 = vld [vmem:[#allocation7 + $0x58] sm:$0xff]
    %v1543 = vld [vmem:[#allocation7 + $0x60] sm:$0xff]
    %v1544 = vld [vmem:[#allocation7 + $0x68] sm:$0xff]
    %v1545 = vld [vmem:[#allocation9 + $0x5] sm:$0x1]
    %v1546 = vlaneseq
    %v1547 = vshrl.u32 %v1546, 7
    %v1548 = vsub.s32 0, %v1547
    %v1549 = vrot.slane %v1545, %v1548
    %v1551 = vsel %vm157, %v1537, 0
    %v1554 = vsel %vm157, %v1538, 0
    %v1557 = vsel %vm157, %v1539, 0
    %v1560 = vsel %vm157, %v1540, 0
    %1562 = vmatprep.subr.mxu0 0.0
    %1563 = vmatpush1.msra.mxu0 %v1541
    %1564 = vmatprep.subr.mxu0 0.0
    %1565 = vmatpush1.msra.mxu0 %v1542
    %1566 = vmatprep.subr.mxu0 0.0
    %1567 = vmatpush1.msra.mxu0 %v1543
    %1568 = vmatprep.subr.mxu0 0.0
    %1569 = vmatpush1.msra.mxu0 %v1544
    %1570 = vmatprep.subr.mxu0 0.0
    %1571 = vmatpush1.msra.mxu0 0.0
    %1572 = vmatprep.subr.mxu0 0.0
    %1573 = vmatpush1.msra.mxu0 0.0
    %1574 = vmatprep.subr.mxu0 0.0
    %1575 = vmatpush1.msra.mxu0 0.0
    %1576 = vmatprep.subr.mxu0 0.0
    %1577 = vmatpush1.msra.mxu0 0.0
    %1578 = vmatprep.subr.mxu0 0.0
    %1579 = vmatpush1.msra.mxu0 0.0
    %1580 = vmatprep.subr.mxu0 0.0
    %1581 = vmatpush1.msra.mxu0 0.0
    %1582 = vmatprep.subr.mxu0 0.0
    %1583 = vmatpush1.msra.mxu0 0.0
    %1584 = vmatprep.subr.mxu0 0.0
    %1585 = vmatpush1.msra.mxu0 0.0
    %1586 = vmatprep.subr.mxu0 0.0
    %1587 = vmatpush1.msra.mxu0 0.0
    %1588 = vmatprep.subr.mxu0 0.0
    %1589 = vmatpush1.msra.mxu0 0.0
    %1590 = vmatprep.subr.mxu0 0.0
    %1591 = vmatpush1.msra.mxu0 0.0
    %1592 = vmatprep.subr.mxu0 0.0
    %1593 = vmatpush1.msra.mxu0 0.0
    %1594 = vmatprep.subr.mxu0 0.0
    %1595 = vmatpush1.msra.mxu0 0.0
    %1596 = vmatprep.subr.mxu0 0.0
    %1597 = vmatpush1.msra.mxu0 0.0
    %1598 = vmatprep.subr.mxu0 0.0
    %1599 = vmatpush1.msra.mxu0 0.0
    %1600 = vmatprep.subr.mxu0 0.0
    %1601 = vmatpush1.msra.mxu0 0.0
    %1602 = vmatprep.subr.mxu0 0.0
    %1603 = vmatpush1.msra.mxu0 0.0
    %1604 = vmatprep.subr.mxu0 0.0
    %1605 = vmatpush1.msra.mxu0 0.0
    %1606 = vmatprep.subr.mxu0 0.0
    %1607 = vmatpush1.msra.mxu0 0.0
    %1608 = vmatprep.subr.mxu0 0.0
    %1609 = vmatpush1.msra.mxu0 0.0
    %1610 = vmatprep.subr.mxu0 0.0
    %1611 = vmatpush1.msra.mxu0 0.0
    %1612 = vmatprep.subr.mxu0 0.0
    %1613 = vmatpush1.msra.mxu0 0.0
    %1614 = vmatprep.subr.mxu0 0.0
    %1615 = vmatpush1.msra.mxu0 0.0
    %1616 = vmatprep.subr.mxu0 0.0
    %1617 = vmatpush1.msra.mxu0 0.0
    %1618 = vmatprep.subr.mxu0 0.0
    %1619 = vmatpush1.msra.mxu0 0.0
    %1620 = vmatprep.subr.mxu0 0.0
    %1621 = vmatpush1.msra.mxu0 0.0
    %1622 = vmatprep.subr.mxu0 0.0
    %1623 = vmatpush1.msra.mxu0 0.0
    %1624 = vmatprep.subr.mxu0 0.0
    %1625 = vmatpush1.msra.mxu0 0.0
    %1626 = vmatprep.mubr.f32.mxu0 0.0
    %1627 = vmatmul.mubr.f32.gmra.mrb[0].mxu0 %v1551
    %v1628 = vpop.f32.mrb[0].mxu0
    %v1629 = vadd.f32 %v1549, %v1628
    %v1630 = vpop.f32.mrb[0].mxu0
    %1631 = vmatprep.mubr.f32.mxu0 0.0
    %1632 = vmatmul.mubr.f32.gmra.mrb[0].mxu0 %v1554
    %v1633 = vpop.f32.mrb[0].mxu0
    %v1634 = vadd.f32 %v1549, %v1633
    %v1635 = vpop.f32.mrb[0].mxu0
    %1636 = vmatprep.mubr.f32.mxu0 0.0
    %1637 = vmatmul.mubr.f32.gmra.mrb[0].mxu0 %v1557
    %v1638 = vpop.f32.mrb[0].mxu0
    %v1639 = vadd.f32 %v1549, %v1638
    %v1640 = vpop.f32.mrb[0].mxu0
    %1641 = vmatprep.mubr.f32.mxu0 0.0
    %1642 = vmatmul.mubr.f32.gmra.mrb[0].mxu0 %v1560
    %v1643 = vpop.f32.mrb[0].mxu0
    %v1644 = vadd.f32 %v1549, %v1643
    %v1645 = vpop.f32.mrb[0].mxu0
    %1646 = vdwg.mxu0
    %v1647 = vmax.f32 %v1629, 0.0
    %v1648 = vmax.f32 %v1634, 0.0
    %v1649 = vmax.f32 %v1639, 0.0
    %v1650 = vmax.f32 %v1644, 0.0
    %v1651 = vld [vmem:[#allocation7 + $0x70] sm:$0xff]
    %v1652 = vld [vmem:[#allocation7 + $0x78] sm:$0xff]
    %v1653 = vld [vmem:[#allocation7 + $0x80] sm:$0xff]
    %v1654 = vld [vmem:[#allocation7 + $0x88] sm:$0xff]
    %v1655 = vld [vmem:[#allocation7 + $0x90] sm:$0xff]
    %v1656 = vld [vmem:[#allocation7 + $0x98] sm:$0xff]
    %v1657 = vld [vmem:[#allocation7 + $0xa0] sm:$0xff]
    %v1658 = vld [vmem:[#allocation7 + $0xa8] sm:$0xff]
    %v1659 = vld [vmem:[#allocation9 + $0x6] sm:$0x1]
    %v1660 = vlaneseq
    %v1661 = vshrl.u32 %v1660, 7
    %v1662 = vsub.s32 0, %v1661
    %v1663 = vrot.slane %v1659, %v1662
    %vm1664 = vcmask 523264
    %v1666 = vsel %vm1664, %v1647, 0
    %v1669 = vsel %vm1664, %v1648, 0
    %v1672 = vsel %vm1664, %v1649, 0
    %v1675 = vsel %vm1664, %v1650, 0
    %1677 = vmatprep.subr.mxu0 0.0
    %1678 = vmatpush1.msra.mxu0 %v1651
    %1679 = vmatprep.subr.mxu0 0.0
    %1680 = vmatpush1.msra.mxu0 %v1652
    %1681 = vmatprep.subr.mxu0 0.0
    %1682 = vmatpush1.msra.mxu0 %v1653
    %1683 = vmatprep.subr.mxu0 0.0
    %1684 = vmatpush1.msra.mxu0 %v1654
    %1685 = vmatprep.subr.mxu0 0.0
    %1686 = vmatpush1.msra.mxu0 %v1655
    %1687 = vmatprep.subr.mxu0 0.0
    %1688 = vmatpush1.msra.mxu0 %v1656
    %1689 = vmatprep.subr.mxu0 0.0
    %1690 = vmatpush1.msra.mxu0 %v1657
    %1691 = vmatprep.subr.mxu0 0.0
    %1692 = vmatpush1.msra.mxu0 %v1658
    %1693 = vmatprep.subr.mxu0 0.0
    %1694 = vmatpush1.msra.mxu0 0.0
    %1695 = vmatprep.subr.mxu0 0.0
    %1696 = vmatpush1.msra.mxu0 0.0
    %1697 = vmatprep.subr.mxu0 0.0
    %1698 = vmatpush1.msra.mxu0 0.0
    %1699 = vmatprep.subr.mxu0 0.0
    %1700 = vmatpush1.msra.mxu0 0.0
    %1701 = vmatprep.subr.mxu0 0.0
    %1702 = vmatpush1.msra.mxu0 0.0
    %1703 = vmatprep.subr.mxu0 0.0
    %1704 = vmatpush1.msra.mxu0 0.0
    %1705 = vmatprep.subr.mxu0 0.0
    %1706 = vmatpush1.msra.mxu0 0.0
    %1707 = vmatprep.subr.mxu0 0.0
    %1708 = vmatpush1.msra.mxu0 0.0
    %1709 = vmatprep.subr.mxu0 0.0
    %1710 = vmatpush1.msra.mxu0 0.0
    %1711 = vmatprep.subr.mxu0 0.0
    %1712 = vmatpush1.msra.mxu0 0.0
    %1713 = vmatprep.subr.mxu0 0.0
    %1714 = vmatpush1.msra.mxu0 0.0
    %1715 = vmatprep.subr.mxu0 0.0
    %1716 = vmatpush1.msra.mxu0 0.0
    %1717 = vmatprep.subr.mxu0 0.0
    %1718 = vmatpush1.msra.mxu0 0.0
    %1719 = vmatprep.subr.mxu0 0.0
    %1720 = vmatpush1.msra.mxu0 0.0
    %1721 = vmatprep.subr.mxu0 0.0
    %1722 = vmatpush1.msra.mxu0 0.0
    %1723 = vmatprep.subr.mxu0 0.0
    %1724 = vmatpush1.msra.mxu0 0.0
    %1725 = vmatprep.subr.mxu0 0.0
    %1726 = vmatpush1.msra.mxu0 0.0
    %1727 = vmatprep.subr.mxu0 0.0
    %1728 = vmatpush1.msra.mxu0 0.0
    %1729 = vmatprep.subr.mxu0 0.0
    %1730 = vmatpush1.msra.mxu0 0.0
    %1731 = vmatprep.subr.mxu0 0.0
    %1732 = vmatpush1.msra.mxu0 0.0
    %1733 = vmatprep.subr.mxu0 0.0
    %1734 = vmatpush1.msra.mxu0 0.0
    %1735 = vmatprep.subr.mxu0 0.0
    %1736 = vmatpush1.msra.mxu0 0.0
    %1737 = vmatprep.subr.mxu0 0.0
    %1738 = vmatpush1.msra.mxu0 0.0
    %1739 = vmatprep.subr.mxu0 0.0
    %1740 = vmatpush1.msra.mxu0 0.0
    %1741 = vmatprep.mubr.f32.mxu0 0.0
    %1742 = vmatmul.mubr.f32.gmra.mrb[0].mxu0 %v1666
    %v1743 = vpop.f32.mrb[0].mxu0
    %v1744 = vadd.f32 %v1663, %v1743
    %v1745 = vpop.f32.mrb[0].mxu0
    %1746 = vmatprep.mubr.f32.mxu0 0.0
    %1747 = vmatmul.mubr.f32.gmra.mrb[0].mxu0 %v1669
    %v1748 = vpop.f32.mrb[0].mxu0
    %v1749 = vadd.f32 %v1663, %v1748
    %v1750 = vpop.f32.mrb[0].mxu0
    %1751 = vmatprep.mubr.f32.mxu0 0.0
    %1752 = vmatmul.mubr.f32.gmra.mrb[0].mxu0 %v1672
    %v1753 = vpop.f32.mrb[0].mxu0
    %v1754 = vadd.f32 %v1663, %v1753
    %v1755 = vpop.f32.mrb[0].mxu0
    %1756 = vmatprep.mubr.f32.mxu0 0.0
    %1757 = vmatmul.mubr.f32.gmra.mrb[0].mxu0 %v1675
    %v1758 = vpop.f32.mrb[0].mxu0
    %v1759 = vadd.f32 %v1663, %v1758
    %v1760 = vpop.f32.mrb[0].mxu0
    %1761 = vdwg.mxu0
    %v1762 = vadd.f32 %v1537, %v1744
    %v1763 = vadd.f32 %v1538, %v1749
    %v1764 = vadd.f32 %v1539, %v1754
    %v1765 = vadd.f32 %v1540, %v1759
    %v1766 = vld [vmem:[#allocation9 + $0x7] sm:$0x1]
    %v1767 = vld [vmem:[#allocation9 + $0x8] sm:$0x1]
    %v1768 = vsel %vm157, %v1762, 0.0
    %1769 = vadd.xlane.f32.xlu0 %v1768
    %v1770 = vpop.xlane.xlu0 %1769
    %v1771 = vsel %vm157, %v1763, 0.0
    %1772 = vadd.xlane.f32.xlu0 %v1771
    %v1773 = vpop.xlane.xlu0 %1772
    %v1774 = vsel %vm157, %v1764, 0.0
    %1775 = vadd.xlane.f32.xlu0 %v1774
    %v1776 = vpop.xlane.xlu0 %1775
    %v1777 = vsel %vm157, %v1765, 0.0
    %1778 = vadd.xlane.f32.xlu0 %v1777
    %v1779 = vpop.xlane.xlu0 %1778
    %v1780 = vmul.f32 %v1770, %v1484
    %v1781 = vmul.f32 %v1773, %v1484
    %v1782 = vmul.f32 %v1776, %v1484
    %v1783 = vmul.f32 %v1779, %v1484
    %v1784 = vsub.f32 %v1762, %v1780
    %v1785 = vsub.f32 %v1763, %v1781
    %v1786 = vsub.f32 %v1764, %v1782
    %v1787 = vsub.f32 %v1765, %v1783
    %v1788 = vmul.f32 %v1784, %v1784
    %v1789 = vmul.f32 %v1785, %v1785
    %v1790 = vmul.f32 %v1786, %v1786
    %v1791 = vmul.f32 %v1787, %v1787
    %v1792 = vsel %vm157, %v1788, 0.0
    %1793 = vadd.xlane.f32.xlu0 %v1792
    %v1794 = vpop.xlane.xlu0 %1793
    %v1795 = vsel %vm157, %v1789, 0.0
    %1796 = vadd.xlane.f32.xlu0 %v1795
    %v1797 = vpop.xlane.xlu0 %1796
    %v1798 = vsel %vm157, %v1790, 0.0
    %1799 = vadd.xlane.f32.xlu0 %v1798
    %v1800 = vpop.xlane.xlu0 %1799
    %v1801 = vsel %vm157, %v1791, 0.0
    %1802 = vadd.xlane.f32.xlu0 %v1801
    %v1803 = vpop.xlane.xlu0 %1802
    %v1804 = vmul.f32 %v1794, %v1484
    %v1805 = vmul.f32 %v1797, %v1484
    %v1806 = vmul.f32 %v1800, %v1484
    %v1807 = vmul.f32 %v1803, %v1484
    %v1808 = vadd.f32 %v1804, 1e-05
    %v1809 = vadd.f32 %v1805, 1e-05
    %v1810 = vadd.f32 %v1806, 1e-05
    %v1811 = vadd.f32 %v1807, 1e-05
    %v1812 = vrsqrt.pop %v1808
    %v1813 = vrsqrt.pop %v1809
    %v1814 = vrsqrt.pop %v1810
    %v1815 = vrsqrt.pop %v1811
    %v1816 = vmul.f32 %v1784, %v1812
    %v1817 = vmul.f32 %v1785, %v1813
    %v1818 = vmul.f32 %v1786, %v1814
    %v1819 = vmul.f32 %v1787, %v1815
    %v1820 = vlaneseq
    %v1821 = vshrl.u32 %v1820, 7
    %v1822 = vsub.s32 0, %v1821
    %v1823 = vrot.slane %v1766, %v1822
    %v1824 = vmul.f32 %v1816, %v1823
    %v1825 = vmul.f32 %v1817, %v1823
    %v1826 = vmul.f32 %v1818, %v1823
    %v1827 = vmul.f32 %v1819, %v1823
    %v1828 = vlaneseq
    %v1829 = vshrl.u32 %v1828, 7
    %v1830 = vsub.s32 0, %v1829
    %v1831 = vrot.slane %v1767, %v1830
    %v1832 = vadd.f32 %v1824, %v1831
    %v1833 = vadd.f32 %v1825, %v1831
    %v1834 = vadd.f32 %v1826, %v1831
    %v1835 = vadd.f32 %v1827, %v1831
    %v1836 = vld [vmem:[#allocation7 + $0xb0] sm:$0xff]
    %v1837 = vld [vmem:[#allocation7 + $0xb8] sm:$0xff]
    %v1838 = vld [vmem:[#allocation7 + $0xc0] sm:$0xff]
    %v1839 = vld [vmem:[#allocation7 + $0xc8] sm:$0xff]
    %v1840 = vld [vmem:[#allocation9 + $0x9] sm:$0x1]
    %v1841 = vlaneseq
    %v1842 = vshrl.u32 %v1841, 7
    %v1843 = vsub.s32 0, %v1842
    %v1844 = vrot.slane %v1840, %v1843
    %v1846 = vsel %vm157, %v1832, 0
    %v1849 = vsel %vm157, %v1833, 0
    %v1852 = vsel %vm157, %v1834, 0
    %v1855 = vsel %vm157, %v1835, 0
    %1857 = vmatprep.subr.mxu0 0.0
    %1858 = vmatpush1.msra.mxu0 %v1836
    %1859 = vmatprep.subr.mxu0 0.0
    %1860 = vmatpush1.msra.mxu0 %v1837
    %1861 = vmatprep.subr.mxu0 0.0
    %1862 = vmatpush1.msra.mxu0 %v1838
    %1863 = vmatprep.subr.mxu0 0.0
    %1864 = vmatpush1.msra.mxu0 %v1839
    %1865 = vmatprep.subr.mxu0 0.0
    %1866 = vmatpush1.msra.mxu0 0.0
    %1867 = vmatprep.subr.mxu0 0.0
    %1868 = vmatpush1.msra.mxu0 0.0
    %1869 = vmatprep.subr.mxu0 0.0
    %1870 = vmatpush1.msra.mxu0 0.0
    %1871 = vmatprep.subr.mxu0 0.0
    %1872 = vmatpush1.msra.mxu0 0.0
    %1873 = vmatprep.subr.mxu0 0.0
    %1874 = vmatpush1.msra.mxu0 0.0
    %1875 = vmatprep.subr.mxu0 0.0
    %1876 = vmatpush1.msra.mxu0 0.0
    %1877 = vmatprep.subr.mxu0 0.0
    %1878 = vmatpush1.msra.mxu0 0.0
    %1879 = vmatprep.subr.mxu0 0.0
    %1880 = vmatpush1.msra.mxu0 0.0
    %1881 = vmatprep.subr.mxu0 0.0
    %1882 = vmatpush1.msra.mxu0 0.0
    %1883 = vmatprep.subr.mxu0 0.0
    %1884 = vmatpush1.msra.mxu0 0.0
    %1885 = vmatprep.subr.mxu0 0.0
    %1886 = vmatpush1.msra.mxu0 0.0
    %1887 = vmatprep.subr.mxu0 0.0
    %1888 = vmatpush1.msra.mxu0 0.0
    %1889 = vmatprep.subr.mxu0 0.0
    %1890 = vmatpush1.msra.mxu0 0.0
    %1891 = vmatprep.subr.mxu0 0.0
    %1892 = vmatpush1.msra.mxu0 0.0
    %1893 = vmatprep.subr.mxu0 0.0
    %1894 = vmatpush1.msra.mxu0 0.0
    %1895 = vmatprep.subr.mxu0 0.0
    %1896 = vmatpush1.msra.mxu0 0.0
    %1897 = vmatprep.subr.mxu0 0.0
    %1898 = vmatpush1.msra.mxu0 0.0
    %1899 = vmatprep.subr.mxu0 0.0
    %1900 = vmatpush1.msra.mxu0 0.0
    %1901 = vmatprep.subr.mxu0 0.0
    %1902 = vmatpush1.msra.mxu0 0.0
    %1903 = vmatprep.subr.mxu0 0.0
    %1904 = vmatpush1.msra.mxu0 0.0
    %1905 = vmatprep.subr.mxu0 0.0
    %1906 = vmatpush1.msra.mxu0 0.0
    %1907 = vmatprep.subr.mxu0 0.0
    %1908 = vmatpush1.msra.mxu0 0.0
    %1909 = vmatprep.subr.mxu0 0.0
    %1910 = vmatpush1.msra.mxu0 0.0
    %1911 = vmatprep.subr.mxu0 0.0
    %1912 = vmatpush1.msra.mxu0 0.0
    %1913 = vmatprep.subr.mxu0 0.0
    %1914 = vmatpush1.msra.mxu0 0.0
    %1915 = vmatprep.subr.mxu0 0.0
    %1916 = vmatpush1.msra.mxu0 0.0
    %1917 = vmatprep.subr.mxu0 0.0
    %1918 = vmatpush1.msra.mxu0 0.0
    %1919 = vmatprep.subr.mxu0 0.0
    %1920 = vmatpush1.msra.mxu0 0.0
    %1921 = vmatprep.mubr.f32.mxu0 0.0
    %1922 = vmatmul.mubr.f32.gmra.mrb[0].mxu0 %v1846
    %v1923 = vpop.f32.mrb[0].mxu0
    %v1924 = vadd.f32 %v1844, %v1923
    %v1925 = vpop.f32.mrb[0].mxu0
    %1926 = vmatprep.mubr.f32.mxu0 0.0
    %1927 = vmatmul.mubr.f32.gmra.mrb[0].mxu0 %v1849
    %v1928 = vpop.f32.mrb[0].mxu0
    %v1929 = vadd.f32 %v1844, %v1928
    %v1930 = vpop.f32.mrb[0].mxu0
    %1931 = vmatprep.mubr.f32.mxu0 0.0
    %1932 = vmatmul.mubr.f32.gmra.mrb[0].mxu0 %v1852
    %v1933 = vpop.f32.mrb[0].mxu0
    %v1934 = vadd.f32 %v1844, %v1933
    %v1935 = vpop.f32.mrb[0].mxu0
    %1936 = vmatprep.mubr.f32.mxu0 0.0
    %1937 = vmatmul.mubr.f32.gmra.mrb[0].mxu0 %v1855
    %v1938 = vpop.f32.mrb[0].mxu0
    %v1939 = vadd.f32 %v1844, %v1938
    %v1940 = vpop.f32.mrb[0].mxu0
    %1941 = vdwg.mxu0
    %v1942 = vmul.f32 %v1924, 0.35355338
    %v1943 = vmul.f32 %v1929, 0.35355338
    %v1944 = vmul.f32 %v1934, 0.35355338
    %v1945 = vmul.f32 %v1939, 0.35355338
    %1947 = vrot.lane.b32.xlu0 %v1924, 96
    %v1948 = vpop.permute.xlu0 %1947
    %v1950 = vmul.f32 %v1942, %v1948
    %v1951 = vmul.f32 %v1943, %v1948
    %v1952 = vmul.f32 %v1944, %v1948
    %v1953 = vmul.f32 %v1945, %v1948
    %v1954 = vsel %vm294, %v1950, 0.0
    %1955 = vadd.xlane.f32.xlu0 %v1954
    %v1956 = vpop.xlane.xlu0 %1955
    %v1957 = vsel %vm294, %v1951, 0.0
    %1958 = vadd.xlane.f32.xlu0 %v1957
    %v1959 = vpop.xlane.xlu0 %1958
    %v1960 = vsel %vm294, %v1952, 0.0
    %1961 = vadd.xlane.f32.xlu0 %v1960
    %v1962 = vpop.xlane.xlu0 %1961
    %v1963 = vsel %vm294, %v1953, 0.0
    %1964 = vadd.xlane.f32.xlu0 %v1963
    %v1965 = vpop.xlane.xlu0 %1964
    %1967 = vrot.lane.b32.xlu0 %v1929, 96
    %v1968 = vpop.permute.xlu0 %1967
    %v1970 = vmul.f32 %v1942, %v1968
    %v1971 = vmul.f32 %v1943, %v1968
    %v1972 = vmul.f32 %v1944, %v1968
    %v1973 = vmul.f32 %v1945, %v1968
    %v1974 = vsel %vm294, %v1970, 0.0
    %1975 = vadd.xlane.f32.xlu0 %v1974
    %v1976 = vpop.xlane.xlu0 %1975
    %v1977 = vsel %vm294, %v1971, 0.0
    %1978 = vadd.xlane.f32.xlu0 %v1977
    %v1979 = vpop.xlane.xlu0 %1978
    %v1980 = vsel %vm294, %v1972, 0.0
    %1981 = vadd.xlane.f32.xlu0 %v1980
    %v1982 = vpop.xlane.xlu0 %1981
    %v1983 = vsel %vm294, %v1973, 0.0
    %1984 = vadd.xlane.f32.xlu0 %v1983
    %v1985 = vpop.xlane.xlu0 %1984
    %1987 = vrot.lane.b32.xlu0 %v1934, 96
    %v1988 = vpop.permute.xlu0 %1987
    %v1990 = vmul.f32 %v1942, %v1988
    %v1991 = vmul.f32 %v1943, %v1988
    %v1992 = vmul.f32 %v1944, %v1988
    %v1993 = vmul.f32 %v1945, %v1988
    %v1994 = vsel %vm294, %v1990, 0.0
    %1995 = vadd.xlane.f32.xlu0 %v1994
    %v1996 = vpop.xlane.xlu0 %1995
    %v1997 = vsel %vm294, %v1991, 0.0
    %1998 = vadd.xlane.f32.xlu0 %v1997
    %v1999 = vpop.xlane.xlu0 %1998
    %v2000 = vsel %vm294, %v1992, 0.0
    %2001 = vadd.xlane.f32.xlu0 %v2000
    %v2002 = vpop.xlane.xlu0 %2001
    %v2003 = vsel %vm294, %v1993, 0.0
    %2004 = vadd.xlane.f32.xlu0 %v2003
    %v2005 = vpop.xlane.xlu0 %2004
    %2007 = vrot.lane.b32.xlu0 %v1939, 96
    %v2008 = vpop.permute.xlu0 %2007
    %v2010 = vmul.f32 %v1942, %v2008
    %v2011 = vmul.f32 %v1943, %v2008
    %v2012 = vmul.f32 %v1944, %v2008
    %v2013 = vmul.f32 %v1945, %v2008
    %v2014 = vsel %vm294, %v2010, 0.0
    %2015 = vadd.xlane.f32.xlu0 %v2014
    %v2016 = vpop.xlane.xlu0 %2015
    %v2017 = vsel %vm294, %v2011, 0.0
    %2018 = vadd.xlane.f32.xlu0 %v2017
    %v2019 = vpop.xlane.xlu0 %2018
    %v2020 = vsel %vm294, %v2012, 0.0
    %2021 = vadd.xlane.f32.xlu0 %v2020
    %v2022 = vpop.xlane.xlu0 %2021
    %v2023 = vsel %vm294, %v2013, 0.0
    %2024 = vadd.xlane.f32.xlu0 %v2023
    %v2025 = vpop.xlane.xlu0 %2024
    %v2026 = vsel %vm367, %v1956, %v1976
    %v2027 = vsel %vm367, %v1959, %v1979
    %v2028 = vsel %vm367, %v1962, %v1982
    %v2029 = vsel %vm367, %v1965, %v1985
    %v2030 = vsel %vm372, %v2026, %v1996
    %v2031 = vsel %vm372, %v2027, %v1999
    %v2032 = vsel %vm372, %v2028, %v2002
    %v2033 = vsel %vm372, %v2029, %v2005
    %v2034 = vsel %vm377, %v2030, %v2016
    %v2035 = vsel %vm377, %v2031, %v2019
    %v2036 = vsel %vm377, %v2032, %v2022
    %v2037 = vsel %vm377, %v2033, %v2025
    %v2038 = vsel %vm382, %v2034, -inf
    %2039 = vmax.xlane.f32.xlu0 %v2038
    %v2040 = vpop.xlane.xlu0 %2039
    %v2041 = vsel %vm382, %v2035, -inf
    %2042 = vmax.xlane.f32.xlu0 %v2041
    %v2043 = vpop.xlane.xlu0 %2042
    %v2044 = vsel %vm382, %v2036, -inf
    %2045 = vmax.xlane.f32.xlu0 %v2044
    %v2046 = vpop.xlane.xlu0 %2045
    %v2047 = vsel %vm382, %v2037, -inf
    %2048 = vmax.xlane.f32.xlu0 %v2047
    %v2049 = vpop.xlane.xlu0 %2048
    %v2050 = vsub.f32 %v2034, %v2040
    %v2051 = vsub.f32 %v2035, %v2043
    %v2052 = vsub.f32 %v2036, %v2046
    %v2053 = vsub.f32 %v2037, %v2049
    %v2054 = vmul.f32 %v2050, 1.442695
    %v2055 = vpow.pop %v2054
    %v2056 = vmul.f32 %v2051, 1.442695
    %v2057 = vpow.pop %v2056
    %v2058 = vmul.f32 %v2052, 1.442695
    %v2059 = vpow.pop %v2058
    %v2060 = vmul.f32 %v2053, 1.442695
    %v2061 = vpow.pop %v2060
    %v2062 = vsel %vm382, %v2055, 0.0
    %2063 = vadd.xlane.f32.xlu0 %v2062
    %v2064 = vpop.xlane.xlu0 %2063
    %v2065 = vsel %vm382, %v2057, 0.0
    %2066 = vadd.xlane.f32.xlu0 %v2065
    %v2067 = vpop.xlane.xlu0 %2066
    %v2068 = vsel %vm382, %v2059, 0.0
    %2069 = vadd.xlane.f32.xlu0 %v2068
    %v2070 = vpop.xlane.xlu0 %2069
    %v2071 = vsel %vm382, %v2061, 0.0
    %2072 = vadd.xlane.f32.xlu0 %v2071
    %v2073 = vpop.xlane.xlu0 %2072
    %v2074 = vrcp.pop %v2064
    %v2075 = vrcp.pop %v2067
    %v2076 = vrcp.pop %v2070
    %v2077 = vrcp.pop %v2073
    %v2078 = vmul.f32 %v2055, %v2074
    %v2079 = vmul.f32 %v2057, %v2075
    %v2080 = vmul.f32 %v2059, %v2076
    %v2081 = vmul.f32 %v2061, %v2077
    %2083 = vset.pattern.permute.xlu0 0
    %2084 = vperm.xlu0 %2083, %v2078
    %v2085 = vpop.permute.xlu0 %2084
    %2088 = vset.pattern.permute.xlu0 0
    %2089 = vperm.xlu0 %2088, %v2079
    %v2090 = vpop.permute.xlu0 %2089
    %2093 = vset.pattern.permute.xlu0 0
    %2094 = vperm.xlu0 %2093, %v2080
    %v2095 = vpop.permute.xlu0 %2094
    %2098 = vset.pattern.permute.xlu0 0
    %2099 = vperm.xlu0 %2098, %v2081
    %v2100 = vpop.permute.xlu0 %2099
    %v2102 = vmul.f32 %v2085, %v1924
    %v2103 = vmul.f32 %v2090, %v1924
    %v2104 = vmul.f32 %v2095, %v1924
    %v2105 = vmul.f32 %v2100, %v1924
    %2106 = vset.pattern.permute.xlu0 1
    %2107 = vperm.xlu0 %2106, %v2078
    %v2108 = vpop.permute.xlu0 %2107
    %2110 = vset.pattern.permute.xlu0 1
    %2111 = vperm.xlu0 %2110, %v2079
    %v2112 = vpop.permute.xlu0 %2111
    %2114 = vset.pattern.permute.xlu0 1
    %2115 = vperm.xlu0 %2114, %v2080
    %v2116 = vpop.permute.xlu0 %2115
    %2118 = vset.pattern.permute.xlu0 1
    %2119 = vperm.xlu0 %2118, %v2081
    %v2120 = vpop.permute.xlu0 %2119
    %v2122 = vmul.f32 %v2108, %v1929
    %v2123 = vmul.f32 %v2112, %v1929
    %v2124 = vmul.f32 %v2116, %v1929
    %v2125 = vmul.f32 %v2120, %v1929
    %v2126 = vadd.f32 %v2102, %v2122
    %v2127 = vadd.f32 %v2103, %v2123
    %v2128 = vadd.f32 %v2104, %v2124
    %v2129 = vadd.f32 %v2105, %v2125
    %2130 = vset.pattern.permute.xlu0 2
    %2131 = vperm.xlu0 %2130, %v2078
    %v2132 = vpop.permute.xlu0 %2131
    %2134 = vset.pattern.permute.xlu0 2
    %2135 = vperm.xlu0 %2134, %v2079
    %v2136 = vpop.permute.xlu0 %2135
    %2138 = vset.pattern.permute.xlu0 2
    %2139 = vperm.xlu0 %2138, %v2080
    %v2140 = vpop.permute.xlu0 %2139
    %2142 = vset.pattern.permute.xlu0 2
    %2143 = vperm.xlu0 %2142, %v2081
    %v2144 = vpop.permute.xlu0 %2143
    %v2146 = vmul.f32 %v2132, %v1934
    %v2147 = vmul.f32 %v2136, %v1934
    %v2148 = vmul.f32 %v2140, %v1934
    %v2149 = vmul.f32 %v2144, %v1934
    %v2150 = vadd.f32 %v2126, %v2146
    %v2151 = vadd.f32 %v2127, %v2147
    %v2152 = vadd.f32 %v2128, %v2148
    %v2153 = vadd.f32 %v2129, %v2149
    %2154 = vset.pattern.permute.xlu0 3
    %2155 = vperm.xlu0 %2154, %v2078
    %v2156 = vpop.permute.xlu0 %2155
    %2158 = vset.pattern.permute.xlu0 3
    %2159 = vperm.xlu0 %2158, %v2079
    %v2160 = vpop.permute.xlu0 %2159
    %2162 = vset.pattern.permute.xlu0 3
    %2163 = vperm.xlu0 %2162, %v2080
    %v2164 = vpop.permute.xlu0 %2163
    %2166 = vset.pattern.permute.xlu0 3
    %2167 = vperm.xlu0 %2166, %v2081
    %v2168 = vpop.permute.xlu0 %2167
    %v2170 = vmul.f32 %v2156, %v1939
    %v2171 = vmul.f32 %v2160, %v1939
    %v2172 = vmul.f32 %v2164, %v1939
    %v2173 = vmul.f32 %v2168, %v1939
    %v2174 = vadd.f32 %v2150, %v2170
    %v2175 = vadd.f32 %v2151, %v2171
    %v2176 = vadd.f32 %v2152, %v2172
    %v2177 = vadd.f32 %v2153, %v2173
    %2182 = vrot.lane.b32.xlu0 %v1950, 120
    %v2183 = vpop.permute.xlu0 %2182
    %2184 = vrot.lane.b32.xlu0 %v1951, 120
    %v2185 = vpop.permute.xlu0 %2184
    %2186 = vrot.lane.b32.xlu0 %v1952, 120
    %v2187 = vpop.permute.xlu0 %2186
    %2188 = vrot.lane.b32.xlu0 %v1953, 120
    %v2189 = vpop.permute.xlu0 %2188
    %v2194 = vsel %vm294, %v2183, 0.0
    %2195 = vadd.xlane.f32.xlu0 %v2194
    %v2196 = vpop.xlane.xlu0 %2195
    %v2197 = vsel %vm294, %v2185, 0.0
    %2198 = vadd.xlane.f32.xlu0 %v2197
    %v2199 = vpop.xlane.xlu0 %2198
    %v2200 = vsel %vm294, %v2187, 0.0
    %2201 = vadd.xlane.f32.xlu0 %v2200
    %v2202 = vpop.xlane.xlu0 %2201
    %v2203 = vsel %vm294, %v2189, 0.0
    %2204 = vadd.xlane.f32.xlu0 %v2203
    %v2205 = vpop.xlane.xlu0 %2204
    %2210 = vrot.lane.b32.xlu0 %v1970, 120
    %v2211 = vpop.permute.xlu0 %2210
    %2212 = vrot.lane.b32.xlu0 %v1971, 120
    %v2213 = vpop.permute.xlu0 %2212
    %2214 = vrot.lane.b32.xlu0 %v1972, 120
    %v2215 = vpop.permute.xlu0 %2214
    %2216 = vrot.lane.b32.xlu0 %v1973, 120
    %v2217 = vpop.permute.xlu0 %2216
    %v2222 = vsel %vm294, %v2211, 0.0
    %2223 = vadd.xlane.f32.xlu0 %v2222
    %v2224 = vpop.xlane.xlu0 %2223
    %v2225 = vsel %vm294, %v2213, 0.0
    %2226 = vadd.xlane.f32.xlu0 %v2225
    %v2227 = vpop.xlane.xlu0 %2226
    %v2228 = vsel %vm294, %v2215, 0.0
    %2229 = vadd.xlane.f32.xlu0 %v2228
    %v2230 = vpop.xlane.xlu0 %2229
    %v2231 = vsel %vm294, %v2217, 0.0
    %2232 = vadd.xlane.f32.xlu0 %v2231
    %v2233 = vpop.xlane.xlu0 %2232
    %2238 = vrot.lane.b32.xlu0 %v1990, 120
    %v2239 = vpop.permute.xlu0 %2238
    %2240 = vrot.lane.b32.xlu0 %v1991, 120
    %v2241 = vpop.permute.xlu0 %2240
    %2242 = vrot.lane.b32.xlu0 %v1992, 120
    %v2243 = vpop.permute.xlu0 %2242
    %2244 = vrot.lane.b32.xlu0 %v1993, 120
    %v2245 = vpop.permute.xlu0 %2244
    %v2250 = vsel %vm294, %v2239, 0.0
    %2251 = vadd.xlane.f32.xlu0 %v2250
    %v2252 = vpop.xlane.xlu0 %2251
    %v2253 = vsel %vm294, %v2241, 0.0
    %2254 = vadd.xlane.f32.xlu0 %v2253
    %v2255 = vpop.xlane.xlu0 %2254
    %v2256 = vsel %vm294, %v2243, 0.0
    %2257 = vadd.xlane.f32.xlu0 %v2256
    %v2258 = vpop.xlane.xlu0 %2257
    %v2259 = vsel %vm294, %v2245, 0.0
    %2260 = vadd.xlane.f32.xlu0 %v2259
    %v2261 = vpop.xlane.xlu0 %2260
    %2266 = vrot.lane.b32.xlu0 %v2010, 120
    %v2267 = vpop.permute.xlu0 %2266
    %2268 = vrot.lane.b32.xlu0 %v2011, 120
    %v2269 = vpop.permute.xlu0 %2268
    %2270 = vrot.lane.b32.xlu0 %v2012, 120
    %v2271 = vpop.permute.xlu0 %2270
    %2272 = vrot.lane.b32.xlu0 %v2013, 120
    %v2273 = vpop.permute.xlu0 %2272
    %v2278 = vsel %vm294, %v2267, 0.0
    %2279 = vadd.xlane.f32.xlu0 %v2278
    %v2280 = vpop.xlane.xlu0 %2279
    %v2281 = vsel %vm294, %v2269, 0.0
    %2282 = vadd.xlane.f32.xlu0 %v2281
    %v2283 = vpop.xlane.xlu0 %2282
    %v2284 = vsel %vm294, %v2271, 0.0
    %2285 = vadd.xlane.f32.xlu0 %v2284
    %v2286 = vpop.xlane.xlu0 %2285
    %v2287 = vsel %vm294, %v2273, 0.0
    %2288 = vadd.xlane.f32.xlu0 %v2287
    %v2289 = vpop.xlane.xlu0 %2288
    %v2290 = vsel %vm367, %v2196, %v2224
    %v2291 = vsel %vm367, %v2199, %v2227
    %v2292 = vsel %vm367, %v2202, %v2230
    %v2293 = vsel %vm367, %v2205, %v2233
    %v2294 = vsel %vm372, %v2290, %v2252
    %v2295 = vsel %vm372, %v2291, %v2255
    %v2296 = vsel %vm372, %v2292, %v2258
    %v2297 = vsel %vm372, %v2293, %v2261
    %v2298 = vsel %vm377, %v2294, %v2280
    %v2299 = vsel %vm377, %v2295, %v2283
    %v2300 = vsel %vm377, %v2296, %v2286
    %v2301 = vsel %vm377, %v2297, %v2289
    %v2302 = vsel %vm382, %v2298, -inf
    %2303 = vmax.xlane.f32.xlu0 %v2302
    %v2304 = vpop.xlane.xlu0 %2303
    %v2305 = vsel %vm382, %v2299, -inf
    %2306 = vmax.xlane.f32.xlu0 %v2305
    %v2307 = vpop.xlane.xlu0 %2306
    %v2308 = vsel %vm382, %v2300, -inf
    %2309 = vmax.xlane.f32.xlu0 %v2308
    %v2310 = vpop.xlane.xlu0 %2309
    %v2311 = vsel %vm382, %v2301, -inf
    %2312 = vmax.xlane.f32.xlu0 %v2311
    %v2313 = vpop.xlane.xlu0 %2312
    %v2314 = vsub.f32 %v2298, %v2304
    %v2315 = vsub.f32 %v2299, %v2307
    %v2316 = vsub.f32 %v2300, %v2310
    %v2317 = vsub.f32 %v2301, %v2313
    %v2318 = vmul.f32 %v2314, 1.442695
    %v2319 = vpow.pop %v2318
    %v2320 = vmul.f32 %v2315, 1.442695
    %v2321 = vpow.pop %v2320
    %v2322 = vmul.f32 %v2316, 1.442695
    %v2323 = vpow.pop %v2322
    %v2324 = vmul.f32 %v2317, 1.442695
    %v2325 = vpow.pop %v2324
    %v2326 = vsel %vm382, %v2319, 0.0
    %2327 = vadd.xlane.f32.xlu0 %v2326
    %v2328 = vpop.xlane.xlu0 %2327
    %v2329 = vsel %vm382, %v2321, 0.0
    %2330 = vadd.xlane.f32.xlu0 %v2329
    %v2331 = vpop.xlane.xlu0 %2330
    %v2332 = vsel %vm382, %v2323, 0.0
    %2333 = vadd.xlane.f32.xlu0 %v2332
    %v2334 = vpop.xlane.xlu0 %2333
    %v2335 = vsel %vm382, %v2325, 0.0
    %2336 = vadd.xlane.f32.xlu0 %v2335
    %v2337 = vpop.xlane.xlu0 %2336
    %v2338 = vrcp.pop %v2328
    %v2339 = vrcp.pop %v2331
    %v2340 = vrcp.pop %v2334
    %v2341 = vrcp.pop %v2337
    %v2342 = vmul.f32 %v2319, %v2338
    %v2343 = vmul.f32 %v2321, %v2339
    %v2344 = vmul.f32 %v2323, %v2340
    %v2345 = vmul.f32 %v2325, %v2341
    %2347 = vset.pattern.permute.xlu0 0
    %2348 = vperm.xlu0 %2347, %v2342
    %v2349 = vpop.permute.xlu0 %2348
    %2352 = vset.pattern.permute.xlu0 0
    %2353 = vperm.xlu0 %2352, %v2343
    %v2354 = vpop.permute.xlu0 %2353
    %2357 = vset.pattern.permute.xlu0 0
    %2358 = vperm.xlu0 %2357, %v2344
    %v2359 = vpop.permute.xlu0 %2358
    %2362 = vset.pattern.permute.xlu0 0
    %2363 = vperm.xlu0 %2362, %v2345
    %v2364 = vpop.permute.xlu0 %2363
    %v2366 = vmul.f32 %v2349, %v1924
    %v2367 = vmul.f32 %v2354, %v1924
    %v2368 = vmul.f32 %v2359, %v1924
    %v2369 = vmul.f32 %v2364, %v1924
    %2370 = vset.pattern.permute.xlu0 1
    %2371 = vperm.xlu0 %2370, %v2342
    %v2372 = vpop.permute.xlu0 %2371
    %2374 = vset.pattern.permute.xlu0 1
    %2375 = vperm.xlu0 %2374, %v2343
    %v2376 = vpop.permute.xlu0 %2375
    %2378 = vset.pattern.permute.xlu0 1
    %2379 = vperm.xlu0 %2378, %v2344
    %v2380 = vpop.permute.xlu0 %2379
    %2382 = vset.pattern.permute.xlu0 1
    %2383 = vperm.xlu0 %2382, %v2345
    %v2384 = vpop.permute.xlu0 %2383
    %v2386 = vmul.f32 %v2372, %v1929
    %v2387 = vmul.f32 %v2376, %v1929
    %v2388 = vmul.f32 %v2380, %v1929
    %v2389 = vmul.f32 %v2384, %v1929
    %v2390 = vadd.f32 %v2366, %v2386
    %v2391 = vadd.f32 %v2367, %v2387
    %v2392 = vadd.f32 %v2368, %v2388
    %v2393 = vadd.f32 %v2369, %v2389
    %2394 = vset.pattern.permute.xlu0 2
    %2395 = vperm.xlu0 %2394, %v2342
    %v2396 = vpop.permute.xlu0 %2395
    %2398 = vset.pattern.permute.xlu0 2
    %2399 = vperm.xlu0 %2398, %v2343
    %v2400 = vpop.permute.xlu0 %2399
    %2402 = vset.pattern.permute.xlu0 2
    %2403 = vperm.xlu0 %2402, %v2344
    %v2404 = vpop.permute.xlu0 %2403
    %2406 = vset.pattern.permute.xlu0 2
    %2407 = vperm.xlu0 %2406, %v2345
    %v2408 = vpop.permute.xlu0 %2407
    %v2410 = vmul.f32 %v2396, %v1934
    %v2411 = vmul.f32 %v2400, %v1934
    %v2412 = vmul.f32 %v2404, %v1934
    %v2413 = vmul.f32 %v2408, %v1934
    %v2414 = vadd.f32 %v2390, %v2410
    %v2415 = vadd.f32 %v2391, %v2411
    %v2416 = vadd.f32 %v2392, %v2412
    %v2417 = vadd.f32 %v2393, %v2413
    %2418 = vset.pattern.permute.xlu0 3
    %2419 = vperm.xlu0 %2418, %v2342
    %v2420 = vpop.permute.xlu0 %2419
    %2422 = vset.pattern.permute.xlu0 3
    %2423 = vperm.xlu0 %2422, %v2343
    %v2424 = vpop.permute.xlu0 %2423
    %2426 = vset.pattern.permute.xlu0 3
    %2427 = vperm.xlu0 %2426, %v2344
    %v2428 = vpop.permute.xlu0 %2427
    %2430 = vset.pattern.permute.xlu0 3
    %2431 = vperm.xlu0 %2430, %v2345
    %v2432 = vpop.permute.xlu0 %2431
    %v2434 = vmul.f32 %v2420, %v1939
    %v2435 = vmul.f32 %v2424, %v1939
    %v2436 = vmul.f32 %v2428, %v1939
    %v2437 = vmul.f32 %v2432, %v1939
    %v2438 = vadd.f32 %v2414, %v2434
    %v2439 = vadd.f32 %v2415, %v2435
    %v2440 = vadd.f32 %v2416, %v2436
    %v2441 = vadd.f32 %v2417, %v2437
    %2442 = vrot.lane.b32.xlu0 %v1950, 112
    %v2443 = vpop.permute.xlu0 %2442
    %2444 = vrot.lane.b32.xlu0 %v1951, 112
    %v2445 = vpop.permute.xlu0 %2444
    %2446 = vrot.lane.b32.xlu0 %v1952, 112
    %v2447 = vpop.permute.xlu0 %2446
    %2448 = vrot.lane.b32.xlu0 %v1953, 112
    %v2449 = vpop.permute.xlu0 %2448
    %v2454 = vsel %vm294, %v2443, 0.0
    %2455 = vadd.xlane.f32.xlu0 %v2454
    %v2456 = vpop.xlane.xlu0 %2455
    %v2457 = vsel %vm294, %v2445, 0.0
    %2458 = vadd.xlane.f32.xlu0 %v2457
    %v2459 = vpop.xlane.xlu0 %2458
    %v2460 = vsel %vm294, %v2447, 0.0
    %2461 = vadd.xlane.f32.xlu0 %v2460
    %v2462 = vpop.xlane.xlu0 %2461
    %v2463 = vsel %vm294, %v2449, 0.0
    %2464 = vadd.xlane.f32.xlu0 %v2463
    %v2465 = vpop.xlane.xlu0 %2464
    %2466 = vrot.lane.b32.xlu0 %v1970, 112
    %v2467 = vpop.permute.xlu0 %2466
    %2468 = vrot.lane.b32.xlu0 %v1971, 112
    %v2469 = vpop.permute.xlu0 %2468
    %2470 = vrot.lane.b32.xlu0 %v1972, 112
    %v2471 = vpop.permute.xlu0 %2470
    %2472 = vrot.lane.b32.xlu0 %v1973, 112
    %v2473 = vpop.permute.xlu0 %2472
    %v2478 = vsel %vm294, %v2467, 0.0
    %2479 = vadd.xlane.f32.xlu0 %v2478
    %v2480 = vpop.xlane.xlu0 %2479
    %v2481 = vsel %vm294, %v2469, 0.0
    %2482 = vadd.xlane.f32.xlu0 %v2481
    %v2483 = vpop.xlane.xlu0 %2482
    %v2484 = vsel %vm294, %v2471, 0.0
    %2485 = vadd.xlane.f32.xlu0 %v2484
    %v2486 = vpop.xlane.xlu0 %2485
    %v2487 = vsel %vm294, %v2473, 0.0
    %2488 = vadd.xlane.f32.xlu0 %v2487
    %v2489 = vpop.xlane.xlu0 %2488
    %2490 = vrot.lane.b32.xlu0 %v1990, 112
    %v2491 = vpop.permute.xlu0 %2490
    %2492 = vrot.lane.b32.xlu0 %v1991, 112
    %v2493 = vpop.permute.xlu0 %2492
    %2494 = vrot.lane.b32.xlu0 %v1992, 112
    %v2495 = vpop.permute.xlu0 %2494
    %2496 = vrot.lane.b32.xlu0 %v1993, 112
    %v2497 = vpop.permute.xlu0 %2496
    %v2502 = vsel %vm294, %v2491, 0.0
    %2503 = vadd.xlane.f32.xlu0 %v2502
    %v2504 = vpop.xlane.xlu0 %2503
    %v2505 = vsel %vm294, %v2493, 0.0
    %2506 = vadd.xlane.f32.xlu0 %v2505
    %v2507 = vpop.xlane.xlu0 %2506
    %v2508 = vsel %vm294, %v2495, 0.0
    %2509 = vadd.xlane.f32.xlu0 %v2508
    %v2510 = vpop.xlane.xlu0 %2509
    %v2511 = vsel %vm294, %v2497, 0.0
    %2512 = vadd.xlane.f32.xlu0 %v2511
    %v2513 = vpop.xlane.xlu0 %2512
    %2514 = vrot.lane.b32.xlu0 %v2010, 112
    %v2515 = vpop.permute.xlu0 %2514
    %2516 = vrot.lane.b32.xlu0 %v2011, 112
    %v2517 = vpop.permute.xlu0 %2516
    %2518 = vrot.lane.b32.xlu0 %v2012, 112
    %v2519 = vpop.permute.xlu0 %2518
    %2520 = vrot.lane.b32.xlu0 %v2013, 112
    %v2521 = vpop.permute.xlu0 %2520
    %v2526 = vsel %vm294, %v2515, 0.0
    %2527 = vadd.xlane.f32.xlu0 %v2526
    %v2528 = vpop.xlane.xlu0 %2527
    %v2529 = vsel %vm294, %v2517, 0.0
    %2530 = vadd.xlane.f32.xlu0 %v2529
    %v2531 = vpop.xlane.xlu0 %2530
    %v2532 = vsel %vm294, %v2519, 0.0
    %2533 = vadd.xlane.f32.xlu0 %v2532
    %v2534 = vpop.xlane.xlu0 %2533
    %v2535 = vsel %vm294, %v2521, 0.0
    %2536 = vadd.xlane.f32.xlu0 %v2535
    %v2537 = vpop.xlane.xlu0 %2536
    %v2538 = vsel %vm367, %v2456, %v2480
    %v2539 = vsel %vm367, %v2459, %v2483
    %v2540 = vsel %vm367, %v2462, %v2486
    %v2541 = vsel %vm367, %v2465, %v2489
    %v2542 = vsel %vm372, %v2538, %v2504
    %v2543 = vsel %vm372, %v2539, %v2507
    %v2544 = vsel %vm372, %v2540, %v2510
    %v2545 = vsel %vm372, %v2541, %v2513
    %v2546 = vsel %vm377, %v2542, %v2528
    %v2547 = vsel %vm377, %v2543, %v2531
    %v2548 = vsel %vm377, %v2544, %v2534
    %v2549 = vsel %vm377, %v2545, %v2537
    %v2550 = vsel %vm382, %v2546, -inf
    %2551 = vmax.xlane.f32.xlu0 %v2550
    %v2552 = vpop.xlane.xlu0 %2551
    %v2553 = vsel %vm382, %v2547, -inf
    %2554 = vmax.xlane.f32.xlu0 %v2553
    %v2555 = vpop.xlane.xlu0 %2554
    %v2556 = vsel %vm382, %v2548, -inf
    %2557 = vmax.xlane.f32.xlu0 %v2556
    %v2558 = vpop.xlane.xlu0 %2557
    %v2559 = vsel %vm382, %v2549, -inf
    %2560 = vmax.xlane.f32.xlu0 %v2559
    %v2561 = vpop.xlane.xlu0 %2560
    %v2562 = vsub.f32 %v2546, %v2552
    %v2563 = vsub.f32 %v2547, %v2555
    %v2564 = vsub.f32 %v2548, %v2558
    %v2565 = vsub.f32 %v2549, %v2561
    %v2566 = vmul.f32 %v2562, 1.442695
    %v2567 = vpow.pop %v2566
    %v2568 = vmul.f32 %v2563, 1.442695
    %v2569 = vpow.pop %v2568
    %v2570 = vmul.f32 %v2564, 1.442695
    %v2571 = vpow.pop %v2570
    %v2572 = vmul.f32 %v2565, 1.442695
    %v2573 = vpow.pop %v2572
    %v2574 = vsel %vm382, %v2567, 0.0
    %2575 = vadd.xlane.f32.xlu0 %v2574
    %v2576 = vpop.xlane.xlu0 %2575
    %v2577 = vsel %vm382, %v2569, 0.0
    %2578 = vadd.xlane.f32.xlu0 %v2577
    %v2579 = vpop.xlane.xlu0 %2578
    %v2580 = vsel %vm382, %v2571, 0.0
    %2581 = vadd.xlane.f32.xlu0 %v2580
    %v2582 = vpop.xlane.xlu0 %2581
    %v2583 = vsel %vm382, %v2573, 0.0
    %2584 = vadd.xlane.f32.xlu0 %v2583
    %v2585 = vpop.xlane.xlu0 %2584
    %v2586 = vrcp.pop %v2576
    %v2587 = vrcp.pop %v2579
    %v2588 = vrcp.pop %v2582
    %v2589 = vrcp.pop %v2585
    %v2590 = vmul.f32 %v2567, %v2586
    %v2591 = vmul.f32 %v2569, %v2587
    %v2592 = vmul.f32 %v2571, %v2588
    %v2593 = vmul.f32 %v2573, %v2589
    %2595 = vset.pattern.permute.xlu0 0
    %2596 = vperm.xlu0 %2595, %v2590
    %v2597 = vpop.permute.xlu0 %2596
    %2600 = vset.pattern.permute.xlu0 0
    %2601 = vperm.xlu0 %2600, %v2591
    %v2602 = vpop.permute.xlu0 %2601
    %2605 = vset.pattern.permute.xlu0 0
    %2606 = vperm.xlu0 %2605, %v2592
    %v2607 = vpop.permute.xlu0 %2606
    %2610 = vset.pattern.permute.xlu0 0
    %2611 = vperm.xlu0 %2610, %v2593
    %v2612 = vpop.permute.xlu0 %2611
    %v2614 = vmul.f32 %v2597, %v1924
    %v2615 = vmul.f32 %v2602, %v1924
    %v2616 = vmul.f32 %v2607, %v1924
    %v2617 = vmul.f32 %v2612, %v1924
    %2618 = vset.pattern.permute.xlu0 1
    %2619 = vperm.xlu0 %2618, %v2590
    %v2620 = vpop.permute.xlu0 %2619
    %2622 = vset.pattern.permute.xlu0 1
    %2623 = vperm.xlu0 %2622, %v2591
    %v2624 = vpop.permute.xlu0 %2623
    %2626 = vset.pattern.permute.xlu0 1
    %2627 = vperm.xlu0 %2626, %v2592
    %v2628 = vpop.permute.xlu0 %2627
    %2630 = vset.pattern.permute.xlu0 1
    %2631 = vperm.xlu0 %2630, %v2593
    %v2632 = vpop.permute.xlu0 %2631
    %v2634 = vmul.f32 %v2620, %v1929
    %v2635 = vmul.f32 %v2624, %v1929
    %v2636 = vmul.f32 %v2628, %v1929
    %v2637 = vmul.f32 %v2632, %v1929
    %v2638 = vadd.f32 %v2614, %v2634
    %v2639 = vadd.f32 %v2615, %v2635
    %v2640 = vadd.f32 %v2616, %v2636
    %v2641 = vadd.f32 %v2617, %v2637
    %2642 = vset.pattern.permute.xlu0 2
    %2643 = vperm.xlu0 %2642, %v2590
    %v2644 = vpop.permute.xlu0 %2643
    %2646 = vset.pattern.permute.xlu0 2
    %2647 = vperm.xlu0 %2646, %v2591
    %v2648 = vpop.permute.xlu0 %2647
    %2650 = vset.pattern.permute.xlu0 2
    %2651 = vperm.xlu0 %2650, %v2592
    %v2652 = vpop.permute.xlu0 %2651
    %2654 = vset.pattern.permute.xlu0 2
    %2655 = vperm.xlu0 %2654, %v2593
    %v2656 = vpop.permute.xlu0 %2655
    %v2658 = vmul.f32 %v2644, %v1934
    %v2659 = vmul.f32 %v2648, %v1934
    %v2660 = vmul.f32 %v2652, %v1934
    %v2661 = vmul.f32 %v2656, %v1934
    %v2662 = vadd.f32 %v2638, %v2658
    %v2663 = vadd.f32 %v2639, %v2659
    %v2664 = vadd.f32 %v2640, %v2660
    %v2665 = vadd.f32 %v2641, %v2661
    %2666 = vset.pattern.permute.xlu0 3
    %2667 = vperm.xlu0 %2666, %v2590
    %v2668 = vpop.permute.xlu0 %2667
    %2670 = vset.pattern.permute.xlu0 3
    %2671 = vperm.xlu0 %2670, %v2591
    %v2672 = vpop.permute.xlu0 %2671
    %2674 = vset.pattern.permute.xlu0 3
    %2675 = vperm.xlu0 %2674, %v2592
    %v2676 = vpop.permute.xlu0 %2675
    %2678 = vset.pattern.permute.xlu0 3
    %2679 = vperm.xlu0 %2678, %v2593
    %v2680 = vpop.permute.xlu0 %2679
    %v2682 = vmul.f32 %v2668, %v1939
    %v2683 = vmul.f32 %v2672, %v1939
    %v2684 = vmul.f32 %v2676, %v1939
    %v2685 = vmul.f32 %v2680, %v1939
    %v2686 = vadd.f32 %v2662, %v2682
    %v2687 = vadd.f32 %v2663, %v2683
    %v2688 = vadd.f32 %v2664, %v2684
    %v2689 = vadd.f32 %v2665, %v2685
    %2690 = vrot.lane.b32.xlu0 %v1950, 104
    %v2691 = vpop.permute.xlu0 %2690
    %2692 = vrot.lane.b32.xlu0 %v1951, 104
    %v2693 = vpop.permute.xlu0 %2692
    %2694 = vrot.lane.b32.xlu0 %v1952, 104
    %v2695 = vpop.permute.xlu0 %2694
    %2696 = vrot.lane.b32.xlu0 %v1953, 104
    %v2697 = vpop.permute.xlu0 %2696
    %v2702 = vsel %vm294, %v2691, 0.0
    %2703 = vadd.xlane.f32.xlu0 %v2702
    %v2704 = vpop.xlane.xlu0 %2703
    %v2705 = vsel %vm294, %v2693, 0.0
    %2706 = vadd.xlane.f32.xlu0 %v2705
    %v2707 = vpop.xlane.xlu0 %2706
    %v2708 = vsel %vm294, %v2695, 0.0
    %2709 = vadd.xlane.f32.xlu0 %v2708
    %v2710 = vpop.xlane.xlu0 %2709
    %v2711 = vsel %vm294, %v2697, 0.0
    %2712 = vadd.xlane.f32.xlu0 %v2711
    %v2713 = vpop.xlane.xlu0 %2712
    %2714 = vrot.lane.b32.xlu0 %v1970, 104
    %v2715 = vpop.permute.xlu0 %2714
    %2716 = vrot.lane.b32.xlu0 %v1971, 104
    %v2717 = vpop.permute.xlu0 %2716
    %2718 = vrot.lane.b32.xlu0 %v1972, 104
    %v2719 = vpop.permute.xlu0 %2718
    %2720 = vrot.lane.b32.xlu0 %v1973, 104
    %v2721 = vpop.permute.xlu0 %2720
    %v2726 = vsel %vm294, %v2715, 0.0
    %2727 = vadd.xlane.f32.xlu0 %v2726
    %v2728 = vpop.xlane.xlu0 %2727
    %v2729 = vsel %vm294, %v2717, 0.0
    %2730 = vadd.xlane.f32.xlu0 %v2729
    %v2731 = vpop.xlane.xlu0 %2730
    %v2732 = vsel %vm294, %v2719, 0.0
    %2733 = vadd.xlane.f32.xlu0 %v2732
    %v2734 = vpop.xlane.xlu0 %2733
    %v2735 = vsel %vm294, %v2721, 0.0
    %2736 = vadd.xlane.f32.xlu0 %v2735
    %v2737 = vpop.xlane.xlu0 %2736
    %2738 = vrot.lane.b32.xlu0 %v1990, 104
    %v2739 = vpop.permute.xlu0 %2738
    %2740 = vrot.lane.b32.xlu0 %v1991, 104
    %v2741 = vpop.permute.xlu0 %2740
    %2742 = vrot.lane.b32.xlu0 %v1992, 104
    %v2743 = vpop.permute.xlu0 %2742
    %2744 = vrot.lane.b32.xlu0 %v1993, 104
    %v2745 = vpop.permute.xlu0 %2744
    %v2750 = vsel %vm294, %v2739, 0.0
    %2751 = vadd.xlane.f32.xlu0 %v2750
    %v2752 = vpop.xlane.xlu0 %2751
    %v2753 = vsel %vm294, %v2741, 0.0
    %2754 = vadd.xlane.f32.xlu0 %v2753
    %v2755 = vpop.xlane.xlu0 %2754
    %v2756 = vsel %vm294, %v2743, 0.0
    %2757 = vadd.xlane.f32.xlu0 %v2756
    %v2758 = vpop.xlane.xlu0 %2757
    %v2759 = vsel %vm294, %v2745, 0.0
    %2760 = vadd.xlane.f32.xlu0 %v2759
    %v2761 = vpop.xlane.xlu0 %2760
    %2762 = vrot.lane.b32.xlu0 %v2010, 104
    %v2763 = vpop.permute.xlu0 %2762
    %2764 = vrot.lane.b32.xlu0 %v2011, 104
    %v2765 = vpop.permute.xlu0 %2764
    %2766 = vrot.lane.b32.xlu0 %v2012, 104
    %v2767 = vpop.permute.xlu0 %2766
    %2768 = vrot.lane.b32.xlu0 %v2013, 104
    %v2769 = vpop.permute.xlu0 %2768
    %v2774 = vsel %vm294, %v2763, 0.0
    %2775 = vadd.xlane.f32.xlu0 %v2774
    %v2776 = vpop.xlane.xlu0 %2775
    %v2777 = vsel %vm294, %v2765, 0.0
    %2778 = vadd.xlane.f32.xlu0 %v2777
    %v2779 = vpop.xlane.xlu0 %2778
    %v2780 = vsel %vm294, %v2767, 0.0
    %2781 = vadd.xlane.f32.xlu0 %v2780
    %v2782 = vpop.xlane.xlu0 %2781
    %v2783 = vsel %vm294, %v2769, 0.0
    %2784 = vadd.xlane.f32.xlu0 %v2783
    %v2785 = vpop.xlane.xlu0 %2784
    %v2786 = vsel %vm367, %v2704, %v2728
    %v2787 = vsel %vm367, %v2707, %v2731
    %v2788 = vsel %vm367, %v2710, %v2734
    %v2789 = vsel %vm367, %v2713, %v2737
    %v2790 = vsel %vm372, %v2786, %v2752
    %v2791 = vsel %vm372, %v2787, %v2755
    %v2792 = vsel %vm372, %v2788, %v2758
    %v2793 = vsel %vm372, %v2789, %v2761
    %v2794 = vsel %vm377, %v2790, %v2776
    %v2795 = vsel %vm377, %v2791, %v2779
    %v2796 = vsel %vm377, %v2792, %v2782
    %v2797 = vsel %vm377, %v2793, %v2785
    %v2798 = vsel %vm382, %v2794, -inf
    %2799 = vmax.xlane.f32.xlu0 %v2798
    %v2800 = vpop.xlane.xlu0 %2799
    %v2801 = vsel %vm382, %v2795, -inf
    %2802 = vmax.xlane.f32.xlu0 %v2801
    %v2803 = vpop.xlane.xlu0 %2802
    %v2804 = vsel %vm382, %v2796, -inf
    %2805 = vmax.xlane.f32.xlu0 %v2804
    %v2806 = vpop.xlane.xlu0 %2805
    %v2807 = vsel %vm382, %v2797, -inf
    %2808 = vmax.xlane.f32.xlu0 %v2807
    %v2809 = vpop.xlane.xlu0 %2808
    %v2810 = vsub.f32 %v2794, %v2800
    %v2811 = vsub.f32 %v2795, %v2803
    %v2812 = vsub.f32 %v2796, %v2806
    %v2813 = vsub.f32 %v2797, %v2809
    %v2814 = vmul.f32 %v2810, 1.442695
    %v2815 = vpow.pop %v2814
    %v2816 = vmul.f32 %v2811, 1.442695
    %v2817 = vpow.pop %v2816
    %v2818 = vmul.f32 %v2812, 1.442695
    %v2819 = vpow.pop %v2818
    %v2820 = vmul.f32 %v2813, 1.442695
    %v2821 = vpow.pop %v2820
    %v2822 = vsel %vm382, %v2815, 0.0
    %2823 = vadd.xlane.f32.xlu0 %v2822
    %v2824 = vpop.xlane.xlu0 %2823
    %v2825 = vsel %vm382, %v2817, 0.0
    %2826 = vadd.xlane.f32.xlu0 %v2825
    %v2827 = vpop.xlane.xlu0 %2826
    %v2828 = vsel %vm382, %v2819, 0.0
    %2829 = vadd.xlane.f32.xlu0 %v2828
    %v2830 = vpop.xlane.xlu0 %2829
    %v2831 = vsel %vm382, %v2821, 0.0
    %2832 = vadd.xlane.f32.xlu0 %v2831
    %v2833 = vpop.xlane.xlu0 %2832
    %v2834 = vrcp.pop %v2824
    %v2835 = vrcp.pop %v2827
    %v2836 = vrcp.pop %v2830
    %v2837 = vrcp.pop %v2833
    %v2838 = vmul.f32 %v2815, %v2834
    %v2839 = vmul.f32 %v2817, %v2835
    %v2840 = vmul.f32 %v2819, %v2836
    %v2841 = vmul.f32 %v2821, %v2837
    %2843 = vset.pattern.permute.xlu0 0
    %2844 = vperm.xlu0 %2843, %v2838
    %v2845 = vpop.permute.xlu0 %2844
    %2848 = vset.pattern.permute.xlu0 0
    %2849 = vperm.xlu0 %2848, %v2839
    %v2850 = vpop.permute.xlu0 %2849
    %2853 = vset.pattern.permute.xlu0 0
    %2854 = vperm.xlu0 %2853, %v2840
    %v2855 = vpop.permute.xlu0 %2854
    %2858 = vset.pattern.permute.xlu0 0
    %2859 = vperm.xlu0 %2858, %v2841
    %v2860 = vpop.permute.xlu0 %2859
    %v2862 = vmul.f32 %v2845, %v1924
    %v2863 = vmul.f32 %v2850, %v1924
    %v2864 = vmul.f32 %v2855, %v1924
    %v2865 = vmul.f32 %v2860, %v1924
    %2866 = vset.pattern.permute.xlu0 1
    %2867 = vperm.xlu0 %2866, %v2838
    %v2868 = vpop.permute.xlu0 %2867
    %2870 = vset.pattern.permute.xlu0 1
    %2871 = vperm.xlu0 %2870, %v2839
    %v2872 = vpop.permute.xlu0 %2871
    %2874 = vset.pattern.permute.xlu0 1
    %2875 = vperm.xlu0 %2874, %v2840
    %v2876 = vpop.permute.xlu0 %2875
    %2878 = vset.pattern.permute.xlu0 1
    %2879 = vperm.xlu0 %2878, %v2841
    %v2880 = vpop.permute.xlu0 %2879
    %v2882 = vmul.f32 %v2868, %v1929
    %v2883 = vmul.f32 %v2872, %v1929
    %v2884 = vmul.f32 %v2876, %v1929
    %v2885 = vmul.f32 %v2880, %v1929
    %v2886 = vadd.f32 %v2862, %v2882
    %v2887 = vadd.f32 %v2863, %v2883
    %v2888 = vadd.f32 %v2864, %v2884
    %v2889 = vadd.f32 %v2865, %v2885
    %2890 = vset.pattern.permute.xlu0 2
    %2891 = vperm.xlu0 %2890, %v2838
    %v2892 = vpop.permute.xlu0 %2891
    %2894 = vset.pattern.permute.xlu0 2
    %2895 = vperm.xlu0 %2894, %v2839
    %v2896 = vpop.permute.xlu0 %2895
    %2898 = vset.pattern.permute.xlu0 2
    %2899 = vperm.xlu0 %2898, %v2840
    %v2900 = vpop.permute.xlu0 %2899
    %2902 = vset.pattern.permute.xlu0 2
    %2903 = vperm.xlu0 %2902, %v2841
    %v2904 = vpop.permute.xlu0 %2903
    %v2906 = vmul.f32 %v2892, %v1934
    %v2907 = vmul.f32 %v2896, %v1934
    %v2908 = vmul.f32 %v2900, %v1934
    %v2909 = vmul.f32 %v2904, %v1934
    %v2910 = vadd.f32 %v2886, %v2906
    %v2911 = vadd.f32 %v2887, %v2907
    %v2912 = vadd.f32 %v2888, %v2908
    %v2913 = vadd.f32 %v2889, %v2909
    %2914 = vset.pattern.permute.xlu0 3
    %2915 = vperm.xlu0 %2914, %v2838
    %v2916 = vpop.permute.xlu0 %2915
    %2918 = vset.pattern.permute.xlu0 3
    %2919 = vperm.xlu0 %2918, %v2839
    %v2920 = vpop.permute.xlu0 %2919
    %2922 = vset.pattern.permute.xlu0 3
    %2923 = vperm.xlu0 %2922, %v2840
    %v2924 = vpop.permute.xlu0 %2923
    %2926 = vset.pattern.permute.xlu0 3
    %2927 = vperm.xlu0 %2926, %v2841
    %v2928 = vpop.permute.xlu0 %2927
    %v2930 = vmul.f32 %v2916, %v1939
    %v2931 = vmul.f32 %v2920, %v1939
    %v2932 = vmul.f32 %v2924, %v1939
    %v2933 = vmul.f32 %v2928, %v1939
    %v2934 = vadd.f32 %v2910, %v2930
    %v2935 = vadd.f32 %v2911, %v2931
    %v2936 = vadd.f32 %v2912, %v2932
    %v2937 = vadd.f32 %v2913, %v2933
    %2942 = vrot.lane.b32.xlu0 %v2174, 64
    %v2943 = vpop.permute.xlu0 %2942
    %2944 = vrot.lane.b32.xlu0 %v2175, 64
    %v2945 = vpop.permute.xlu0 %2944
    %2946 = vrot.lane.b32.xlu0 %v2176, 64
    %v2947 = vpop.permute.xlu0 %2946
    %2948 = vrot.lane.b32.xlu0 %v2177, 64
    %v2949 = vpop.permute.xlu0 %2948
    %2958 = vrot.lane.b32.xlu0 %v2438, 64
    %v2959 = vpop.permute.xlu0 %2958
    %2960 = vrot.lane.b32.xlu0 %v2439, 64
    %v2961 = vpop.permute.xlu0 %2960
    %2962 = vrot.lane.b32.xlu0 %v2440, 64
    %v2963 = vpop.permute.xlu0 %2962
    %2964 = vrot.lane.b32.xlu0 %v2441, 64
    %v2965 = vpop.permute.xlu0 %2964
    %2974 = vrot.lane.b32.xlu0 %v2686, 64
    %v2975 = vpop.permute.xlu0 %2974
    %2976 = vrot.lane.b32.xlu0 %v2687, 64
    %v2977 = vpop.permute.xlu0 %2976
    %2978 = vrot.lane.b32.xlu0 %v2688, 64
    %v2979 = vpop.permute.xlu0 %2978
    %2980 = vrot.lane.b32.xlu0 %v2689, 64
    %v2981 = vpop.permute.xlu0 %2980
    %2990 = vrot.lane.b32.xlu0 %v2934, 64
    %v2991 = vpop.permute.xlu0 %2990
    %2992 = vrot.lane.b32.xlu0 %v2935, 64
    %v2993 = vpop.permute.xlu0 %2992
    %2994 = vrot.lane.b32.xlu0 %v2936, 64
    %v2995 = vpop.permute.xlu0 %2994
    %2996 = vrot.lane.b32.xlu0 %v2937, 64
    %v2997 = vpop.permute.xlu0 %2996
    %v3002 = vsel %vm294, %v2943, %v2959
    %v3003 = vsel %vm294, %v2945, %v2961
    %v3004 = vsel %vm294, %v2947, %v2963
    %v3005 = vsel %vm294, %v2949, %v2965
    %v3006 = vsel %vm55, %v3002, %v2975
    %v3007 = vsel %vm55, %v3003, %v2977
    %v3008 = vsel %vm55, %v3004, %v2979
    %v3009 = vsel %vm55, %v3005, %v2981
    %v3010 = vsel %vm1355, %v3006, %v2991
    %v3011 = vsel %vm1355, %v3007, %v2993
    %v3012 = vsel %vm1355, %v3008, %v2995
    %v3013 = vsel %vm1355, %v3009, %v2997
    %v3014 = vld [vmem:[#allocation7 + $0xd0] sm:$0xff]
    %v3015 = vld [vmem:[#allocation7 + $0xd8] sm:$0xff]
    %v3016 = vld [vmem:[#allocation7 + $0xe0] sm:$0xff]
    %v3017 = vld [vmem:[#allocation7 + $0xe8] sm:$0xff]
    %v3018 = vld [vmem:[#allocation9 + $0xa] sm:$0x1]
    %v3019 = vlaneseq
    %v3020 = vshrl.u32 %v3019, 7
    %v3021 = vsub.s32 0, %v3020
    %v3022 = vrot.slane %v3018, %v3021
    %v3024 = vsel %vm157, %v3010, 0
    %v3027 = vsel %vm157, %v3011, 0
    %v3030 = vsel %vm157, %v3012, 0
    %v3033 = vsel %vm157, %v3013, 0
    %3035 = vmatprep.subr.mxu0 0.0
    %3036 = vmatpush1.msra.mxu0 %v3014
    %3037 = vmatprep.subr.mxu0 0.0
    %3038 = vmatpush1.msra.mxu0 %v3015
    %3039 = vmatprep.subr.mxu0 0.0
    %3040 = vmatpush1.msra.mxu0 %v3016
    %3041 = vmatprep.subr.mxu0 0.0
    %3042 = vmatpush1.msra.mxu0 %v3017
    %3043 = vmatprep.subr.mxu0 0.0
    %3044 = vmatpush1.msra.mxu0 0.0
    %3045 = vmatprep.subr.mxu0 0.0
    %3046 = vmatpush1.msra.mxu0 0.0
    %3047 = vmatprep.subr.mxu0 0.0
    %3048 = vmatpush1.msra.mxu0 0.0
    %3049 = vmatprep.subr.mxu0 0.0
    %3050 = vmatpush1.msra.mxu0 0.0
    %3051 = vmatprep.subr.mxu0 0.0
    %3052 = vmatpush1.msra.mxu0 0.0
    %3053 = vmatprep.subr.mxu0 0.0
    %3054 = vmatpush1.msra.mxu0 0.0
    %3055 = vmatprep.subr.mxu0 0.0
    %3056 = vmatpush1.msra.mxu0 0.0
    %3057 = vmatprep.subr.mxu0 0.0
    %3058 = vmatpush1.msra.mxu0 0.0
    %3059 = vmatprep.subr.mxu0 0.0
    %3060 = vmatpush1.msra.mxu0 0.0
    %3061 = vmatprep.subr.mxu0 0.0
    %3062 = vmatpush1.msra.mxu0 0.0
    %3063 = vmatprep.subr.mxu0 0.0
    %3064 = vmatpush1.msra.mxu0 0.0
    %3065 = vmatprep.subr.mxu0 0.0
    %3066 = vmatpush1.msra.mxu0 0.0
    %3067 = vmatprep.subr.mxu0 0.0
    %3068 = vmatpush1.msra.mxu0 0.0
    %3069 = vmatprep.subr.mxu0 0.0
    %3070 = vmatpush1.msra.mxu0 0.0
    %3071 = vmatprep.subr.mxu0 0.0
    %3072 = vmatpush1.msra.mxu0 0.0
    %3073 = vmatprep.subr.mxu0 0.0
    %3074 = vmatpush1.msra.mxu0 0.0
    %3075 = vmatprep.subr.mxu0 0.0
    %3076 = vmatpush1.msra.mxu0 0.0
    %3077 = vmatprep.subr.mxu0 0.0
    %3078 = vmatpush1.msra.mxu0 0.0
    %3079 = vmatprep.subr.mxu0 0.0
    %3080 = vmatpush1.msra.mxu0 0.0
    %3081 = vmatprep.subr.mxu0 0.0
    %3082 = vmatpush1.msra.mxu0 0.0
    %3083 = vmatprep.subr.mxu0 0.0
    %3084 = vmatpush1.msra.mxu0 0.0
    %3085 = vmatprep.subr.mxu0 0.0
    %3086 = vmatpush1.msra.mxu0 0.0
    %3087 = vmatprep.subr.mxu0 0.0
    %3088 = vmatpush1.msra.mxu0 0.0
    %3089 = vmatprep.subr.mxu0 0.0
    %3090 = vmatpush1.msra.mxu0 0.0
    %3091 = vmatprep.subr.mxu0 0.0
    %3092 = vmatpush1.msra.mxu0 0.0
    %3093 = vmatprep.subr.mxu0 0.0
    %3094 = vmatpush1.msra.mxu0 0.0
    %3095 = vmatprep.subr.mxu0 0.0
    %3096 = vmatpush1.msra.mxu0 0.0
    %3097 = vmatprep.subr.mxu0 0.0
    %3098 = vmatpush1.msra.mxu0 0.0
    %3099 = vmatprep.mubr.f32.mxu0 0.0
    %3100 = vmatmul.mubr.f32.gmra.mrb[0].mxu0 %v3024
    %v3101 = vpop.f32.mrb[0].mxu0
    %v3102 = vadd.f32 %v3022, %v3101
    %v3103 = vpop.f32.mrb[0].mxu0
    %3104 = vmatprep.mubr.f32.mxu0 0.0
    %3105 = vmatmul.mubr.f32.gmra.mrb[0].mxu0 %v3027
    %v3106 = vpop.f32.mrb[0].mxu0
    %v3107 = vadd.f32 %v3022, %v3106
    %v3108 = vpop.f32.mrb[0].mxu0
    %3109 = vmatprep.mubr.f32.mxu0 0.0
    %3110 = vmatmul.mubr.f32.gmra.mrb[0].mxu0 %v3030
    %v3111 = vpop.f32.mrb[0].mxu0
    %v3112 = vadd.f32 %v3022, %v3111
    %v3113 = vpop.f32.mrb[0].mxu0
    %3114 = vmatprep.mubr.f32.mxu0 0.0
    %3115 = vmatmul.mubr.f32.gmra.mrb[0].mxu0 %v3033
    %v3116 = vpop.f32.mrb[0].mxu0
    %v3117 = vadd.f32 %v3022, %v3116
    %v3118 = vpop.f32.mrb[0].mxu0
    %3119 = vdwg.mxu0
    %v3120 = vadd.f32 %v1832, %v3102
    %v3121 = vadd.f32 %v1833, %v3107
    %v3122 = vadd.f32 %v1834, %v3112
    %v3123 = vadd.f32 %v1835, %v3117
    %v3124 = vld [vmem:[#allocation9 + $0xb] sm:$0x1]
    %v3125 = vld [vmem:[#allocation9 + $0xc] sm:$0x1]
    %v3126 = vsel %vm157, %v3120, 0.0
    %3127 = vadd.xlane.f32.xlu0 %v3126
    %v3128 = vpop.xlane.xlu0 %3127
    %v3129 = vsel %vm157, %v3121, 0.0
    %3130 = vadd.xlane.f32.xlu0 %v3129
    %v3131 = vpop.xlane.xlu0 %3130
    %v3132 = vsel %vm157, %v3122, 0.0
    %3133 = vadd.xlane.f32.xlu0 %v3132
    %v3134 = vpop.xlane.xlu0 %3133
    %v3135 = vsel %vm157, %v3123, 0.0
    %3136 = vadd.xlane.f32.xlu0 %v3135
    %v3137 = vpop.xlane.xlu0 %3136
    %v3138 = vmul.f32 %v3128, %v1484
    %v3139 = vmul.f32 %v3131, %v1484
    %v3140 = vmul.f32 %v3134, %v1484
    %v3141 = vmul.f32 %v3137, %v1484
    %v3142 = vsub.f32 %v3120, %v3138
    %v3143 = vsub.f32 %v3121, %v3139
    %v3144 = vsub.f32 %v3122, %v3140
    %v3145 = vsub.f32 %v3123, %v3141
    %v3146 = vmul.f32 %v3142, %v3142
    %v3147 = vmul.f32 %v3143, %v3143
    %v3148 = vmul.f32 %v3144, %v3144
    %v3149 = vmul.f32 %v3145, %v3145
    %v3150 = vsel %vm157, %v3146, 0.0
    %3151 = vadd.xlane.f32.xlu0 %v3150
    %v3152 = vpop.xlane.xlu0 %3151
    %v3153 = vsel %vm157, %v3147, 0.0
    %3154 = vadd.xlane.f32.xlu0 %v3153
    %v3155 = vpop.xlane.xlu0 %3154
    %v3156 = vsel %vm157, %v3148, 0.0
    %3157 = vadd.xlane.f32.xlu0 %v3156
    %v3158 = vpop.xlane.xlu0 %3157
    %v3159 = vsel %vm157, %v3149, 0.0
    %3160 = vadd.xlane.f32.xlu0 %v3159
    %v3161 = vpop.xlane.xlu0 %3160
    %v3162 = vmul.f32 %v3152, %v1484
    %v3163 = vmul.f32 %v3155, %v1484
    %v3164 = vmul.f32 %v3158, %v1484
    %v3165 = vmul.f32 %v3161, %v1484
    %v3166 = vadd.f32 %v3162, 1e-05
    %v3167 = vadd.f32 %v3163, 1e-05
    %v3168 = vadd.f32 %v3164, 1e-05
    %v3169 = vadd.f32 %v3165, 1e-05
    %v3170 = vrsqrt.pop %v3166
    %v3171 = vrsqrt.pop %v3167
    %v3172 = vrsqrt.pop %v3168
    %v3173 = vrsqrt.pop %v3169
    %v3174 = vmul.f32 %v3142, %v3170
    %v3175 = vmul.f32 %v3143, %v3171
    %v3176 = vmul.f32 %v3144, %v3172
    %v3177 = vmul.f32 %v3145, %v3173
    %v3178 = vlaneseq
    %v3179 = vshrl.u32 %v3178, 7
    %v3180 = vsub.s32 0, %v3179
    %v3181 = vrot.slane %v3124, %v3180
    %v3182 = vmul.f32 %v3174, %v3181
    %v3183 = vmul.f32 %v3175, %v3181
    %v3184 = vmul.f32 %v3176, %v3181
    %v3185 = vmul.f32 %v3177, %v3181
    %v3186 = vlaneseq
    %v3187 = vshrl.u32 %v3186, 7
    %v3188 = vsub.s32 0, %v3187
    %v3189 = vrot.slane %v3125, %v3188
    %v3190 = vadd.f32 %v3182, %v3189
    %v3191 = vadd.f32 %v3183, %v3189
    %v3192 = vadd.f32 %v3184, %v3189
    %v3193 = vadd.f32 %v3185, %v3189
    %v3194 = vld [vmem:[#allocation7 + $0xf0] sm:$0xff]
    %v3195 = vld [vmem:[#allocation7 + $0xf8] sm:$0xff]
    %v3196 = vld [vmem:[#allocation7 + $0x100] sm:$0xff]
    %v3197 = vld [vmem:[#allocation7 + $0x108] sm:$0xff]
    %v3198 = vld [vmem:[#allocation9 + $0xd] sm:$0x1]
    %v3199 = vlaneseq
    %v3200 = vshrl.u32 %v3199, 7
    %v3201 = vsub.s32 0, %v3200
    %v3202 = vrot.slane %v3198, %v3201
    %v3204 = vsel %vm157, %v3190, 0
    %v3207 = vsel %vm157, %v3191, 0
    %v3210 = vsel %vm157, %v3192, 0
    %v3213 = vsel %vm157, %v3193, 0
    %3215 = vmatprep.subr.mxu0 0.0
    %3216 = vmatpush1.msra.mxu0 %v3194
    %3217 = vmatprep.subr.mxu0 0.0
    %3218 = vmatpush1.msra.mxu0 %v3195
    %3219 = vmatprep.subr.mxu0 0.0
    %3220 = vmatpush1.msra.mxu0 %v3196
    %3221 = vmatprep.subr.mxu0 0.0
    %3222 = vmatpush1.msra.mxu0 %v3197
    %3223 = vmatprep.subr.mxu0 0.0
    %3224 = vmatpush1.msra.mxu0 0.0
    %3225 = vmatprep.subr.mxu0 0.0
    %3226 = vmatpush1.msra.mxu0 0.0
    %3227 = vmatprep.subr.mxu0 0.0
    %3228 = vmatpush1.msra.mxu0 0.0
    %3229 = vmatprep.subr.mxu0 0.0
    %3230 = vmatpush1.msra.mxu0 0.0
    %3231 = vmatprep.subr.mxu0 0.0
    %3232 = vmatpush1.msra.mxu0 0.0
    %3233 = vmatprep.subr.mxu0 0.0
    %3234 = vmatpush1.msra.mxu0 0.0
    %3235 = vmatprep.subr.mxu0 0.0
    %3236 = vmatpush1.msra.mxu0 0.0
    %3237 = vmatprep.subr.mxu0 0.0
    %3238 = vmatpush1.msra.mxu0 0.0
    %3239 = vmatprep.subr.mxu0 0.0
    %3240 = vmatpush1.msra.mxu0 0.0
    %3241 = vmatprep.subr.mxu0 0.0
    %3242 = vmatpush1.msra.mxu0 0.0
    %3243 = vmatprep.subr.mxu0 0.0
    %3244 = vmatpush1.msra.mxu0 0.0
    %3245 = vmatprep.subr.mxu0 0.0
    %3246 = vmatpush1.msra.mxu0 0.0
    %3247 = vmatprep.subr.mxu0 0.0
    %3248 = vmatpush1.msra.mxu0 0.0
    %3249 = vmatprep.subr.mxu0 0.0
    %3250 = vmatpush1.msra.mxu0 0.0
    %3251 = vmatprep.subr.mxu0 0.0
    %3252 = vmatpush1.msra.mxu0 0.0
    %3253 = vmatprep.subr.mxu0 0.0
    %3254 = vmatpush1.msra.mxu0 0.0
    %3255 = vmatprep.subr.mxu0 0.0
    %3256 = vmatpush1.msra.mxu0 0.0
    %3257 = vmatprep.subr.mxu0 0.0
    %3258 = vmatpush1.msra.mxu0 0.0
    %3259 = vmatprep.subr.mxu0 0.0
    %3260 = vmatpush1.msra.mxu0 0.0
    %3261 = vmatprep.subr.mxu0 0.0
    %3262 = vmatpush1.msra.mxu0 0.0
    %3263 = vmatprep.subr.mxu0 0.0
    %3264 = vmatpush1.msra.mxu0 0.0
    %3265 = vmatprep.subr.mxu0 0.0
    %3266 = vmatpush1.msra.mxu0 0.0
    %3267 = vmatprep.subr.mxu0 0.0
    %3268 = vmatpush1.msra.mxu0 0.0
    %3269 = vmatprep.subr.mxu0 0.0
    %3270 = vmatpush1.msra.mxu0 0.0
    %3271 = vmatprep.subr.mxu0 0.0
    %3272 = vmatpush1.msra.mxu0 0.0
    %3273 = vmatprep.subr.mxu0 0.0
    %3274 = vmatpush1.msra.mxu0 0.0
    %3275 = vmatprep.subr.mxu0 0.0
    %3276 = vmatpush1.msra.mxu0 0.0
    %3277 = vmatprep.subr.mxu0 0.0
    %3278 = vmatpush1.msra.mxu0 0.0
    %3279 = vmatprep.mubr.f32.mxu0 0.0
    %3280 = vmatmul.mubr.f32.gmra.mrb[0].mxu0 %v3204
    %v3281 = vpop.f32.mrb[0].mxu0
    %v3282 = vadd.f32 %v3202, %v3281
    %v3283 = vpop.f32.mrb[0].mxu0
    %3284 = vmatprep.mubr.f32.mxu0 0.0
    %3285 = vmatmul.mubr.f32.gmra.mrb[0].mxu0 %v3207
    %v3286 = vpop.f32.mrb[0].mxu0
    %v3287 = vadd.f32 %v3202, %v3286
    %v3288 = vpop.f32.mrb[0].mxu0
    %3289 = vmatprep.mubr.f32.mxu0 0.0
    %3290 = vmatmul.mubr.f32.gmra.mrb[0].mxu0 %v3210
    %v3291 = vpop.f32.mrb[0].mxu0
    %v3292 = vadd.f32 %v3202, %v3291
    %v3293 = vpop.f32.mrb[0].mxu0
    %3294 = vmatprep.mubr.f32.mxu0 0.0
    %3295 = vmatmul.mubr.f32.gmra.mrb[0].mxu0 %v3213
    %v3296 = vpop.f32.mrb[0].mxu0
    %v3297 = vadd.f32 %v3202, %v3296
    %v3298 = vpop.f32.mrb[0].mxu0
    %3299 = vdwg.mxu0
    %v3300 = vmax.f32 %v3282, 0.0
    %v3301 = vmax.f32 %v3287, 0.0
    %v3302 = vmax.f32 %v3292, 0.0
    %v3303 = vmax.f32 %v3297, 0.0
    %v3304 = vld [vmem:[#allocation7 + $0x110] sm:$0xff]
    %v3305 = vld [vmem:[#allocation7 + $0x118] sm:$0xff]
    %v3306 = vld [vmem:[#allocation7 + $0x120] sm:$0xff]
    %v3307 = vld [vmem:[#allocation7 + $0x128] sm:$0xff]
    %v3308 = vld [vmem:[#allocation7 + $0x130] sm:$0xff]
    %v3309 = vld [vmem:[#allocation7 + $0x138] sm:$0xff]
    %v3310 = vld [vmem:[#allocation7 + $0x140] sm:$0xff]
    %v3311 = vld [vmem:[#allocation7 + $0x148] sm:$0xff]
    %v3312 = vld [vmem:[#allocation9 + $0xe] sm:$0x1]
    %v3313 = vlaneseq
    %v3314 = vshrl.u32 %v3313, 7
    %v3315 = vsub.s32 0, %v3314
    %v3316 = vrot.slane %v3312, %v3315
    %v3318 = vsel %vm1664, %v3300, 0
    %v3321 = vsel %vm1664, %v3301, 0
    %v3324 = vsel %vm1664, %v3302, 0
    %v3327 = vsel %vm1664, %v3303, 0
    %3329 = vmatprep.subr.mxu0 0.0
    %3330 = vmatpush1.msra.mxu0 %v3304
    %3331 = vmatprep.subr.mxu0 0.0
    %3332 = vmatpush1.msra.mxu0 %v3305
    %3333 = vmatprep.subr.mxu0 0.0
    %3334 = vmatpush1.msra.mxu0 %v3306
    %3335 = vmatprep.subr.mxu0 0.0
    %3336 = vmatpush1.msra.mxu0 %v3307
    %3337 = vmatprep.subr.mxu0 0.0
    %3338 = vmatpush1.msra.mxu0 %v3308
    %3339 = vmatprep.subr.mxu0 0.0
    %3340 = vmatpush1.msra.mxu0 %v3309
    %3341 = vmatprep.subr.mxu0 0.0
    %3342 = vmatpush1.msra.mxu0 %v3310
    %3343 = vmatprep.subr.mxu0 0.0
    %3344 = vmatpush1.msra.mxu0 %v3311
    %3345 = vmatprep.subr.mxu0 0.0
    %3346 = vmatpush1.msra.mxu0 0.0
    %3347 = vmatprep.subr.mxu0 0.0
    %3348 = vmatpush1.msra.mxu0 0.0
    %3349 = vmatprep.subr.mxu0 0.0
    %3350 = vmatpush1.msra.mxu0 0.0
    %3351 = vmatprep.subr.mxu0 0.0
    %3352 = vmatpush1.msra.mxu0 0.0
    %3353 = vmatprep.subr.mxu0 0.0
    %3354 = vmatpush1.msra.mxu0 0.0
    %3355 = vmatprep.subr.mxu0 0.0
    %3356 = vmatpush1.msra.mxu0 0.0
    %3357 = vmatprep.subr.mxu0 0.0
    %3358 = vmatpush1.msra.mxu0 0.0
    %3359 = vmatprep.subr.mxu0 0.0
    %3360 = vmatpush1.msra.mxu0 0.0
    %3361 = vmatprep.subr.mxu0 0.0
    %3362 = vmatpush1.msra.mxu0 0.0
    %3363 = vmatprep.subr.mxu0 0.0
    %3364 = vmatpush1.msra.mxu0 0.0
    %3365 = vmatprep.subr.mxu0 0.0
    %3366 = vmatpush1.msra.mxu0 0.0
    %3367 = vmatprep.subr.mxu0 0.0
    %3368 = vmatpush1.msra.mxu0 0.0
    %3369 = vmatprep.subr.mxu0 0.0
    %3370 = vmatpush1.msra.mxu0 0.0
    %3371 = vmatprep.subr.mxu0 0.0
    %3372 = vmatpush1.msra.mxu0 0.0
    %3373 = vmatprep.subr.mxu0 0.0
    %3374 = vmatpush1.msra.mxu0 0.0
    %3375 = vmatprep.subr.mxu0 0.0
    %3376 = vmatpush1.msra.mxu0 0.0
    %3377 = vmatprep.subr.mxu0 0.0
    %3378 = vmatpush1.msra.mxu0 0.0
    %3379 = vmatprep.subr.mxu0 0.0
    %3380 = vmatpush1.msra.mxu0 0.0
    %3381 = vmatprep.subr.mxu0 0.0
    %3382 = vmatpush1.msra.mxu0 0.0
    %3383 = vmatprep.subr.mxu0 0.0
    %3384 = vmatpush1.msra.mxu0 0.0
    %3385 = vmatprep.subr.mxu0 0.0
    %3386 = vmatpush1.msra.mxu0 0.0
    %3387 = vmatprep.subr.mxu0 0.0
    %3388 = vmatpush1.msra.mxu0 0.0
    %3389 = vmatprep.subr.mxu0 0.0
    %3390 = vmatpush1.msra.mxu0 0.0
    %3391 = vmatprep.subr.mxu0 0.0
    %3392 = vmatpush1.msra.mxu0 0.0
    %3393 = vmatprep.mubr.f32.mxu0 0.0
    %3394 = vmatmul.mubr.f32.gmra.mrb[0].mxu0 %v3318
    %v3395 = vpop.f32.mrb[0].mxu0
    %v3396 = vadd.f32 %v3316, %v3395
    %v3397 = vpop.f32.mrb[0].mxu0
    %3398 = vmatprep.mubr.f32.mxu0 0.0
    %3399 = vmatmul.mubr.f32.gmra.mrb[0].mxu0 %v3321
    %v3400 = vpop.f32.mrb[0].mxu0
    %v3401 = vadd.f32 %v3316, %v3400
    %v3402 = vpop.f32.mrb[0].mxu0
    %3403 = vmatprep.mubr.f32.mxu0 0.0
    %3404 = vmatmul.mubr.f32.gmra.mrb[0].mxu0 %v3324
    %v3405 = vpop.f32.mrb[0].mxu0
    %v3406 = vadd.f32 %v3316, %v3405
    %v3407 = vpop.f32.mrb[0].mxu0
    %3408 = vmatprep.mubr.f32.mxu0 0.0
    %3409 = vmatmul.mubr.f32.gmra.mrb[0].mxu0 %v3327
    %v3410 = vpop.f32.mrb[0].mxu0
    %v3411 = vadd.f32 %v3316, %v3410
    %v3412 = vpop.f32.mrb[0].mxu0
    %3413 = vdwg.mxu0
    %v3414 = vadd.f32 %v3190, %v3396
    %v3415 = vadd.f32 %v3191, %v3401
    %v3416 = vadd.f32 %v3192, %v3406
    %v3417 = vadd.f32 %v3193, %v3411
    %v3418 = vld [vmem:[#allocation9 + $0xf] sm:$0x1]
    %v3419 = vld [vmem:[#allocation9 + $0x10] sm:$0x1]
    %v3420 = vsel %vm157, %v3414, 0.0
    %3421 = vadd.xlane.f32.xlu0 %v3420
    %v3422 = vpop.xlane.xlu0 %3421
    %v3423 = vsel %vm157, %v3415, 0.0
    %3424 = vadd.xlane.f32.xlu0 %v3423
    %v3425 = vpop.xlane.xlu0 %3424
    %v3426 = vsel %vm157, %v3416, 0.0
    %3427 = vadd.xlane.f32.xlu0 %v3426
    %v3428 = vpop.xlane.xlu0 %3427
    %v3429 = vsel %vm157, %v3417, 0.0
    %3430 = vadd.xlane.f32.xlu0 %v3429
    %v3431 = vpop.xlane.xlu0 %3430
    %v3432 = vmul.f32 %v3422, %v1484
    %v3433 = vmul.f32 %v3425, %v1484
    %v3434 = vmul.f32 %v3428, %v1484
    %v3435 = vmul.f32 %v3431, %v1484
    %v3436 = vsub.f32 %v3414, %v3432
    %v3437 = vsub.f32 %v3415, %v3433
    %v3438 = vsub.f32 %v3416, %v3434
    %v3439 = vsub.f32 %v3417, %v3435
    %v3440 = vmul.f32 %v3436, %v3436
    %v3441 = vmul.f32 %v3437, %v3437
    %v3442 = vmul.f32 %v3438, %v3438
    %v3443 = vmul.f32 %v3439, %v3439
    %v3444 = vsel %vm157, %v3440, 0.0
    %3445 = vadd.xlane.f32.xlu0 %v3444
    %v3446 = vpop.xlane.xlu0 %3445
    %v3447 = vsel %vm157, %v3441, 0.0
    %3448 = vadd.xlane.f32.xlu0 %v3447
    %v3449 = vpop.xlane.xlu0 %3448
    %v3450 = vsel %vm157, %v3442, 0.0
    %3451 = vadd.xlane.f32.xlu0 %v3450
    %v3452 = vpop.xlane.xlu0 %3451
    %v3453 = vsel %vm157, %v3443, 0.0
    %3454 = vadd.xlane.f32.xlu0 %v3453
    %v3455 = vpop.xlane.xlu0 %3454
    %v3456 = vmul.f32 %v3446, %v1484
    %v3457 = vmul.f32 %v3449, %v1484
    %v3458 = vmul.f32 %v3452, %v1484
    %v3459 = vmul.f32 %v3455, %v1484
    %v3460 = vadd.f32 %v3456, 1e-05
    %v3461 = vadd.f32 %v3457, 1e-05
    %v3462 = vadd.f32 %v3458, 1e-05
    %v3463 = vadd.f32 %v3459, 1e-05
    %v3464 = vrsqrt.pop %v3460
    %v3465 = vrsqrt.pop %v3461
    %v3466 = vrsqrt.pop %v3462
    %v3467 = vrsqrt.pop %v3463
    %v3468 = vmul.f32 %v3436, %v3464
    %v3469 = vmul.f32 %v3437, %v3465
    %v3470 = vmul.f32 %v3438, %v3466
    %v3471 = vmul.f32 %v3439, %v3467
    %v3472 = vlaneseq
    %v3473 = vshrl.u32 %v3472, 7
    %v3474 = vsub.s32 0, %v3473
    %v3475 = vrot.slane %v3418, %v3474
    %v3476 = vmul.f32 %v3468, %v3475
    %v3477 = vmul.f32 %v3469, %v3475
    %v3478 = vmul.f32 %v3470, %v3475
    %v3479 = vmul.f32 %v3471, %v3475
    %v3480 = vlaneseq
    %v3481 = vshrl.u32 %v3480, 7
    %v3482 = vsub.s32 0, %v3481
    %v3483 = vrot.slane %v3419, %v3482
    %v3484 = vadd.f32 %v3476, %v3483
    %v3485 = vadd.f32 %v3477, %v3483
    %v3486 = vadd.f32 %v3478, %v3483
    %v3487 = vadd.f32 %v3479, %v3483
    %v3488 = vld [vmem:[#allocation9 + $0x11] sm:$0x1]
    %v3489 = vld [vmem:[#allocation9 + $0x12] sm:$0x1]
    %v3490 = vsel %vm157, %v3484, 0.0
    %3491 = vadd.xlane.f32.xlu0 %v3490
    %v3492 = vpop.xlane.xlu0 %3491
    %v3493 = vsel %vm157, %v3485, 0.0
    %3494 = vadd.xlane.f32.xlu0 %v3493
    %v3495 = vpop.xlane.xlu0 %3494
    %v3496 = vsel %vm157, %v3486, 0.0
    %3497 = vadd.xlane.f32.xlu0 %v3496
    %v3498 = vpop.xlane.xlu0 %3497
    %v3499 = vsel %vm157, %v3487, 0.0
    %3500 = vadd.xlane.f32.xlu0 %v3499
    %v3501 = vpop.xlane.xlu0 %3500
    %v3502 = vmul.f32 %v3492, %v1484
    %v3503 = vmul.f32 %v3495, %v1484
    %v3504 = vmul.f32 %v3498, %v1484
    %v3505 = vmul.f32 %v3501, %v1484
    %v3506 = vsub.f32 %v3484, %v3502
    %v3507 = vsub.f32 %v3485, %v3503
    %v3508 = vsub.f32 %v3486, %v3504
    %v3509 = vsub.f32 %v3487, %v3505
    %v3510 = vmul.f32 %v3506, %v3506
    %v3511 = vmul.f32 %v3507, %v3507
    %v3512 = vmul.f32 %v3508, %v3508
    %v3513 = vmul.f32 %v3509, %v3509
    %v3514 = vsel %vm157, %v3510, 0.0
    %3515 = vadd.xlane.f32.xlu0 %v3514
    %v3516 = vpop.xlane.xlu0 %3515
    %v3517 = vsel %vm157, %v3511, 0.0
    %3518 = vadd.xlane.f32.xlu0 %v3517
    %v3519 = vpop.xlane.xlu0 %3518
    %v3520 = vsel %vm157, %v3512, 0.0
    %3521 = vadd.xlane.f32.xlu0 %v3520
    %v3522 = vpop.xlane.xlu0 %3521
    %v3523 = vsel %vm157, %v3513, 0.0
    %3524 = vadd.xlane.f32.xlu0 %v3523
    %v3525 = vpop.xlane.xlu0 %3524
    %v3526 = vmul.f32 %v3516, %v1484
    %v3527 = vmul.f32 %v3519, %v1484
    %v3528 = vmul.f32 %v3522, %v1484
    %v3529 = vmul.f32 %v3525, %v1484
    %v3530 = vadd.f32 %v3526, 1e-05
    %v3531 = vadd.f32 %v3527, 1e-05
    %v3532 = vadd.f32 %v3528, 1e-05
    %v3533 = vadd.f32 %v3529, 1e-05
    %v3534 = vrsqrt.pop %v3530
    %v3535 = vrsqrt.pop %v3531
    %v3536 = vrsqrt.pop %v3532
    %v3537 = vrsqrt.pop %v3533
    %v3538 = vmul.f32 %v3506, %v3534
    %v3539 = vmul.f32 %v3507, %v3535
    %v3540 = vmul.f32 %v3508, %v3536
    %v3541 = vmul.f32 %v3509, %v3537
    %v3542 = vlaneseq
    %v3543 = vshrl.u32 %v3542, 7
    %v3544 = vsub.s32 0, %v3543
    %v3545 = vrot.slane %v3488, %v3544
    %v3546 = vmul.f32 %v3538, %v3545
    %v3547 = vmul.f32 %v3539, %v3545
    %v3548 = vmul.f32 %v3540, %v3545
    %v3549 = vmul.f32 %v3541, %v3545
    %v3550 = vlaneseq
    %v3551 = vshrl.u32 %v3550, 7
    %v3552 = vsub.s32 0, %v3551
    %v3553 = vrot.slane %v3489, %v3552
    %v3554 = vadd.f32 %v3546, %v3553
    %v3555 = vadd.f32 %v3547, %v3553
    %v3556 = vadd.f32 %v3548, %v3553
    %v3557 = vadd.f32 %v3549, %v3553
    %3558 = vst.msk [vmem:[#allocation3] sm:$0xff] %vm157, %v3554
    %3560 = vrot.lane.b32.xlu0 %v3555, 32
    %v3561 = vpop.permute.xlu0 %3560
    %vm3563 = vcmask 523520
    %3564 = vst.msk [vmem:[#allocation3] sm:$0xff] %vm3563, %v3561
    %3566 = vrot.lane.b32.xlu0 %v3556, 64
    %v3567 = vpop.permute.xlu0 %3566
    %vm3569 = vcmask 785920
    %3570 = vst.msk [vmem:[#allocation3] sm:$0xff] %vm3569, %v3567
    %3572 = vrot.lane.b32.xlu0 %v3557, 96
    %v3573 = vpop.permute.xlu0 %3572
    %vm3575 = vcmask 1048320
    %3576 = vst.msk [vmem:[#allocation3] sm:$0xff] %vm3575, %v3573
    %v3577 = vld [vmem:[#allocation3] sm:$0xff]
    %v3578 = vld [vmem:[#allocation7 + $0x150] sm:$0xff]
    %v3579 = vld [vmem:[#allocation7 + $0x158] sm:$0xff]
    %v3580 = vld [vmem:[#allocation7 + $0x160] sm:$0xff]
    %v3581 = vld [vmem:[#allocation7 + $0x168] sm:$0xff]
    %v3582 = vld [vmem:[#allocation7 + $0x170] sm:$0xff]
    %v3583 = vld [vmem:[#allocation7 + $0x178] sm:$0xff]
    %v3584 = vld [vmem:[#allocation7 + $0x180] sm:$0xff]
    %v3585 = vld [vmem:[#allocation7 + $0x188] sm:$0xff]
    %v3586 = vld [vmem:[#allocation7 + $0x190] sm:$0xff]
    %v3587 = vld [vmem:[#allocation7 + $0x198] sm:$0xff]
    %v3588 = vld [vmem:[#allocation7 + $0x1a0] sm:$0xff]
    %v3589 = vld [vmem:[#allocation7 + $0x1a8] sm:$0xff]
    %v3590 = vld [vmem:[#allocation7 + $0x1b0] sm:$0xff]
    %v3591 = vld [vmem:[#allocation7 + $0x1b8] sm:$0xff]
    %v3592 = vld [vmem:[#allocation7 + $0x1c0] sm:$0xff]
    %v3593 = vld [vmem:[#allocation7 + $0x1c8] sm:$0xff]
    %v3594 = vld [vmem:[#allocation9 + $0x13] sm:$0x1]
    %v3595 = vlaneseq
    %v3596 = vshrl.u32 %v3595, 7
    %v3597 = vsub.s32 0, %v3596
    %v3598 = vrot.slane %v3594, %v3597
    %3599 = vmatprep.subr.mxu0 0.0
    %3600 = vmatpush1.msra.mxu0 %v3578
    %3601 = vmatprep.subr.mxu0 0.0
    %3602 = vmatpush1.msra.mxu0 %v3579
    %3603 = vmatprep.subr.mxu0 0.0
    %3604 = vmatpush1.msra.mxu0 %v3580
    %3605 = vmatprep.subr.mxu0 0.0
    %3606 = vmatpush1.msra.mxu0 %v3581
    %3607 = vmatprep.subr.mxu0 0.0
    %3608 = vmatpush1.msra.mxu0 %v3582
    %3609 = vmatprep.subr.mxu0 0.0
    %3610 = vmatpush1.msra.mxu0 %v3583
    %3611 = vmatprep.subr.mxu0 0.0
    %3612 = vmatpush1.msra.mxu0 %v3584
    %3613 = vmatprep.subr.mxu0 0.0
    %3614 = vmatpush1.msra.mxu0 %v3585
    %3615 = vmatprep.subr.mxu0 0.0
    %3616 = vmatpush1.msra.mxu0 %v3586
    %3617 = vmatprep.subr.mxu0 0.0
    %3618 = vmatpush1.msra.mxu0 %v3587
    %3619 = vmatprep.subr.mxu0 0.0
    %3620 = vmatpush1.msra.mxu0 %v3588
    %3621 = vmatprep.subr.mxu0 0.0
    %3622 = vmatpush1.msra.mxu0 %v3589
    %3623 = vmatprep.subr.mxu0 0.0
    %3624 = vmatpush1.msra.mxu0 %v3590
    %3625 = vmatprep.subr.mxu0 0.0
    %3626 = vmatpush1.msra.mxu0 %v3591
    %3627 = vmatprep.subr.mxu0 0.0
    %3628 = vmatpush1.msra.mxu0 %v3592
    %3629 = vmatprep.subr.mxu0 0.0
    %3630 = vmatpush1.msra.mxu0 %v3593
    %3631 = vmatprep.subr.mxu0 0.0
    %3632 = vmatpush1.msra.mxu0 0.0
    %3633 = vmatprep.subr.mxu0 0.0
    %3634 = vmatpush1.msra.mxu0 0.0
    %3635 = vmatprep.subr.mxu0 0.0
    %3636 = vmatpush1.msra.mxu0 0.0
    %3637 = vmatprep.subr.mxu0 0.0
    %3638 = vmatpush1.msra.mxu0 0.0
    %3639 = vmatprep.subr.mxu0 0.0
    %3640 = vmatpush1.msra.mxu0 0.0
    %3641 = vmatprep.subr.mxu0 0.0
    %3642 = vmatpush1.msra.mxu0 0.0
    %3643 = vmatprep.subr.mxu0 0.0
    %3644 = vmatpush1.msra.mxu0 0.0
    %3645 = vmatprep.subr.mxu0 0.0
    %3646 = vmatpush1.msra.mxu0 0.0
    %3647 = vmatprep.subr.mxu0 0.0
    %3648 = vmatpush1.msra.mxu0 0.0
    %3649 = vmatprep.subr.mxu0 0.0
    %3650 = vmatpush1.msra.mxu0 0.0
    %3651 = vmatprep.subr.mxu0 0.0
    %3652 = vmatpush1.msra.mxu0 0.0
    %3653 = vmatprep.subr.mxu0 0.0
    %3654 = vmatpush1.msra.mxu0 0.0
    %3655 = vmatprep.subr.mxu0 0.0
    %3656 = vmatpush1.msra.mxu0 0.0
    %3657 = vmatprep.subr.mxu0 0.0
    %3658 = vmatpush1.msra.mxu0 0.0
    %3659 = vmatprep.subr.mxu0 0.0
    %3660 = vmatpush1.msra.mxu0 0.0
    %3661 = vmatprep.subr.mxu0 0.0
    %3662 = vmatpush1.msra.mxu0 0.0
    %3663 = vmatprep.mubr.f32.mxu0 0.0
    %3664 = vmatmul.mubr.f32.gmra.mrb[0].mxu0 %v3577
    %v3665 = vpop.f32.mrb[0].mxu0
    %v3666 = vadd.f32 %v3598, %v3665
    %v3667 = vpop.f32.mrb[0].mxu0
    %3668 = vdwg.mxu0
    %v3669 = vmul.f32 %v3666, %v74
    %v3670 = vadd.f32 %v3669, %v60
    %3671 = vst.msk [vmem:[#allocation10] sm:$0xff] %vm294, %v3670
    // Predicated region
    $region26: #{pallas_forward.1} parent=1 // pred_check
      _
    $region27: #{pallas_forward.1} parent=1 // pred_check_branch
      %3673 = sbr.rel (0) target = $region29
    $region28: #{pallas_forward.1} parent=1 // pred_region
      %s3675 = ssub.s32 128, 128
      %3676 = vsyncadd [#allocation6], %s3675
      %s3678 = sshll.u32 [#allocation10], 4
      %s3679 = int_to_ptr.vmem [resolvable:$true] %s3678
      %3681 = dma.vmem_to_hbm [thread:$0]  %s3679, 128, %s3, [#allocation6]
    $region29: #{pallas_forward.1} parent=1 // pred_fallthru
      _
    // Predicated region
    $region30: #{pallas_forward.1} parent=1 // pred_check
      _
    $region31: #{pallas_forward.1} parent=1 // pred_check_branch
      %3683 = sbr.rel (0) target = $region33
    $region32: #{pallas_forward.1} parent=1 // pred_region
      %3684 = dma.done [#allocation6], 128
    $region33: #{pallas_forward.1} parent=1 // pred_fallthru
      _
    %3685 = vsyncpa [#allocation5], 1
    %3686 = vsyncpa [#allocation8], 1
    %3687 = vsyncpa [#allocation6], 1

</llo_original>
